<compile_context>
chip_gen: v6e
topology: v6e:2x2x1
jax: 0.10.0
libtpu: 0.0.40
codegen_flags: <defaults>
</compile_context>

<pallas_src>
import functools
import math

import jax
import jax.numpy as jnp
from jax.experimental import pallas as pl
from jax.experimental.pallas import tpu as pltpu


def _dblock_kernel(x_ref, w1_ref, b1_ref, w2_ref, b2_ref, o_ref, buf_ref,
                   *, num_res, H, W, pad):
    """Runs all num_res ResBlocks for one batch element, activations in VMEM."""
    C = x_ref.shape[1]
    HW = H * W

    # Zero the flat shift buffer once per grid step; only the interior
    # [pad, pad+HW) is overwritten afterwards, so the halo stays zero.
    buf_ref[...] = jnp.zeros_like(buf_ref)

    # Column (w) coordinate of every flattened position, computed once and
    # reused by all 2*num_res convs.  Values are small exact integers in f32.
    hwf = jax.lax.broadcasted_iota(jnp.int32, (1, HW), 1).astype(jnp.float32)
    colf = hwf - jnp.floor(hwf / float(W)) * float(W)
    not_left_edge = (colf > 0.5).astype(jnp.float32)            # valid for dx = -1
    not_right_edge = (colf < float(W) - 1.5).astype(jnp.float32)  # valid for dx = +1

    def conv3x3(x, w_mat, b_col):
        # x: (C, HW) f32, w_mat: (C, 9*C), b_col: (C, 1) -> (C, HW) f32
        buf_ref[:, pad:pad + HW] = x            # lane-aligned interior store
        patches = []
        for ky in range(3):
            for kx in range(3):
                s = (ky - 1) * W + (kx - 1)
                patch = buf_ref[:, pad + s:pad + s + HW]        # (C, HW)
                if kx == 0:
                    patch = patch * not_left_edge
                elif kx == 2:
                    patch = patch * not_right_edge
                patches.append(patch)
        p = jnp.concatenate(patches, axis=0)                    # (9*C, HW)
        acc = jnp.dot(w_mat, p, preferred_element_type=jnp.float32)
        return acc + b_col

    inv_sqrt2 = 1.0 / math.sqrt(2.0)
    x = x_ref[0].astype(jnp.float32)                            # (C, HW)
    for r in range(num_res):
        h = conv3x3(x, w1_ref[r], b1_ref[r])
        h = 0.5 * h * (1.0 + jax.lax.erf(h * inv_sqrt2))        # exact GELU
        x = conv3x3(h, w2_ref[r], b2_ref[r]) + x                # residual add
    o_ref[0] = x.astype(o_ref.dtype)


def dblock_forward(x_nchw, params):
    """DBlock forward.  Input/output in NCHW, matching the PyTorch module."""
    B, C, H, W = x_nchw.shape
    R = len(params)
    HW = H * W
    pad = 128                      # aligned halo for the flat shift buffer

    x_flat = x_nchw.reshape(B, C, HW)            # NCHW -> (B, C, H*W), free

    def to_mat(w):                 # (3,3,Cin,Cout) -> (Cout, 9*Cin), tap-major
        return jnp.transpose(w, (3, 0, 1, 2)).reshape(w.shape[3], 9 * w.shape[2])

    w1 = jnp.stack([to_mat(p["w1"]) for p in params])           # (R, C, 9*C)
    b1 = jnp.stack([p["b1"].reshape(C, 1) for p in params])     # (R, C, 1)
    w2 = jnp.stack([to_mat(p["w2"]) for p in params])
    b2 = jnp.stack([p["b2"].reshape(C, 1) for p in params])

    kernel = functools.partial(_dblock_kernel, num_res=R, H=H, W=W, pad=pad)

    out = pl.pallas_call(
        kernel,
        out_shape=jax.ShapeDtypeStruct((B, C, HW), x_nchw.dtype),
        grid_spec=pltpu.PrefetchScalarGridSpec(
            num_scalar_prefetch=0,
            grid=(B,),
            in_specs=[
                pl.BlockSpec((1, C, HW), lambda i: (i, 0, 0)),
                pl.BlockSpec((R, C, 9 * C), lambda i: (0, 0, 0)),
                pl.BlockSpec((R, C, 1), lambda i: (0, 0, 0)),
                pl.BlockSpec((R, C, 9 * C), lambda i: (0, 0, 0)),
                pl.BlockSpec((R, C, 1), lambda i: (0, 0, 0)),
            ],
            out_specs=pl.BlockSpec((1, C, HW), lambda i: (i, 0, 0)),
            scratch_shapes=[pltpu.VMEM((C, HW + 2 * pad), jnp.float32)],
        ),
        compiler_params=pltpu.CompilerParams(
            dimension_semantics=("parallel",)),
    )(x_flat, w1, b1, w2, b2)
    return out.reshape(B, C, H, W)


# ---------------------------------------------------------------------------
# Parameter init (deterministic, PyTorch-style kaiming-uniform bounds) and a
# pure-JAX reference for a correctness cross-check.
# ---------------------------------------------------------------------------
def init_dblock_params(key, out_channel, num_res):
    params = []
    fan_in = out_channel * 3 * 3
    bound = 1.0 / math.sqrt(fan_in)
    for _ in range(num_res):
        key, k1, k2, k3, k4 = jax.random.split(key, 5)
        w1 = jax.random.uniform(k1, (3, 3, out_channel, out_channel),
                                jnp.float32, -bound, bound)
        b1 = jax.random.uniform(k2, (out_channel,), jnp.float32, -bound, bound)
        w2 = jax.random.uniform(k3, (3, 3, out_channel, out_channel),
                                jnp.float32, -bound, bound)
        b2 = jax.random.uniform(k4, (out_channel,), jnp.float32, -bound, bound)
        params.append({"w1": w1, "b1": b1, "w2": w2, "b2": b2})
    return params


def _dblock_reference(x, params):
    def conv(x, w, b):
        w_oihw = jnp.transpose(w, (3, 2, 0, 1))                 # -> (Cout,Cin,3,3)
        y = jax.lax.conv_general_dilated(
            x, w_oihw, window_strides=(1, 1), padding="SAME",
            dimension_numbers=("NCHW", "OIHW", "NCHW"),
            precision=jax.lax.Precision.HIGHEST)
        return y + b.reshape(1, -1, 1, 1)
    for p in params:
        h = conv(x, p["w1"], p["b1"])
        h = jax.nn.gelu(h, approximate=False)
        x = conv(h, p["w2"], p["b2"]) + x
    return x


if __name__ == "__main__":
    B, C, H, W = 2, 8, 16, 16
    num_res = 8

    key = jax.random.PRNGKey(0)
    kx, kp = jax.random.split(key)
    x = jax.random.normal(kx, (B, C, H, W), jnp.float32)        # NCHW, like PyTorch
    params = init_dblock_params(kp, C, num_res)

    out = jax.jit(dblock_forward)(x, params)
    out = jax.block_until_ready(out)

    assert out.shape == (B, C, H, W), out.shape
    assert bool(jnp.all(jnp.isfinite(out)))

    ref = _dblock_reference(x, params)
    max_err = float(jnp.max(jnp.abs(out - ref)))
    assert bool(jnp.allclose(out, ref, rtol=1e-2, atol=1e-2)), max_err
    print("KERNEL_OK")
</pallas_src>

<mosaic_0001>
module attributes {stable_mosaic.version = 11 : i64} {
  func.func @_dblock_kernel(%arg0: i32, %arg1: memref<1x8x256xf32, #tpu.memory_space<vmem>>, %arg2: memref<8x8x72xf32, #tpu.memory_space<vmem>>, %arg3: memref<8x8x1xf32, #tpu.memory_space<vmem>>, %arg4: memref<8x8x72xf32, #tpu.memory_space<vmem>>, %arg5: memref<8x8x1xf32, #tpu.memory_space<vmem>>, %arg6: memref<1x8x256xf32, #tpu.memory_space<vmem>>, %arg7: memref<8x512xf32, #tpu.memory_space<vmem>>) attributes {dimension_semantics = [#tpu.dimension_semantics<parallel>], iteration_bounds = array<i64: 2>, scalar_prefetch = 0 : i64, scratch_operands = 1 : i64, tpu.core_type = #tpu.core_type<tc>, window_params = [{transform_indices = @transform_0, window_bounds = array<i64: 1, 8, 256>}, {pipeline_mode = #tpu.pipeline_mode<synchronous>, transform_indices = @transform_1, window_bounds = array<i64: 8, 8, 72>}, {pipeline_mode = #tpu.pipeline_mode<synchronous>, transform_indices = @transform_2, window_bounds = array<i64: 8, 8, 1>}, {pipeline_mode = #tpu.pipeline_mode<synchronous>, transform_indices = @transform_3, window_bounds = array<i64: 8, 8, 72>}, {pipeline_mode = #tpu.pipeline_mode<synchronous>, transform_indices = @transform_4, window_bounds = array<i64: 8, 8, 1>}, {transform_indices = @transform_5, window_bounds = array<i64: 1, 8, 256>}]} {
    %cst = arith.constant 0.000000e+00 : f32
    %0 = vector.broadcast %cst : f32 to vector<8x512xf32>
    %c0 = arith.constant 0 : index
    %c0_0 = arith.constant 0 : index
    %1 = vector.load %arg7[%c0, %c0_0] : memref<8x512xf32, #tpu.memory_space<vmem>>, vector<8x512xf32>
    tpu.vector_store %arg7[%c0, %c0_0], %0 {strides = array<i32>} : memref<8x512xf32, #tpu.memory_space<vmem>>, vector<8x512xf32>,
    %2 = tpu.iota {dimensions = array<i32: 1>} : vector<1x256xi32>
    %3 = arith.sitofp %2 : vector<1x256xi32> to vector<1x256xf32>
    %cst_1 = arith.constant 1.600000e+01 : f32
    %4 = vector.broadcast %cst_1 : f32 to vector<1x256xf32>
    %5 = arith.divf %3, %4 : vector<1x256xf32>
    %6 = math.floor %5 : vector<1x256xf32>
    %cst_2 = arith.constant 1.600000e+01 : f32
    %7 = vector.broadcast %cst_2 : f32 to vector<1x256xf32>
    %8 = arith.mulf %6, %7 : vector<1x256xf32>
    %9 = arith.subf %3, %8 : vector<1x256xf32>
    %cst_3 = arith.constant 5.000000e-01 : f32
    %10 = vector.broadcast %cst_3 : f32 to vector<1x256xf32>
    %11 = arith.cmpf ogt, %9, %10 : vector<1x256xf32>
    %12 = arith.extui %11 : vector<1x256xi1> to vector<1x256xi32>
    %13 = arith.sitofp %12 : vector<1x256xi32> to vector<1x256xf32>
    %cst_4 = arith.constant 1.450000e+01 : f32
    %14 = vector.broadcast %cst_4 : f32 to vector<1x256xf32>
    %15 = arith.cmpf olt, %9, %14 : vector<1x256xf32>
    %16 = arith.extui %15 : vector<1x256xi1> to vector<1x256xi32>
    %17 = arith.sitofp %16 : vector<1x256xi32> to vector<1x256xf32>
    %c0_5 = arith.constant 0 : index
    %c0_6 = arith.constant 0 : index
    %c0_7 = arith.constant 0 : index
    %18 = vector.load %arg1[%c0_5, %c0_6, %c0_7] : memref<1x8x256xf32, #tpu.memory_space<vmem>>, vector<1x8x256xf32>
    %19 = vector.shape_cast %18 : vector<1x8x256xf32> to vector<8x256xf32>
    %c0_8 = arith.constant 0 : index
    %c0_9 = arith.constant 0 : index
    %c0_10 = arith.constant 0 : index
    %20 = vector.load %arg2[%c0_8, %c0_9, %c0_10] : memref<8x8x72xf32, #tpu.memory_space<vmem>>, vector<1x8x72xf32>
    %21 = vector.shape_cast %20 : vector<1x8x72xf32> to vector<8x72xf32>
    %c0_11 = arith.constant 0 : index
    %c0_12 = arith.constant 0 : index
    %c0_13 = arith.constant 0 : index
    %22 = vector.load %arg3[%c0_11, %c0_12, %c0_13] : memref<8x8x1xf32, #tpu.memory_space<vmem>>, vector<1x8x1xf32>
    %23 = vector.shape_cast %22 : vector<1x8x1xf32> to vector<8x1xf32>
    %c0_14 = arith.constant 0 : index
    %c128 = arith.constant 128 : index
    %24 = vector.load %arg7[%c0_14, %c128] : memref<8x512xf32, #tpu.memory_space<vmem>>, vector<8x256xf32>
    tpu.vector_store %arg7[%c0_14, %c128], %19 {strides = array<i32>} : memref<8x512xf32, #tpu.memory_space<vmem>>, vector<8x256xf32>,
    %c0_15 = arith.constant 0 : index
    %c111 = arith.constant 111 : index
    %25 = vector.load %arg7[%c0_15, %c111] : memref<8x512xf32, #tpu.memory_space<vmem>>, vector<8x256xf32>
    %26 = vector.broadcast %13 : vector<1x256xf32> to vector<8x256xf32>
    %27 = arith.mulf %25, %26 : vector<8x256xf32>
    %c0_16 = arith.constant 0 : index
    %c112 = arith.constant 112 : index
    %28 = vector.load %arg7[%c0_16, %c112] : memref<8x512xf32, #tpu.memory_space<vmem>>, vector<8x256xf32>
    %c0_17 = arith.constant 0 : index
    %c113 = arith.constant 113 : index
    %29 = vector.load %arg7[%c0_17, %c113] : memref<8x512xf32, #tpu.memory_space<vmem>>, vector<8x256xf32>
    %30 = vector.broadcast %17 : vector<1x256xf32> to vector<8x256xf32>
    %31 = arith.mulf %29, %30 : vector<8x256xf32>
    %c0_18 = arith.constant 0 : index
    %c127 = arith.constant 127 : index
    %32 = vector.load %arg7[%c0_18, %c127] : memref<8x512xf32, #tpu.memory_space<vmem>>, vector<8x256xf32>
    %33 = vector.broadcast %13 : vector<1x256xf32> to vector<8x256xf32>
    %34 = arith.mulf %32, %33 : vector<8x256xf32>
    %c0_19 = arith.constant 0 : index
    %c128_20 = arith.constant 128 : index
    %35 = vector.load %arg7[%c0_19, %c128_20] : memref<8x512xf32, #tpu.memory_space<vmem>>, vector<8x256xf32>
    %c0_21 = arith.constant 0 : index
    %c129 = arith.constant 129 : index
    %36 = vector.load %arg7[%c0_21, %c129] : memref<8x512xf32, #tpu.memory_space<vmem>>, vector<8x256xf32>
    %37 = vector.broadcast %17 : vector<1x256xf32> to vector<8x256xf32>
    %38 = arith.mulf %36, %37 : vector<8x256xf32>
    %c0_22 = arith.constant 0 : index
    %c143 = arith.constant 143 : index
    %39 = vector.load %arg7[%c0_22, %c143] : memref<8x512xf32, #tpu.memory_space<vmem>>, vector<8x256xf32>
    %40 = vector.broadcast %13 : vector<1x256xf32> to vector<8x256xf32>
    %41 = arith.mulf %39, %40 : vector<8x256xf32>
    %c0_23 = arith.constant 0 : index
    %c144 = arith.constant 144 : index
    %42 = vector.load %arg7[%c0_23, %c144] : memref<8x512xf32, #tpu.memory_space<vmem>>, vector<8x256xf32>
    %c0_24 = arith.constant 0 : index
    %c145 = arith.constant 145 : index
    %43 = vector.load %arg7[%c0_24, %c145] : memref<8x512xf32, #tpu.memory_space<vmem>>, vector<8x256xf32>
    %44 = vector.broadcast %17 : vector<1x256xf32> to vector<8x256xf32>
    %45 = arith.mulf %43, %44 : vector<8x256xf32>
    %46 = tpu.concatenate %27, %28, %31, %34, %35, %38, %41, %42, %45 in 0 : vector<8x256xf32>, vector<8x256xf32>, vector<8x256xf32>, vector<8x256xf32>, vector<8x256xf32>, vector<8x256xf32>, vector<8x256xf32>, vector<8x256xf32>, vector<8x256xf32> -> vector<72x256xf32>
    %cst_25 = arith.constant dense<0.000000e+00> : vector<8x256xf32>
    %47 = tpu.matmul %21, %46, %cst_25 {dimension_numbers = #tpu.dot_dimension_numbers<[1], [0], [0], [1], [0, 0, 1, 1], [], []>} : vector<8x72xf32>, vector<72x256xf32>, vector<8x256xf32> -> vector<8x256xf32>
    %48 = vector.broadcast %23 : vector<8x1xf32> to vector<8x256xf32>
    %49 = arith.addf %47, %48 : vector<8x256xf32>
    %cst_26 = arith.constant 5.000000e-01 : f32
    %50 = vector.broadcast %cst_26 : f32 to vector<8x256xf32>
    %51 = arith.mulf %50, %49 : vector<8x256xf32>
    %cst_27 = arith.constant 0.707106769 : f32
    %52 = vector.broadcast %cst_27 : f32 to vector<8x256xf32>
    %53 = arith.mulf %49, %52 : vector<8x256xf32>
    %54 = math.erf %53 : vector<8x256xf32>
    %cst_28 = arith.constant 1.000000e+00 : f32
    %55 = vector.broadcast %cst_28 : f32 to vector<8x256xf32>
    %56 = arith.addf %55, %54 : vector<8x256xf32>
    %57 = arith.mulf %51, %56 : vector<8x256xf32>
    %c0_29 = arith.constant 0 : index
    %c0_30 = arith.constant 0 : index
    %c0_31 = arith.constant 0 : index
    %58 = vector.load %arg4[%c0_29, %c0_30, %c0_31] : memref<8x8x72xf32, #tpu.memory_space<vmem>>, vector<1x8x72xf32>
    %59 = vector.shape_cast %58 : vector<1x8x72xf32> to vector<8x72xf32>
    %c0_32 = arith.constant 0 : index
    %c0_33 = arith.constant 0 : index
    %c0_34 = arith.constant 0 : index
    %60 = vector.load %arg5[%c0_32, %c0_33, %c0_34] : memref<8x8x1xf32, #tpu.memory_space<vmem>>, vector<1x8x1xf32>
    %61 = vector.shape_cast %60 : vector<1x8x1xf32> to vector<8x1xf32>
    %c0_35 = arith.constant 0 : index
    %c128_36 = arith.constant 128 : index
    %62 = vector.load %arg7[%c0_35, %c128_36] : memref<8x512xf32, #tpu.memory_space<vmem>>, vector<8x256xf32>
    tpu.vector_store %arg7[%c0_35, %c128_36], %57 {strides = array<i32>} : memref<8x512xf32, #tpu.memory_space<vmem>>, vector<8x256xf32>,
    %c0_37 = arith.constant 0 : index
    %c111_38 = arith.constant 111 : index
    %63 = vector.load %arg7[%c0_37, %c111_38] : memref<8x512xf32, #tpu.memory_space<vmem>>, vector<8x256xf32>
    %64 = vector.broadcast %13 : vector<1x256xf32> to vector<8x256xf32>
    %65 = arith.mulf %63, %64 : vector<8x256xf32>
    %c0_39 = arith.constant 0 : index
    %c112_40 = arith.constant 112 : index
    %66 = vector.load %arg7[%c0_39, %c112_40] : memref<8x512xf32, #tpu.memory_space<vmem>>, vector<8x256xf32>
    %c0_41 = arith.constant 0 : index
    %c113_42 = arith.constant 113 : index
    %67 = vector.load %arg7[%c0_41, %c113_42] : memref<8x512xf32, #tpu.memory_space<vmem>>, vector<8x256xf32>
    %68 = vector.broadcast %17 : vector<1x256xf32> to vector<8x256xf32>
    %69 = arith.mulf %67, %68 : vector<8x256xf32>
    %c0_43 = arith.constant 0 : index
    %c127_44 = arith.constant 127 : index
    %70 = vector.load %arg7[%c0_43, %c127_44] : memref<8x512xf32, #tpu.memory_space<vmem>>, vector<8x256xf32>
    %71 = vector.broadcast %13 : vector<1x256xf32> to vector<8x256xf32>
    %72 = arith.mulf %70, %71 : vector<8x256xf32>
    %c0_45 = arith.constant 0 : index
    %c128_46 = arith.constant 128 : index
    %73 = vector.load %arg7[%c0_45, %c128_46] : memref<8x512xf32, #tpu.memory_space<vmem>>, vector<8x256xf32>
    %c0_47 = arith.constant 0 : index
    %c129_48 = arith.constant 129 : index
    %74 = vector.load %arg7[%c0_47, %c129_48] : memref<8x512xf32, #tpu.memory_space<vmem>>, vector<8x256xf32>
    %75 = vector.broadcast %17 : vector<1x256xf32> to vector<8x256xf32>
    %76 = arith.mulf %74, %75 : vector<8x256xf32>
    %c0_49 = arith.constant 0 : index
    %c143_50 = arith.constant 143 : index
    %77 = vector.load %arg7[%c0_49, %c143_50] : memref<8x512xf32, #tpu.memory_space<vmem>>, vector<8x256xf32>
    %78 = vector.broadcast %13 : vector<1x256xf32> to vector<8x256xf32>
    %79 = arith.mulf %77, %78 : vector<8x256xf32>
    %c0_51 = arith.constant 0 : index
    %c144_52 = arith.constant 144 : index
    %80 = vector.load %arg7[%c0_51, %c144_52] : memref<8x512xf32, #tpu.memory_space<vmem>>, vector<8x256xf32>
    %c0_53 = arith.constant 0 : index
    %c145_54 = arith.constant 145 : index
    %81 = vector.load %arg7[%c0_53, %c145_54] : memref<8x512xf32, #tpu.memory_space<vmem>>, vector<8x256xf32>
    %82 = vector.broadcast %17 : vector<1x256xf32> to vector<8x256xf32>
    %83 = arith.mulf %81, %82 : vector<8x256xf32>
    %84 = tpu.concatenate %65, %66, %69, %72, %73, %76, %79, %80, %83 in 0 : vector<8x256xf32>, vector<8x256xf32>, vector<8x256xf32>, vector<8x256xf32>, vector<8x256xf32>, vector<8x256xf32>, vector<8x256xf32>, vector<8x256xf32>, vector<8x256xf32> -> vector<72x256xf32>
    %cst_55 = arith.constant dense<0.000000e+00> : vector<8x256xf32>
    %85 = tpu.matmul %59, %84, %cst_55 {dimension_numbers = #tpu.dot_dimension_numbers<[1], [0], [0], [1], [0, 0, 1, 1], [], []>} : vector<8x72xf32>, vector<72x256xf32>, vector<8x256xf32> -> vector<8x256xf32>
    %86 = vector.broadcast %61 : vector<8x1xf32> to vector<8x256xf32>
    %87 = arith.addf %85, %86 : vector<8x256xf32>
    %88 = arith.addf %87, %19 : vector<8x256xf32>
    %c1 = arith.constant 1 : index
    %c0_56 = arith.constant 0 : index
    %c0_57 = arith.constant 0 : index
    %89 = vector.load %arg2[%c1, %c0_56, %c0_57] : memref<8x8x72xf32, #tpu.memory_space<vmem>>, vector<1x8x72xf32>
    %90 = vector.shape_cast %89 : vector<1x8x72xf32> to vector<8x72xf32>
    %c1_58 = arith.constant 1 : index
    %c0_59 = arith.constant 0 : index
    %c0_60 = arith.constant 0 : index
    %91 = vector.load %arg3[%c1_58, %c0_59, %c0_60] : memref<8x8x1xf32, #tpu.memory_space<vmem>>, vector<1x8x1xf32>
    %92 = vector.shape_cast %91 : vector<1x8x1xf32> to vector<8x1xf32>
    %c0_61 = arith.constant 0 : index
    %c128_62 = arith.constant 128 : index
    %93 = vector.load %arg7[%c0_61, %c128_62] : memref<8x512xf32, #tpu.memory_space<vmem>>, vector<8x256xf32>
    tpu.vector_store %arg7[%c0_61, %c128_62], %88 {strides = array<i32>} : memref<8x512xf32, #tpu.memory_space<vmem>>, vector<8x256xf32>,
    %c0_63 = arith.constant 0 : index
    %c111_64 = arith.constant 111 : index
    %94 = vector.load %arg7[%c0_63, %c111_64] : memref<8x512xf32, #tpu.memory_space<vmem>>, vector<8x256xf32>
    %95 = vector.broadcast %13 : vector<1x256xf32> to vector<8x256xf32>
    %96 = arith.mulf %94, %95 : vector<8x256xf32>
    %c0_65 = arith.constant 0 : index
    %c112_66 = arith.constant 112 : index
    %97 = vector.load %arg7[%c0_65, %c112_66] : memref<8x512xf32, #tpu.memory_space<vmem>>, vector<8x256xf32>
    %c0_67 = arith.constant 0 : index
    %c113_68 = arith.constant 113 : index
    %98 = vector.load %arg7[%c0_67, %c113_68] : memref<8x512xf32, #tpu.memory_space<vmem>>, vector<8x256xf32>
    %99 = vector.broadcast %17 : vector<1x256xf32> to vector<8x256xf32>
    %100 = arith.mulf %98, %99 : vector<8x256xf32>
    %c0_69 = arith.constant 0 : index
    %c127_70 = arith.constant 127 : index
    %101 = vector.load %arg7[%c0_69, %c127_70] : memref<8x512xf32, #tpu.memory_space<vmem>>, vector<8x256xf32>
    %102 = vector.broadcast %13 : vector<1x256xf32> to vector<8x256xf32>
    %103 = arith.mulf %101, %102 : vector<8x256xf32>
    %c0_71 = arith.constant 0 : index
    %c128_72 = arith.constant 128 : index
    %104 = vector.load %arg7[%c0_71, %c128_72] : memref<8x512xf32, #tpu.memory_space<vmem>>, vector<8x256xf32>
    %c0_73 = arith.constant 0 : index
    %c129_74 = arith.constant 129 : index
    %105 = vector.load %arg7[%c0_73, %c129_74] : memref<8x512xf32, #tpu.memory_space<vmem>>, vector<8x256xf32>
    %106 = vector.broadcast %17 : vector<1x256xf32> to vector<8x256xf32>
    %107 = arith.mulf %105, %106 : vector<8x256xf32>
    %c0_75 = arith.constant 0 : index
    %c143_76 = arith.constant 143 : index
    %108 = vector.load %arg7[%c0_75, %c143_76] : memref<8x512xf32, #tpu.memory_space<vmem>>, vector<8x256xf32>
    %109 = vector.broadcast %13 : vector<1x256xf32> to vector<8x256xf32>
    %110 = arith.mulf %108, %109 : vector<8x256xf32>
    %c0_77 = arith.constant 0 : index
    %c144_78 = arith.constant 144 : index
    %111 = vector.load %arg7[%c0_77, %c144_78] : memref<8x512xf32, #tpu.memory_space<vmem>>, vector<8x256xf32>
    %c0_79 = arith.constant 0 : index
    %c145_80 = arith.constant 145 : index
    %112 = vector.load %arg7[%c0_79, %c145_80] : memref<8x512xf32, #tpu.memory_space<vmem>>, vector<8x256xf32>
    %113 = vector.broadcast %17 : vector<1x256xf32> to vector<8x256xf32>
    %114 = arith.mulf %112, %113 : vector<8x256xf32>
    %115 = tpu.concatenate %96, %97, %100, %103, %104, %107, %110, %111, %114 in 0 : vector<8x256xf32>, vector<8x256xf32>, vector<8x256xf32>, vector<8x256xf32>, vector<8x256xf32>, vector<8x256xf32>, vector<8x256xf32>, vector<8x256xf32>, vector<8x256xf32> -> vector<72x256xf32>
    %cst_81 = arith.constant dense<0.000000e+00> : vector<8x256xf32>
    %116 = tpu.matmul %90, %115, %cst_81 {dimension_numbers = #tpu.dot_dimension_numbers<[1], [0], [0], [1], [0, 0, 1, 1], [], []>} : vector<8x72xf32>, vector<72x256xf32>, vector<8x256xf32> -> vector<8x256xf32>
    %117 = vector.broadcast %92 : vector<8x1xf32> to vector<8x256xf32>
    %118 = arith.addf %116, %117 : vector<8x256xf32>
    %cst_82 = arith.constant 5.000000e-01 : f32
    %119 = vector.broadcast %cst_82 : f32 to vector<8x256xf32>
    %120 = arith.mulf %119, %118 : vector<8x256xf32>
    %cst_83 = arith.constant 0.707106769 : f32
    %121 = vector.broadcast %cst_83 : f32 to vector<8x256xf32>
    %122 = arith.mulf %118, %121 : vector<8x256xf32>
    %123 = math.erf %122 : vector<8x256xf32>
    %cst_84 = arith.constant 1.000000e+00 : f32
    %124 = vector.broadcast %cst_84 : f32 to vector<8x256xf32>
    %125 = arith.addf %124, %123 : vector<8x256xf32>
    %126 = arith.mulf %120, %125 : vector<8x256xf32>
    %c1_85 = arith.constant 1 : index
    %c0_86 = arith.constant 0 : index
    %c0_87 = arith.constant 0 : index
    %127 = vector.load %arg4[%c1_85, %c0_86, %c0_87] : memref<8x8x72xf32, #tpu.memory_space<vmem>>, vector<1x8x72xf32>
    %128 = vector.shape_cast %127 : vector<1x8x72xf32> to vector<8x72xf32>
    %c1_88 = arith.constant 1 : index
    %c0_89 = arith.constant 0 : index
    %c0_90 = arith.constant 0 : index
    %129 = vector.load %arg5[%c1_88, %c0_89, %c0_90] : memref<8x8x1xf32, #tpu.memory_space<vmem>>, vector<1x8x1xf32>
    %130 = vector.shape_cast %129 : vector<1x8x1xf32> to vector<8x1xf32>
    %c0_91 = arith.constant 0 : index
    %c128_92 = arith.constant 128 : index
    %131 = vector.load %arg7[%c0_91, %c128_92] : memref<8x512xf32, #tpu.memory_space<vmem>>, vector<8x256xf32>
    tpu.vector_store %arg7[%c0_91, %c128_92], %126 {strides = array<i32>} : memref<8x512xf32, #tpu.memory_space<vmem>>, vector<8x256xf32>,
    %c0_93 = arith.constant 0 : index
    %c111_94 = arith.constant 111 : index
    %132 = vector.load %arg7[%c0_93, %c111_94] : memref<8x512xf32, #tpu.memory_space<vmem>>, vector<8x256xf32>
    %133 = vector.broadcast %13 : vector<1x256xf32> to vector<8x256xf32>
    %134 = arith.mulf %132, %133 : vector<8x256xf32>
    %c0_95 = arith.constant 0 : index
    %c112_96 = arith.constant 112 : index
    %135 = vector.load %arg7[%c0_95, %c112_96] : memref<8x512xf32, #tpu.memory_space<vmem>>, vector<8x256xf32>
    %c0_97 = arith.constant 0 : index
    %c113_98 = arith.constant 113 : index
    %136 = vector.load %arg7[%c0_97, %c113_98] : memref<8x512xf32, #tpu.memory_space<vmem>>, vector<8x256xf32>
    %137 = vector.broadcast %17 : vector<1x256xf32> to vector<8x256xf32>
    %138 = arith.mulf %136, %137 : vector<8x256xf32>
    %c0_99 = arith.constant 0 : index
    %c127_100 = arith.constant 127 : index
    %139 = vector.load %arg7[%c0_99, %c127_100] : memref<8x512xf32, #tpu.memory_space<vmem>>, vector<8x256xf32>
    %140 = vector.broadcast %13 : vector<1x256xf32> to vector<8x256xf32>
    %141 = arith.mulf %139, %140 : vector<8x256xf32>
    %c0_101 = arith.constant 0 : index
    %c128_102 = arith.constant 128 : index
    %142 = vector.load %arg7[%c0_101, %c128_102] : memref<8x512xf32, #tpu.memory_space<vmem>>, vector<8x256xf32>
    %c0_103 = arith.constant 0 : index
    %c129_104 = arith.constant 129 : index
    %143 = vector.load %arg7[%c0_103, %c129_104] : memref<8x512xf32, #tpu.memory_space<vmem>>, vector<8x256xf32>
    %144 = vector.broadcast %17 : vector<1x256xf32> to vector<8x256xf32>
    %145 = arith.mulf %143, %144 : vector<8x256xf32>
    %c0_105 = arith.constant 0 : index
    %c143_106 = arith.constant 143 : index
    %146 = vector.load %arg7[%c0_105, %c143_106] : memref<8x512xf32, #tpu.memory_space<vmem>>, vector<8x256xf32>
    %147 = vector.broadcast %13 : vector<1x256xf32> to vector<8x256xf32>
    %148 = arith.mulf %146, %147 : vector<8x256xf32>
    %c0_107 = arith.constant 0 : index
    %c144_108 = arith.constant 144 : index
    %149 = vector.load %arg7[%c0_107, %c144_108] : memref<8x512xf32, #tpu.memory_space<vmem>>, vector<8x256xf32>
    %c0_109 = arith.constant 0 : index
    %c145_110 = arith.constant 145 : index
    %150 = vector.load %arg7[%c0_109, %c145_110] : memref<8x512xf32, #tpu.memory_space<vmem>>, vector<8x256xf32>
    %151 = vector.broadcast %17 : vector<1x256xf32> to vector<8x256xf32>
    %152 = arith.mulf %150, %151 : vector<8x256xf32>
    %153 = tpu.concatenate %134, %135, %138, %141, %142, %145, %148, %149, %152 in 0 : vector<8x256xf32>, vector<8x256xf32>, vector<8x256xf32>, vector<8x256xf32>, vector<8x256xf32>, vector<8x256xf32>, vector<8x256xf32>, vector<8x256xf32>, vector<8x256xf32> -> vector<72x256xf32>
    %cst_111 = arith.constant dense<0.000000e+00> : vector<8x256xf32>
    %154 = tpu.matmul %128, %153, %cst_111 {dimension_numbers = #tpu.dot_dimension_numbers<[1], [0], [0], [1], [0, 0, 1, 1], [], []>} : vector<8x72xf32>, vector<72x256xf32>, vector<8x256xf32> -> vector<8x256xf32>
    %155 = vector.broadcast %130 : vector<8x1xf32> to vector<8x256xf32>
    %156 = arith.addf %154, %155 : vector<8x256xf32>
    %157 = arith.addf %156, %88 : vector<8x256xf32>
    %c2 = arith.constant 2 : index
    %c0_112 = arith.constant 0 : index
    %c0_113 = arith.constant 0 : index
    %158 = vector.load %arg2[%c2, %c0_112, %c0_113] : memref<8x8x72xf32, #tpu.memory_space<vmem>>, vector<1x8x72xf32>
    %159 = vector.shape_cast %158 : vector<1x8x72xf32> to vector<8x72xf32>
    %c2_114 = arith.constant 2 : index
    %c0_115 = arith.constant 0 : index
    %c0_116 = arith.constant 0 : index
    %160 = vector.load %arg3[%c2_114, %c0_115, %c0_116] : memref<8x8x1xf32, #tpu.memory_space<vmem>>, vector<1x8x1xf32>
    %161 = vector.shape_cast %160 : vector<1x8x1xf32> to vector<8x1xf32>
    %c0_117 = arith.constant 0 : index
    %c128_118 = arith.constant 128 : index
    %162 = vector.load %arg7[%c0_117, %c128_118] : memref<8x512xf32, #tpu.memory_space<vmem>>, vector<8x256xf32>
    tpu.vector_store %arg7[%c0_117, %c128_118], %157 {strides = array<i32>} : memref<8x512xf32, #tpu.memory_space<vmem>>, vector<8x256xf32>,
    %c0_119 = arith.constant 0 : index
    %c111_120 = arith.constant 111 : index
    %163 = vector.load %arg7[%c0_119, %c111_120] : memref<8x512xf32, #tpu.memory_space<vmem>>, vector<8x256xf32>
    %164 = vector.broadcast %13 : vector<1x256xf32> to vector<8x256xf32>
    %165 = arith.mulf %163, %164 : vector<8x256xf32>
    %c0_121 = arith.constant 0 : index
    %c112_122 = arith.constant 112 : index
    %166 = vector.load %arg7[%c0_121, %c112_122] : memref<8x512xf32, #tpu.memory_space<vmem>>, vector<8x256xf32>
    %c0_123 = arith.constant 0 : index
    %c113_124 = arith.constant 113 : index
    %167 = vector.load %arg7[%c0_123, %c113_124] : memref<8x512xf32, #tpu.memory_space<vmem>>, vector<8x256xf32>
    %168 = vector.broadcast %17 : vector<1x256xf32> to vector<8x256xf32>
    %169 = arith.mulf %167, %168 : vector<8x256xf32>
    %c0_125 = arith.constant 0 : index
    %c127_126 = arith.constant 127 : index
    %170 = vector.load %arg7[%c0_125, %c127_126] : memref<8x512xf32, #tpu.memory_space<vmem>>, vector<8x256xf32>
    %171 = vector.broadcast %13 : vector<1x256xf32> to vector<8x256xf32>
    %172 = arith.mulf %170, %171 : vector<8x256xf32>
    %c0_127 = arith.constant 0 : index
    %c128_128 = arith.constant 128 : index
    %173 = vector.load %arg7[%c0_127, %c128_128] : memref<8x512xf32, #tpu.memory_space<vmem>>, vector<8x256xf32>
    %c0_129 = arith.constant 0 : index
    %c129_130 = arith.constant 129 : index
    %174 = vector.load %arg7[%c0_129, %c129_130] : memref<8x512xf32, #tpu.memory_space<vmem>>, vector<8x256xf32>
    %175 = vector.broadcast %17 : vector<1x256xf32> to vector<8x256xf32>
    %176 = arith.mulf %174, %175 : vector<8x256xf32>
    %c0_131 = arith.constant 0 : index
    %c143_132 = arith.constant 143 : index
    %177 = vector.load %arg7[%c0_131, %c143_132] : memref<8x512xf32, #tpu.memory_space<vmem>>, vector<8x256xf32>
    %178 = vector.broadcast %13 : vector<1x256xf32> to vector<8x256xf32>
    %179 = arith.mulf %177, %178 : vector<8x256xf32>
    %c0_133 = arith.constant 0 : index
    %c144_134 = arith.constant 144 : index
    %180 = vector.load %arg7[%c0_133, %c144_134] : memref<8x512xf32, #tpu.memory_space<vmem>>, vector<8x256xf32>
    %c0_135 = arith.constant 0 : index
    %c145_136 = arith.constant 145 : index
    %181 = vector.load %arg7[%c0_135, %c145_136] : memref<8x512xf32, #tpu.memory_space<vmem>>, vector<8x256xf32>
    %182 = vector.broadcast %17 : vector<1x256xf32> to vector<8x256xf32>
    %183 = arith.mulf %181, %182 : vector<8x256xf32>
    %184 = tpu.concatenate %165, %166, %169, %172, %173, %176, %179, %180, %183 in 0 : vector<8x256xf32>, vector<8x256xf32>, vector<8x256xf32>, vector<8x256xf32>, vector<8x256xf32>, vector<8x256xf32>, vector<8x256xf32>, vector<8x256xf32>, vector<8x256xf32> -> vector<72x256xf32>
    %cst_137 = arith.constant dense<0.000000e+00> : vector<8x256xf32>
    %185 = tpu.matmul %159, %184, %cst_137 {dimension_numbers = #tpu.dot_dimension_numbers<[1], [0], [0], [1], [0, 0, 1, 1], [], []>} : vector<8x72xf32>, vector<72x256xf32>, vector<8x256xf32> -> vector<8x256xf32>
    %186 = vector.broadcast %161 : vector<8x1xf32> to vector<8x256xf32>
    %187 = arith.addf %185, %186 : vector<8x256xf32>
    %cst_138 = arith.constant 5.000000e-01 : f32
    %188 = vector.broadcast %cst_138 : f32 to vector<8x256xf32>
    %189 = arith.mulf %188, %187 : vector<8x256xf32>
    %cst_139 = arith.constant 0.707106769 : f32
    %190 = vector.broadcast %cst_139 : f32 to vector<8x256xf32>
    %191 = arith.mulf %187, %190 : vector<8x256xf32>
    %192 = math.erf %191 : vector<8x256xf32>
    %cst_140 = arith.constant 1.000000e+00 : f32
    %193 = vector.broadcast %cst_140 : f32 to vector<8x256xf32>
    %194 = arith.addf %193, %192 : vector<8x256xf32>
    %195 = arith.mulf %189, %194 : vector<8x256xf32>
    %c2_141 = arith.constant 2 : index
    %c0_142 = arith.constant 0 : index
    %c0_143 = arith.constant 0 : index
    %196 = vector.load %arg4[%c2_141, %c0_142, %c0_143] : memref<8x8x72xf32, #tpu.memory_space<vmem>>, vector<1x8x72xf32>
    %197 = vector.shape_cast %196 : vector<1x8x72xf32> to vector<8x72xf32>
    %c2_144 = arith.constant 2 : index
    %c0_145 = arith.constant 0 : index
    %c0_146 = arith.constant 0 : index
    %198 = vector.load %arg5[%c2_144, %c0_145, %c0_146] : memref<8x8x1xf32, #tpu.memory_space<vmem>>, vector<1x8x1xf32>
    %199 = vector.shape_cast %198 : vector<1x8x1xf32> to vector<8x1xf32>
    %c0_147 = arith.constant 0 : index
    %c128_148 = arith.constant 128 : index
    %200 = vector.load %arg7[%c0_147, %c128_148] : memref<8x512xf32, #tpu.memory_space<vmem>>, vector<8x256xf32>
    tpu.vector_store %arg7[%c0_147, %c128_148], %195 {strides = array<i32>} : memref<8x512xf32, #tpu.memory_space<vmem>>, vector<8x256xf32>,
    %c0_149 = arith.constant 0 : index
    %c111_150 = arith.constant 111 : index
    %201 = vector.load %arg7[%c0_149, %c111_150] : memref<8x512xf32, #tpu.memory_space<vmem>>, vector<8x256xf32>
    %202 = vector.broadcast %13 : vector<1x256xf32> to vector<8x256xf32>
    %203 = arith.mulf %201, %202 : vector<8x256xf32>
    %c0_151 = arith.constant 0 : index
    %c112_152 = arith.constant 112 : index
    %204 = vector.load %arg7[%c0_151, %c112_152] : memref<8x512xf32, #tpu.memory_space<vmem>>, vector<8x256xf32>
    %c0_153 = arith.constant 0 : index
    %c113_154 = arith.constant 113 : index
    %205 = vector.load %arg7[%c0_153, %c113_154] : memref<8x512xf32, #tpu.memory_space<vmem>>, vector<8x256xf32>
    %206 = vector.broadcast %17 : vector<1x256xf32> to vector<8x256xf32>
    %207 = arith.mulf %205, %206 : vector<8x256xf32>
    %c0_155 = arith.constant 0 : index
    %c127_156 = arith.constant 127 : index
    %208 = vector.load %arg7[%c0_155, %c127_156] : memref<8x512xf32, #tpu.memory_space<vmem>>, vector<8x256xf32>
    %209 = vector.broadcast %13 : vector<1x256xf32> to vector<8x256xf32>
    %210 = arith.mulf %208, %209 : vector<8x256xf32>
    %c0_157 = arith.constant 0 : index
    %c128_158 = arith.constant 128 : index
    %211 = vector.load %arg7[%c0_157, %c128_158] : memref<8x512xf32, #tpu.memory_space<vmem>>, vector<8x256xf32>
    %c0_159 = arith.constant 0 : index
    %c129_160 = arith.constant 129 : index
    %212 = vector.load %arg7[%c0_159, %c129_160] : memref<8x512xf32, #tpu.memory_space<vmem>>, vector<8x256xf32>
    %213 = vector.broadcast %17 : vector<1x256xf32> to vector<8x256xf32>
    %214 = arith.mulf %212, %213 : vector<8x256xf32>
    %c0_161 = arith.constant 0 : index
    %c143_162 = arith.constant 143 : index
    %215 = vector.load %arg7[%c0_161, %c143_162] : memref<8x512xf32, #tpu.memory_space<vmem>>, vector<8x256xf32>
    %216 = vector.broadcast %13 : vector<1x256xf32> to vector<8x256xf32>
    %217 = arith.mulf %215, %216 : vector<8x256xf32>
    %c0_163 = arith.constant 0 : index
    %c144_164 = arith.constant 144 : index
    %218 = vector.load %arg7[%c0_163, %c144_164] : memref<8x512xf32, #tpu.memory_space<vmem>>, vector<8x256xf32>
    %c0_165 = arith.constant 0 : index
    %c145_166 = arith.constant 145 : index
    %219 = vector.load %arg7[%c0_165, %c145_166] : memref<8x512xf32, #tpu.memory_space<vmem>>, vector<8x256xf32>
    %220 = vector.broadcast %17 : vector<1x256xf32> to vector<8x256xf32>
    %221 = arith.mulf %219, %220 : vector<8x256xf32>
    %222 = tpu.concatenate %203, %204, %207, %210, %211, %214, %217, %218, %221 in 0 : vector<8x256xf32>, vector<8x256xf32>, vector<8x256xf32>, vector<8x256xf32>, vector<8x256xf32>, vector<8x256xf32>, vector<8x256xf32>, vector<8x256xf32>, vector<8x256xf32> -> vector<72x256xf32>
    %cst_167 = arith.constant dense<0.000000e+00> : vector<8x256xf32>
    %223 = tpu.matmul %197, %222, %cst_167 {dimension_numbers = #tpu.dot_dimension_numbers<[1], [0], [0], [1], [0, 0, 1, 1], [], []>} : vector<8x72xf32>, vector<72x256xf32>, vector<8x256xf32> -> vector<8x256xf32>
    %224 = vector.broadcast %199 : vector<8x1xf32> to vector<8x256xf32>
    %225 = arith.addf %223, %224 : vector<8x256xf32>
    %226 = arith.addf %225, %157 : vector<8x256xf32>
    %c3 = arith.constant 3 : index
    %c0_168 = arith.constant 0 : index
    %c0_169 = arith.constant 0 : index
    %227 = vector.load %arg2[%c3, %c0_168, %c0_169] : memref<8x8x72xf32, #tpu.memory_space<vmem>>, vector<1x8x72xf32>
    %228 = vector.shape_cast %227 : vector<1x8x72xf32> to vector<8x72xf32>
    %c3_170 = arith.constant 3 : index
    %c0_171 = arith.constant 0 : index
    %c0_172 = arith.constant 0 : index
    %229 = vector.load %arg3[%c3_170, %c0_171, %c0_172] : memref<8x8x1xf32, #tpu.memory_space<vmem>>, vector<1x8x1xf32>
    %230 = vector.shape_cast %229 : vector<1x8x1xf32> to vector<8x1xf32>
    %c0_173 = arith.constant 0 : index
    %c128_174 = arith.constant 128 : index
    %231 = vector.load %arg7[%c0_173, %c128_174] : memref<8x512xf32, #tpu.memory_space<vmem>>, vector<8x256xf32>
    tpu.vector_store %arg7[%c0_173, %c128_174], %226 {strides = array<i32>} : memref<8x512xf32, #tpu.memory_space<vmem>>, vector<8x256xf32>,
    %c0_175 = arith.constant 0 : index
    %c111_176 = arith.constant 111 : index
    %232 = vector.load %arg7[%c0_175, %c111_176] : memref<8x512xf32, #tpu.memory_space<vmem>>, vector<8x256xf32>
    %233 = vector.broadcast %13 : vector<1x256xf32> to vector<8x256xf32>
    %234 = arith.mulf %232, %233 : vector<8x256xf32>
    %c0_177 = arith.constant 0 : index
    %c112_178 = arith.constant 112 : index
    %235 = vector.load %arg7[%c0_177, %c112_178] : memref<8x512xf32, #tpu.memory_space<vmem>>, vector<8x256xf32>
    %c0_179 = arith.constant 0 : index
    %c113_180 = arith.constant 113 : index
    %236 = vector.load %arg7[%c0_179, %c113_180] : memref<8x512xf32, #tpu.memory_space<vmem>>, vector<8x256xf32>
    %237 = vector.broadcast %17 : vector<1x256xf32> to vector<8x256xf32>
    %238 = arith.mulf %236, %237 : vector<8x256xf32>
    %c0_181 = arith.constant 0 : index
    %c127_182 = arith.constant 127 : index
    %239 = vector.load %arg7[%c0_181, %c127_182] : memref<8x512xf32, #tpu.memory_space<vmem>>, vector<8x256xf32>
    %240 = vector.broadcast %13 : vector<1x256xf32> to vector<8x256xf32>
    %241 = arith.mulf %239, %240 : vector<8x256xf32>
    %c0_183 = arith.constant 0 : index
    %c128_184 = arith.constant 128 : index
    %242 = vector.load %arg7[%c0_183, %c128_184] : memref<8x512xf32, #tpu.memory_space<vmem>>, vector<8x256xf32>
    %c0_185 = arith.constant 0 : index
    %c129_186 = arith.constant 129 : index
    %243 = vector.load %arg7[%c0_185, %c129_186] : memref<8x512xf32, #tpu.memory_space<vmem>>, vector<8x256xf32>
    %244 = vector.broadcast %17 : vector<1x256xf32> to vector<8x256xf32>
    %245 = arith.mulf %243, %244 : vector<8x256xf32>
    %c0_187 = arith.constant 0 : index
    %c143_188 = arith.constant 143 : index
    %246 = vector.load %arg7[%c0_187, %c143_188] : memref<8x512xf32, #tpu.memory_space<vmem>>, vector<8x256xf32>
    %247 = vector.broadcast %13 : vector<1x256xf32> to vector<8x256xf32>
    %248 = arith.mulf %246, %247 : vector<8x256xf32>
    %c0_189 = arith.constant 0 : index
    %c144_190 = arith.constant 144 : index
    %249 = vector.load %arg7[%c0_189, %c144_190] : memref<8x512xf32, #tpu.memory_space<vmem>>, vector<8x256xf32>
    %c0_191 = arith.constant 0 : index
    %c145_192 = arith.constant 145 : index
    %250 = vector.load %arg7[%c0_191, %c145_192] : memref<8x512xf32, #tpu.memory_space<vmem>>, vector<8x256xf32>
    %251 = vector.broadcast %17 : vector<1x256xf32> to vector<8x256xf32>
    %252 = arith.mulf %250, %251 : vector<8x256xf32>
    %253 = tpu.concatenate %234, %235, %238, %241, %242, %245, %248, %249, %252 in 0 : vector<8x256xf32>, vector<8x256xf32>, vector<8x256xf32>, vector<8x256xf32>, vector<8x256xf32>, vector<8x256xf32>, vector<8x256xf32>, vector<8x256xf32>, vector<8x256xf32> -> vector<72x256xf32>
    %cst_193 = arith.constant dense<0.000000e+00> : vector<8x256xf32>
    %254 = tpu.matmul %228, %253, %cst_193 {dimension_numbers = #tpu.dot_dimension_numbers<[1], [0], [0], [1], [0, 0, 1, 1], [], []>} : vector<8x72xf32>, vector<72x256xf32>, vector<8x256xf32> -> vector<8x256xf32>
    %255 = vector.broadcast %230 : vector<8x1xf32> to vector<8x256xf32>
    %256 = arith.addf %254, %255 : vector<8x256xf32>
    %cst_194 = arith.constant 5.000000e-01 : f32
    %257 = vector.broadcast %cst_194 : f32 to vector<8x256xf32>
    %258 = arith.mulf %257, %256 : vector<8x256xf32>
    %cst_195 = arith.constant 0.707106769 : f32
    %259 = vector.broadcast %cst_195 : f32 to vector<8x256xf32>
    %260 = arith.mulf %256, %259 : vector<8x256xf32>
    %261 = math.erf %260 : vector<8x256xf32>
    %cst_196 = arith.constant 1.000000e+00 : f32
    %262 = vector.broadcast %cst_196 : f32 to vector<8x256xf32>
    %263 = arith.addf %262, %261 : vector<8x256xf32>
    %264 = arith.mulf %258, %263 : vector<8x256xf32>
    %c3_197 = arith.constant 3 : index
    %c0_198 = arith.constant 0 : index
    %c0_199 = arith.constant 0 : index
    %265 = vector.load %arg4[%c3_197, %c0_198, %c0_199] : memref<8x8x72xf32, #tpu.memory_space<vmem>>, vector<1x8x72xf32>
    %266 = vector.shape_cast %265 : vector<1x8x72xf32> to vector<8x72xf32>
    %c3_200 = arith.constant 3 : index
    %c0_201 = arith.constant 0 : index
    %c0_202 = arith.constant 0 : index
    %267 = vector.load %arg5[%c3_200, %c0_201, %c0_202] : memref<8x8x1xf32, #tpu.memory_space<vmem>>, vector<1x8x1xf32>
    %268 = vector.shape_cast %267 : vector<1x8x1xf32> to vector<8x1xf32>
    %c0_203 = arith.constant 0 : index
    %c128_204 = arith.constant 128 : index
    %269 = vector.load %arg7[%c0_203, %c128_204] : memref<8x512xf32, #tpu.memory_space<vmem>>, vector<8x256xf32>
    tpu.vector_store %arg7[%c0_203, %c128_204], %264 {strides = array<i32>} : memref<8x512xf32, #tpu.memory_space<vmem>>, vector<8x256xf32>,
    %c0_205 = arith.constant 0 : index
    %c111_206 = arith.constant 111 : index
    %270 = vector.load %arg7[%c0_205, %c111_206] : memref<8x512xf32, #tpu.memory_space<vmem>>, vector<8x256xf32>
    %271 = vector.broadcast %13 : vector<1x256xf32> to vector<8x256xf32>
    %272 = arith.mulf %270, %271 : vector<8x256xf32>
    %c0_207 = arith.constant 0 : index
    %c112_208 = arith.constant 112 : index
    %273 = vector.load %arg7[%c0_207, %c112_208] : memref<8x512xf32, #tpu.memory_space<vmem>>, vector<8x256xf32>
    %c0_209 = arith.constant 0 : index
    %c113_210 = arith.constant 113 : index
    %274 = vector.load %arg7[%c0_209, %c113_210] : memref<8x512xf32, #tpu.memory_space<vmem>>, vector<8x256xf32>
    %275 = vector.broadcast %17 : vector<1x256xf32> to vector<8x256xf32>
    %276 = arith.mulf %274, %275 : vector<8x256xf32>
    %c0_211 = arith.constant 0 : index
    %c127_212 = arith.constant 127 : index
    %277 = vector.load %arg7[%c0_211, %c127_212] : memref<8x512xf32, #tpu.memory_space<vmem>>, vector<8x256xf32>
    %278 = vector.broadcast %13 : vector<1x256xf32> to vector<8x256xf32>
    %279 = arith.mulf %277, %278 : vector<8x256xf32>
    %c0_213 = arith.constant 0 : index
    %c128_214 = arith.constant 128 : index
    %280 = vector.load %arg7[%c0_213, %c128_214] : memref<8x512xf32, #tpu.memory_space<vmem>>, vector<8x256xf32>
    %c0_215 = arith.constant 0 : index
    %c129_216 = arith.constant 129 : index
    %281 = vector.load %arg7[%c0_215, %c129_216] : memref<8x512xf32, #tpu.memory_space<vmem>>, vector<8x256xf32>
    %282 = vector.broadcast %17 : vector<1x256xf32> to vector<8x256xf32>
    %283 = arith.mulf %281, %282 : vector<8x256xf32>
    %c0_217 = arith.constant 0 : index
    %c143_218 = arith.constant 143 : index
    %284 = vector.load %arg7[%c0_217, %c143_218] : memref<8x512xf32, #tpu.memory_space<vmem>>, vector<8x256xf32>
    %285 = vector.broadcast %13 : vector<1x256xf32> to vector<8x256xf32>
    %286 = arith.mulf %284, %285 : vector<8x256xf32>
    %c0_219 = arith.constant 0 : index
    %c144_220 = arith.constant 144 : index
    %287 = vector.load %arg7[%c0_219, %c144_220] : memref<8x512xf32, #tpu.memory_space<vmem>>, vector<8x256xf32>
    %c0_221 = arith.constant 0 : index
    %c145_222 = arith.constant 145 : index
    %288 = vector.load %arg7[%c0_221, %c145_222] : memref<8x512xf32, #tpu.memory_space<vmem>>, vector<8x256xf32>
    %289 = vector.broadcast %17 : vector<1x256xf32> to vector<8x256xf32>
    %290 = arith.mulf %288, %289 : vector<8x256xf32>
    %291 = tpu.concatenate %272, %273, %276, %279, %280, %283, %286, %287, %290 in 0 : vector<8x256xf32>, vector<8x256xf32>, vector<8x256xf32>, vector<8x256xf32>, vector<8x256xf32>, vector<8x256xf32>, vector<8x256xf32>, vector<8x256xf32>, vector<8x256xf32> -> vector<72x256xf32>
    %cst_223 = arith.constant dense<0.000000e+00> : vector<8x256xf32>
    %292 = tpu.matmul %266, %291, %cst_223 {dimension_numbers = #tpu.dot_dimension_numbers<[1], [0], [0], [1], [0, 0, 1, 1], [], []>} : vector<8x72xf32>, vector<72x256xf32>, vector<8x256xf32> -> vector<8x256xf32>
    %293 = vector.broadcast %268 : vector<8x1xf32> to vector<8x256xf32>
    %294 = arith.addf %292, %293 : vector<8x256xf32>
    %295 = arith.addf %294, %226 : vector<8x256xf32>
    %c4 = arith.constant 4 : index
    %c0_224 = arith.constant 0 : index
    %c0_225 = arith.constant 0 : index
    %296 = vector.load %arg2[%c4, %c0_224, %c0_225] : memref<8x8x72xf32, #tpu.memory_space<vmem>>, vector<1x8x72xf32>
    %297 = vector.shape_cast %296 : vector<1x8x72xf32> to vector<8x72xf32>
    %c4_226 = arith.constant 4 : index
    %c0_227 = arith.constant 0 : index
    %c0_228 = arith.constant 0 : index
    %298 = vector.load %arg3[%c4_226, %c0_227, %c0_228] : memref<8x8x1xf32, #tpu.memory_space<vmem>>, vector<1x8x1xf32>
    %299 = vector.shape_cast %298 : vector<1x8x1xf32> to vector<8x1xf32>
    %c0_229 = arith.constant 0 : index
    %c128_230 = arith.constant 128 : index
    %300 = vector.load %arg7[%c0_229, %c128_230] : memref<8x512xf32, #tpu.memory_space<vmem>>, vector<8x256xf32>
    tpu.vector_store %arg7[%c0_229, %c128_230], %295 {strides = array<i32>} : memref<8x512xf32, #tpu.memory_space<vmem>>, vector<8x256xf32>,
    %c0_231 = arith.constant 0 : index
    %c111_232 = arith.constant 111 : index
    %301 = vector.load %arg7[%c0_231, %c111_232] : memref<8x512xf32, #tpu.memory_space<vmem>>, vector<8x256xf32>
    %302 = vector.broadcast %13 : vector<1x256xf32> to vector<8x256xf32>
    %303 = arith.mulf %301, %302 : vector<8x256xf32>
    %c0_233 = arith.constant 0 : index
    %c112_234 = arith.constant 112 : index
    %304 = vector.load %arg7[%c0_233, %c112_234] : memref<8x512xf32, #tpu.memory_space<vmem>>, vector<8x256xf32>
    %c0_235 = arith.constant 0 : index
    %c113_236 = arith.constant 113 : index
    %305 = vector.load %arg7[%c0_235, %c113_236] : memref<8x512xf32, #tpu.memory_space<vmem>>, vector<8x256xf32>
    %306 = vector.broadcast %17 : vector<1x256xf32> to vector<8x256xf32>
    %307 = arith.mulf %305, %306 : vector<8x256xf32>
    %c0_237 = arith.constant 0 : index
    %c127_238 = arith.constant 127 : index
    %308 = vector.load %arg7[%c0_237, %c127_238] : memref<8x512xf32, #tpu.memory_space<vmem>>, vector<8x256xf32>
    %309 = vector.broadcast %13 : vector<1x256xf32> to vector<8x256xf32>
    %310 = arith.mulf %308, %309 : vector<8x256xf32>
    %c0_239 = arith.constant 0 : index
    %c128_240 = arith.constant 128 : index
    %311 = vector.load %arg7[%c0_239, %c128_240] : memref<8x512xf32, #tpu.memory_space<vmem>>, vector<8x256xf32>
    %c0_241 = arith.constant 0 : index
    %c129_242 = arith.constant 129 : index
    %312 = vector.load %arg7[%c0_241, %c129_242] : memref<8x512xf32, #tpu.memory_space<vmem>>, vector<8x256xf32>
    %313 = vector.broadcast %17 : vector<1x256xf32> to vector<8x256xf32>
    %314 = arith.mulf %312, %313 : vector<8x256xf32>
    %c0_243 = arith.constant 0 : index
    %c143_244 = arith.constant 143 : index
    %315 = vector.load %arg7[%c0_243, %c143_244] : memref<8x512xf32, #tpu.memory_space<vmem>>, vector<8x256xf32>
    %316 = vector.broadcast %13 : vector<1x256xf32> to vector<8x256xf32>
    %317 = arith.mulf %315, %316 : vector<8x256xf32>
    %c0_245 = arith.constant 0 : index
    %c144_246 = arith.constant 144 : index
    %318 = vector.load %arg7[%c0_245, %c144_246] : memref<8x512xf32, #tpu.memory_space<vmem>>, vector<8x256xf32>
    %c0_247 = arith.constant 0 : index
    %c145_248 = arith.constant 145 : index
    %319 = vector.load %arg7[%c0_247, %c145_248] : memref<8x512xf32, #tpu.memory_space<vmem>>, vector<8x256xf32>
    %320 = vector.broadcast %17 : vector<1x256xf32> to vector<8x256xf32>
    %321 = arith.mulf %319, %320 : vector<8x256xf32>
    %322 = tpu.concatenate %303, %304, %307, %310, %311, %314, %317, %318, %321 in 0 : vector<8x256xf32>, vector<8x256xf32>, vector<8x256xf32>, vector<8x256xf32>, vector<8x256xf32>, vector<8x256xf32>, vector<8x256xf32>, vector<8x256xf32>, vector<8x256xf32> -> vector<72x256xf32>
    %cst_249 = arith.constant dense<0.000000e+00> : vector<8x256xf32>
    %323 = tpu.matmul %297, %322, %cst_249 {dimension_numbers = #tpu.dot_dimension_numbers<[1], [0], [0], [1], [0, 0, 1, 1], [], []>} : vector<8x72xf32>, vector<72x256xf32>, vector<8x256xf32> -> vector<8x256xf32>
    %324 = vector.broadcast %299 : vector<8x1xf32> to vector<8x256xf32>
    %325 = arith.addf %323, %324 : vector<8x256xf32>
    %cst_250 = arith.constant 5.000000e-01 : f32
    %326 = vector.broadcast %cst_250 : f32 to vector<8x256xf32>
    %327 = arith.mulf %326, %325 : vector<8x256xf32>
    %cst_251 = arith.constant 0.707106769 : f32
    %328 = vector.broadcast %cst_251 : f32 to vector<8x256xf32>
    %329 = arith.mulf %325, %328 : vector<8x256xf32>
    %330 = math.erf %329 : vector<8x256xf32>
    %cst_252 = arith.constant 1.000000e+00 : f32
    %331 = vector.broadcast %cst_252 : f32 to vector<8x256xf32>
    %332 = arith.addf %331, %330 : vector<8x256xf32>
    %333 = arith.mulf %327, %332 : vector<8x256xf32>
    %c4_253 = arith.constant 4 : index
    %c0_254 = arith.constant 0 : index
    %c0_255 = arith.constant 0 : index
    %334 = vector.load %arg4[%c4_253, %c0_254, %c0_255] : memref<8x8x72xf32, #tpu.memory_space<vmem>>, vector<1x8x72xf32>
    %335 = vector.shape_cast %334 : vector<1x8x72xf32> to vector<8x72xf32>
    %c4_256 = arith.constant 4 : index
    %c0_257 = arith.constant 0 : index
    %c0_258 = arith.constant 0 : index
    %336 = vector.load %arg5[%c4_256, %c0_257, %c0_258] : memref<8x8x1xf32, #tpu.memory_space<vmem>>, vector<1x8x1xf32>
    %337 = vector.shape_cast %336 : vector<1x8x1xf32> to vector<8x1xf32>
    %c0_259 = arith.constant 0 : index
    %c128_260 = arith.constant 128 : index
    %338 = vector.load %arg7[%c0_259, %c128_260] : memref<8x512xf32, #tpu.memory_space<vmem>>, vector<8x256xf32>
    tpu.vector_store %arg7[%c0_259, %c128_260], %333 {strides = array<i32>} : memref<8x512xf32, #tpu.memory_space<vmem>>, vector<8x256xf32>,
    %c0_261 = arith.constant 0 : index
    %c111_262 = arith.constant 111 : index
    %339 = vector.load %arg7[%c0_261, %c111_262] : memref<8x512xf32, #tpu.memory_space<vmem>>, vector<8x256xf32>
    %340 = vector.broadcast %13 : vector<1x256xf32> to vector<8x256xf32>
    %341 = arith.mulf %339, %340 : vector<8x256xf32>
    %c0_263 = arith.constant 0 : index
    %c112_264 = arith.constant 112 : index
    %342 = vector.load %arg7[%c0_263, %c112_264] : memref<8x512xf32, #tpu.memory_space<vmem>>, vector<8x256xf32>
    %c0_265 = arith.constant 0 : index
    %c113_266 = arith.constant 113 : index
    %343 = vector.load %arg7[%c0_265, %c113_266] : memref<8x512xf32, #tpu.memory_space<vmem>>, vector<8x256xf32>
    %344 = vector.broadcast %17 : vector<1x256xf32> to vector<8x256xf32>
    %345 = arith.mulf %343, %344 : vector<8x256xf32>
    %c0_267 = arith.constant 0 : index
    %c127_268 = arith.constant 127 : index
    %346 = vector.load %arg7[%c0_267, %c127_268] : memref<8x512xf32, #tpu.memory_space<vmem>>, vector<8x256xf32>
    %347 = vector.broadcast %13 : vector<1x256xf32> to vector<8x256xf32>
    %348 = arith.mulf %346, %347 : vector<8x256xf32>
    %c0_269 = arith.constant 0 : index
    %c128_270 = arith.constant 128 : index
    %349 = vector.load %arg7[%c0_269, %c128_270] : memref<8x512xf32, #tpu.memory_space<vmem>>, vector<8x256xf32>
    %c0_271 = arith.constant 0 : index
    %c129_272 = arith.constant 129 : index
    %350 = vector.load %arg7[%c0_271, %c129_272] : memref<8x512xf32, #tpu.memory_space<vmem>>, vector<8x256xf32>
    %351 = vector.broadcast %17 : vector<1x256xf32> to vector<8x256xf32>
    %352 = arith.mulf %350, %351 : vector<8x256xf32>
    %c0_273 = arith.constant 0 : index
    %c143_274 = arith.constant 143 : index
    %353 = vector.load %arg7[%c0_273, %c143_274] : memref<8x512xf32, #tpu.memory_space<vmem>>, vector<8x256xf32>
    %354 = vector.broadcast %13 : vector<1x256xf32> to vector<8x256xf32>
    %355 = arith.mulf %353, %354 : vector<8x256xf32>
    %c0_275 = arith.constant 0 : index
    %c144_276 = arith.constant 144 : index
    %356 = vector.load %arg7[%c0_275, %c144_276] : memref<8x512xf32, #tpu.memory_space<vmem>>, vector<8x256xf32>
    %c0_277 = arith.constant 0 : index
    %c145_278 = arith.constant 145 : index
    %357 = vector.load %arg7[%c0_277, %c145_278] : memref<8x512xf32, #tpu.memory_space<vmem>>, vector<8x256xf32>
    %358 = vector.broadcast %17 : vector<1x256xf32> to vector<8x256xf32>
    %359 = arith.mulf %357, %358 : vector<8x256xf32>
    %360 = tpu.concatenate %341, %342, %345, %348, %349, %352, %355, %356, %359 in 0 : vector<8x256xf32>, vector<8x256xf32>, vector<8x256xf32>, vector<8x256xf32>, vector<8x256xf32>, vector<8x256xf32>, vector<8x256xf32>, vector<8x256xf32>, vector<8x256xf32> -> vector<72x256xf32>
    %cst_279 = arith.constant dense<0.000000e+00> : vector<8x256xf32>
    %361 = tpu.matmul %335, %360, %cst_279 {dimension_numbers = #tpu.dot_dimension_numbers<[1], [0], [0], [1], [0, 0, 1, 1], [], []>} : vector<8x72xf32>, vector<72x256xf32>, vector<8x256xf32> -> vector<8x256xf32>
    %362 = vector.broadcast %337 : vector<8x1xf32> to vector<8x256xf32>
    %363 = arith.addf %361, %362 : vector<8x256xf32>
    %364 = arith.addf %363, %295 : vector<8x256xf32>
    %c5 = arith.constant 5 : index
    %c0_280 = arith.constant 0 : index
    %c0_281 = arith.constant 0 : index
    %365 = vector.load %arg2[%c5, %c0_280, %c0_281] : memref<8x8x72xf32, #tpu.memory_space<vmem>>, vector<1x8x72xf32>
    %366 = vector.shape_cast %365 : vector<1x8x72xf32> to vector<8x72xf32>
    %c5_282 = arith.constant 5 : index
    %c0_283 = arith.constant 0 : index
    %c0_284 = arith.constant 0 : index
    %367 = vector.load %arg3[%c5_282, %c0_283, %c0_284] : memref<8x8x1xf32, #tpu.memory_space<vmem>>, vector<1x8x1xf32>
    %368 = vector.shape_cast %367 : vector<1x8x1xf32> to vector<8x1xf32>
    %c0_285 = arith.constant 0 : index
    %c128_286 = arith.constant 128 : index
    %369 = vector.load %arg7[%c0_285, %c128_286] : memref<8x512xf32, #tpu.memory_space<vmem>>, vector<8x256xf32>
    tpu.vector_store %arg7[%c0_285, %c128_286], %364 {strides = array<i32>} : memref<8x512xf32, #tpu.memory_space<vmem>>, vector<8x256xf32>,
    %c0_287 = arith.constant 0 : index
    %c111_288 = arith.constant 111 : index
    %370 = vector.load %arg7[%c0_287, %c111_288] : memref<8x512xf32, #tpu.memory_space<vmem>>, vector<8x256xf32>
    %371 = vector.broadcast %13 : vector<1x256xf32> to vector<8x256xf32>
    %372 = arith.mulf %370, %371 : vector<8x256xf32>
    %c0_289 = arith.constant 0 : index
    %c112_290 = arith.constant 112 : index
    %373 = vector.load %arg7[%c0_289, %c112_290] : memref<8x512xf32, #tpu.memory_space<vmem>>, vector<8x256xf32>
    %c0_291 = arith.constant 0 : index
    %c113_292 = arith.constant 113 : index
    %374 = vector.load %arg7[%c0_291, %c113_292] : memref<8x512xf32, #tpu.memory_space<vmem>>, vector<8x256xf32>
    %375 = vector.broadcast %17 : vector<1x256xf32> to vector<8x256xf32>
    %376 = arith.mulf %374, %375 : vector<8x256xf32>
    %c0_293 = arith.constant 0 : index
    %c127_294 = arith.constant 127 : index
    %377 = vector.load %arg7[%c0_293, %c127_294] : memref<8x512xf32, #tpu.memory_space<vmem>>, vector<8x256xf32>
    %378 = vector.broadcast %13 : vector<1x256xf32> to vector<8x256xf32>
    %379 = arith.mulf %377, %378 : vector<8x256xf32>
    %c0_295 = arith.constant 0 : index
    %c128_296 = arith.constant 128 : index
    %380 = vector.load %arg7[%c0_295, %c128_296] : memref<8x512xf32, #tpu.memory_space<vmem>>, vector<8x256xf32>
    %c0_297 = arith.constant 0 : index
    %c129_298 = arith.constant 129 : index
    %381 = vector.load %arg7[%c0_297, %c129_298] : memref<8x512xf32, #tpu.memory_space<vmem>>, vector<8x256xf32>
    %382 = vector.broadcast %17 : vector<1x256xf32> to vector<8x256xf32>
    %383 = arith.mulf %381, %382 : vector<8x256xf32>
    %c0_299 = arith.constant 0 : index
    %c143_300 = arith.constant 143 : index
    %384 = vector.load %arg7[%c0_299, %c143_300] : memref<8x512xf32, #tpu.memory_space<vmem>>, vector<8x256xf32>
    %385 = vector.broadcast %13 : vector<1x256xf32> to vector<8x256xf32>
    %386 = arith.mulf %384, %385 : vector<8x256xf32>
    %c0_301 = arith.constant 0 : index
    %c144_302 = arith.constant 144 : index
    %387 = vector.load %arg7[%c0_301, %c144_302] : memref<8x512xf32, #tpu.memory_space<vmem>>, vector<8x256xf32>
    %c0_303 = arith.constant 0 : index
    %c145_304 = arith.constant 145 : index
    %388 = vector.load %arg7[%c0_303, %c145_304] : memref<8x512xf32, #tpu.memory_space<vmem>>, vector<8x256xf32>
    %389 = vector.broadcast %17 : vector<1x256xf32> to vector<8x256xf32>
    %390 = arith.mulf %388, %389 : vector<8x256xf32>
    %391 = tpu.concatenate %372, %373, %376, %379, %380, %383, %386, %387, %390 in 0 : vector<8x256xf32>, vector<8x256xf32>, vector<8x256xf32>, vector<8x256xf32>, vector<8x256xf32>, vector<8x256xf32>, vector<8x256xf32>, vector<8x256xf32>, vector<8x256xf32> -> vector<72x256xf32>
    %cst_305 = arith.constant dense<0.000000e+00> : vector<8x256xf32>
    %392 = tpu.matmul %366, %391, %cst_305 {dimension_numbers = #tpu.dot_dimension_numbers<[1], [0], [0], [1], [0, 0, 1, 1], [], []>} : vector<8x72xf32>, vector<72x256xf32>, vector<8x256xf32> -> vector<8x256xf32>
    %393 = vector.broadcast %368 : vector<8x1xf32> to vector<8x256xf32>
    %394 = arith.addf %392, %393 : vector<8x256xf32>
    %cst_306 = arith.constant 5.000000e-01 : f32
    %395 = vector.broadcast %cst_306 : f32 to vector<8x256xf32>
    %396 = arith.mulf %395, %394 : vector<8x256xf32>
    %cst_307 = arith.constant 0.707106769 : f32
    %397 = vector.broadcast %cst_307 : f32 to vector<8x256xf32>
    %398 = arith.mulf %394, %397 : vector<8x256xf32>
    %399 = math.erf %398 : vector<8x256xf32>
    %cst_308 = arith.constant 1.000000e+00 : f32
    %400 = vector.broadcast %cst_308 : f32 to vector<8x256xf32>
    %401 = arith.addf %400, %399 : vector<8x256xf32>
    %402 = arith.mulf %396, %401 : vector<8x256xf32>
    %c5_309 = arith.constant 5 : index
    %c0_310 = arith.constant 0 : index
    %c0_311 = arith.constant 0 : index
    %403 = vector.load %arg4[%c5_309, %c0_310, %c0_311] : memref<8x8x72xf32, #tpu.memory_space<vmem>>, vector<1x8x72xf32>
    %404 = vector.shape_cast %403 : vector<1x8x72xf32> to vector<8x72xf32>
    %c5_312 = arith.constant 5 : index
    %c0_313 = arith.constant 0 : index
    %c0_314 = arith.constant 0 : index
    %405 = vector.load %arg5[%c5_312, %c0_313, %c0_314] : memref<8x8x1xf32, #tpu.memory_space<vmem>>, vector<1x8x1xf32>
    %406 = vector.shape_cast %405 : vector<1x8x1xf32> to vector<8x1xf32>
    %c0_315 = arith.constant 0 : index
    %c128_316 = arith.constant 128 : index
    %407 = vector.load %arg7[%c0_315, %c128_316] : memref<8x512xf32, #tpu.memory_space<vmem>>, vector<8x256xf32>
    tpu.vector_store %arg7[%c0_315, %c128_316], %402 {strides = array<i32>} : memref<8x512xf32, #tpu.memory_space<vmem>>, vector<8x256xf32>,
    %c0_317 = arith.constant 0 : index
    %c111_318 = arith.constant 111 : index
    %408 = vector.load %arg7[%c0_317, %c111_318] : memref<8x512xf32, #tpu.memory_space<vmem>>, vector<8x256xf32>
    %409 = vector.broadcast %13 : vector<1x256xf32> to vector<8x256xf32>
    %410 = arith.mulf %408, %409 : vector<8x256xf32>
    %c0_319 = arith.constant 0 : index
    %c112_320 = arith.constant 112 : index
    %411 = vector.load %arg7[%c0_319, %c112_320] : memref<8x512xf32, #tpu.memory_space<vmem>>, vector<8x256xf32>
    %c0_321 = arith.constant 0 : index
    %c113_322 = arith.constant 113 : index
    %412 = vector.load %arg7[%c0_321, %c113_322] : memref<8x512xf32, #tpu.memory_space<vmem>>, vector<8x256xf32>
    %413 = vector.broadcast %17 : vector<1x256xf32> to vector<8x256xf32>
    %414 = arith.mulf %412, %413 : vector<8x256xf32>
    %c0_323 = arith.constant 0 : index
    %c127_324 = arith.constant 127 : index
    %415 = vector.load %arg7[%c0_323, %c127_324] : memref<8x512xf32, #tpu.memory_space<vmem>>, vector<8x256xf32>
    %416 = vector.broadcast %13 : vector<1x256xf32> to vector<8x256xf32>
    %417 = arith.mulf %415, %416 : vector<8x256xf32>
    %c0_325 = arith.constant 0 : index
    %c128_326 = arith.constant 128 : index
    %418 = vector.load %arg7[%c0_325, %c128_326] : memref<8x512xf32, #tpu.memory_space<vmem>>, vector<8x256xf32>
    %c0_327 = arith.constant 0 : index
    %c129_328 = arith.constant 129 : index
    %419 = vector.load %arg7[%c0_327, %c129_328] : memref<8x512xf32, #tpu.memory_space<vmem>>, vector<8x256xf32>
    %420 = vector.broadcast %17 : vector<1x256xf32> to vector<8x256xf32>
    %421 = arith.mulf %419, %420 : vector<8x256xf32>
    %c0_329 = arith.constant 0 : index
    %c143_330 = arith.constant 143 : index
    %422 = vector.load %arg7[%c0_329, %c143_330] : memref<8x512xf32, #tpu.memory_space<vmem>>, vector<8x256xf32>
    %423 = vector.broadcast %13 : vector<1x256xf32> to vector<8x256xf32>
    %424 = arith.mulf %422, %423 : vector<8x256xf32>
    %c0_331 = arith.constant 0 : index
    %c144_332 = arith.constant 144 : index
    %425 = vector.load %arg7[%c0_331, %c144_332] : memref<8x512xf32, #tpu.memory_space<vmem>>, vector<8x256xf32>
    %c0_333 = arith.constant 0 : index
    %c145_334 = arith.constant 145 : index
    %426 = vector.load %arg7[%c0_333, %c145_334] : memref<8x512xf32, #tpu.memory_space<vmem>>, vector<8x256xf32>
    %427 = vector.broadcast %17 : vector<1x256xf32> to vector<8x256xf32>
    %428 = arith.mulf %426, %427 : vector<8x256xf32>
    %429 = tpu.concatenate %410, %411, %414, %417, %418, %421, %424, %425, %428 in 0 : vector<8x256xf32>, vector<8x256xf32>, vector<8x256xf32>, vector<8x256xf32>, vector<8x256xf32>, vector<8x256xf32>, vector<8x256xf32>, vector<8x256xf32>, vector<8x256xf32> -> vector<72x256xf32>
    %cst_335 = arith.constant dense<0.000000e+00> : vector<8x256xf32>
    %430 = tpu.matmul %404, %429, %cst_335 {dimension_numbers = #tpu.dot_dimension_numbers<[1], [0], [0], [1], [0, 0, 1, 1], [], []>} : vector<8x72xf32>, vector<72x256xf32>, vector<8x256xf32> -> vector<8x256xf32>
    %431 = vector.broadcast %406 : vector<8x1xf32> to vector<8x256xf32>
    %432 = arith.addf %430, %431 : vector<8x256xf32>
    %433 = arith.addf %432, %364 : vector<8x256xf32>
    %c6 = arith.constant 6 : index
    %c0_336 = arith.constant 0 : index
    %c0_337 = arith.constant 0 : index
    %434 = vector.load %arg2[%c6, %c0_336, %c0_337] : memref<8x8x72xf32, #tpu.memory_space<vmem>>, vector<1x8x72xf32>
    %435 = vector.shape_cast %434 : vector<1x8x72xf32> to vector<8x72xf32>
    %c6_338 = arith.constant 6 : index
    %c0_339 = arith.constant 0 : index
    %c0_340 = arith.constant 0 : index
    %436 = vector.load %arg3[%c6_338, %c0_339, %c0_340] : memref<8x8x1xf32, #tpu.memory_space<vmem>>, vector<1x8x1xf32>
    %437 = vector.shape_cast %436 : vector<1x8x1xf32> to vector<8x1xf32>
    %c0_341 = arith.constant 0 : index
    %c128_342 = arith.constant 128 : index
    %438 = vector.load %arg7[%c0_341, %c128_342] : memref<8x512xf32, #tpu.memory_space<vmem>>, vector<8x256xf32>
    tpu.vector_store %arg7[%c0_341, %c128_342], %433 {strides = array<i32>} : memref<8x512xf32, #tpu.memory_space<vmem>>, vector<8x256xf32>,
    %c0_343 = arith.constant 0 : index
    %c111_344 = arith.constant 111 : index
    %439 = vector.load %arg7[%c0_343, %c111_344] : memref<8x512xf32, #tpu.memory_space<vmem>>, vector<8x256xf32>
    %440 = vector.broadcast %13 : vector<1x256xf32> to vector<8x256xf32>
    %441 = arith.mulf %439, %440 : vector<8x256xf32>
    %c0_345 = arith.constant 0 : index
    %c112_346 = arith.constant 112 : index
    %442 = vector.load %arg7[%c0_345, %c112_346] : memref<8x512xf32, #tpu.memory_space<vmem>>, vector<8x256xf32>
    %c0_347 = arith.constant 0 : index
    %c113_348 = arith.constant 113 : index
    %443 = vector.load %arg7[%c0_347, %c113_348] : memref<8x512xf32, #tpu.memory_space<vmem>>, vector<8x256xf32>
    %444 = vector.broadcast %17 : vector<1x256xf32> to vector<8x256xf32>
    %445 = arith.mulf %443, %444 : vector<8x256xf32>
    %c0_349 = arith.constant 0 : index
    %c127_350 = arith.constant 127 : index
    %446 = vector.load %arg7[%c0_349, %c127_350] : memref<8x512xf32, #tpu.memory_space<vmem>>, vector<8x256xf32>
    %447 = vector.broadcast %13 : vector<1x256xf32> to vector<8x256xf32>
    %448 = arith.mulf %446, %447 : vector<8x256xf32>
    %c0_351 = arith.constant 0 : index
    %c128_352 = arith.constant 128 : index
    %449 = vector.load %arg7[%c0_351, %c128_352] : memref<8x512xf32, #tpu.memory_space<vmem>>, vector<8x256xf32>
    %c0_353 = arith.constant 0 : index
    %c129_354 = arith.constant 129 : index
    %450 = vector.load %arg7[%c0_353, %c129_354] : memref<8x512xf32, #tpu.memory_space<vmem>>, vector<8x256xf32>
    %451 = vector.broadcast %17 : vector<1x256xf32> to vector<8x256xf32>
    %452 = arith.mulf %450, %451 : vector<8x256xf32>
    %c0_355 = arith.constant 0 : index
    %c143_356 = arith.constant 143 : index
    %453 = vector.load %arg7[%c0_355, %c143_356] : memref<8x512xf32, #tpu.memory_space<vmem>>, vector<8x256xf32>
    %454 = vector.broadcast %13 : vector<1x256xf32> to vector<8x256xf32>
    %455 = arith.mulf %453, %454 : vector<8x256xf32>
    %c0_357 = arith.constant 0 : index
    %c144_358 = arith.constant 144 : index
    %456 = vector.load %arg7[%c0_357, %c144_358] : memref<8x512xf32, #tpu.memory_space<vmem>>, vector<8x256xf32>
    %c0_359 = arith.constant 0 : index
    %c145_360 = arith.constant 145 : index
    %457 = vector.load %arg7[%c0_359, %c145_360] : memref<8x512xf32, #tpu.memory_space<vmem>>, vector<8x256xf32>
    %458 = vector.broadcast %17 : vector<1x256xf32> to vector<8x256xf32>
    %459 = arith.mulf %457, %458 : vector<8x256xf32>
    %460 = tpu.concatenate %441, %442, %445, %448, %449, %452, %455, %456, %459 in 0 : vector<8x256xf32>, vector<8x256xf32>, vector<8x256xf32>, vector<8x256xf32>, vector<8x256xf32>, vector<8x256xf32>, vector<8x256xf32>, vector<8x256xf32>, vector<8x256xf32> -> vector<72x256xf32>
    %cst_361 = arith.constant dense<0.000000e+00> : vector<8x256xf32>
    %461 = tpu.matmul %435, %460, %cst_361 {dimension_numbers = #tpu.dot_dimension_numbers<[1], [0], [0], [1], [0, 0, 1, 1], [], []>} : vector<8x72xf32>, vector<72x256xf32>, vector<8x256xf32> -> vector<8x256xf32>
    %462 = vector.broadcast %437 : vector<8x1xf32> to vector<8x256xf32>
    %463 = arith.addf %461, %462 : vector<8x256xf32>
    %cst_362 = arith.constant 5.000000e-01 : f32
    %464 = vector.broadcast %cst_362 : f32 to vector<8x256xf32>
    %465 = arith.mulf %464, %463 : vector<8x256xf32>
    %cst_363 = arith.constant 0.707106769 : f32
    %466 = vector.broadcast %cst_363 : f32 to vector<8x256xf32>
    %467 = arith.mulf %463, %466 : vector<8x256xf32>
    %468 = math.erf %467 : vector<8x256xf32>
    %cst_364 = arith.constant 1.000000e+00 : f32
    %469 = vector.broadcast %cst_364 : f32 to vector<8x256xf32>
    %470 = arith.addf %469, %468 : vector<8x256xf32>
    %471 = arith.mulf %465, %470 : vector<8x256xf32>
    %c6_365 = arith.constant 6 : index
    %c0_366 = arith.constant 0 : index
    %c0_367 = arith.constant 0 : index
    %472 = vector.load %arg4[%c6_365, %c0_366, %c0_367] : memref<8x8x72xf32, #tpu.memory_space<vmem>>, vector<1x8x72xf32>
    %473 = vector.shape_cast %472 : vector<1x8x72xf32> to vector<8x72xf32>
    %c6_368 = arith.constant 6 : index
    %c0_369 = arith.constant 0 : index
    %c0_370 = arith.constant 0 : index
    %474 = vector.load %arg5[%c6_368, %c0_369, %c0_370] : memref<8x8x1xf32, #tpu.memory_space<vmem>>, vector<1x8x1xf32>
    %475 = vector.shape_cast %474 : vector<1x8x1xf32> to vector<8x1xf32>
    %c0_371 = arith.constant 0 : index
    %c128_372 = arith.constant 128 : index
    %476 = vector.load %arg7[%c0_371, %c128_372] : memref<8x512xf32, #tpu.memory_space<vmem>>, vector<8x256xf32>
    tpu.vector_store %arg7[%c0_371, %c128_372], %471 {strides = array<i32>} : memref<8x512xf32, #tpu.memory_space<vmem>>, vector<8x256xf32>,
    %c0_373 = arith.constant 0 : index
    %c111_374 = arith.constant 111 : index
    %477 = vector.load %arg7[%c0_373, %c111_374] : memref<8x512xf32, #tpu.memory_space<vmem>>, vector<8x256xf32>
    %478 = vector.broadcast %13 : vector<1x256xf32> to vector<8x256xf32>
    %479 = arith.mulf %477, %478 : vector<8x256xf32>
    %c0_375 = arith.constant 0 : index
    %c112_376 = arith.constant 112 : index
    %480 = vector.load %arg7[%c0_375, %c112_376] : memref<8x512xf32, #tpu.memory_space<vmem>>, vector<8x256xf32>
    %c0_377 = arith.constant 0 : index
    %c113_378 = arith.constant 113 : index
    %481 = vector.load %arg7[%c0_377, %c113_378] : memref<8x512xf32, #tpu.memory_space<vmem>>, vector<8x256xf32>
    %482 = vector.broadcast %17 : vector<1x256xf32> to vector<8x256xf32>
    %483 = arith.mulf %481, %482 : vector<8x256xf32>
    %c0_379 = arith.constant 0 : index
    %c127_380 = arith.constant 127 : index
    %484 = vector.load %arg7[%c0_379, %c127_380] : memref<8x512xf32, #tpu.memory_space<vmem>>, vector<8x256xf32>
    %485 = vector.broadcast %13 : vector<1x256xf32> to vector<8x256xf32>
    %486 = arith.mulf %484, %485 : vector<8x256xf32>
    %c0_381 = arith.constant 0 : index
    %c128_382 = arith.constant 128 : index
    %487 = vector.load %arg7[%c0_381, %c128_382] : memref<8x512xf32, #tpu.memory_space<vmem>>, vector<8x256xf32>
    %c0_383 = arith.constant 0 : index
    %c129_384 = arith.constant 129 : index
    %488 = vector.load %arg7[%c0_383, %c129_384] : memref<8x512xf32, #tpu.memory_space<vmem>>, vector<8x256xf32>
    %489 = vector.broadcast %17 : vector<1x256xf32> to vector<8x256xf32>
    %490 = arith.mulf %488, %489 : vector<8x256xf32>
    %c0_385 = arith.constant 0 : index
    %c143_386 = arith.constant 143 : index
    %491 = vector.load %arg7[%c0_385, %c143_386] : memref<8x512xf32, #tpu.memory_space<vmem>>, vector<8x256xf32>
    %492 = vector.broadcast %13 : vector<1x256xf32> to vector<8x256xf32>
    %493 = arith.mulf %491, %492 : vector<8x256xf32>
    %c0_387 = arith.constant 0 : index
    %c144_388 = arith.constant 144 : index
    %494 = vector.load %arg7[%c0_387, %c144_388] : memref<8x512xf32, #tpu.memory_space<vmem>>, vector<8x256xf32>
    %c0_389 = arith.constant 0 : index
    %c145_390 = arith.constant 145 : index
    %495 = vector.load %arg7[%c0_389, %c145_390] : memref<8x512xf32, #tpu.memory_space<vmem>>, vector<8x256xf32>
    %496 = vector.broadcast %17 : vector<1x256xf32> to vector<8x256xf32>
    %497 = arith.mulf %495, %496 : vector<8x256xf32>
    %498 = tpu.concatenate %479, %480, %483, %486, %487, %490, %493, %494, %497 in 0 : vector<8x256xf32>, vector<8x256xf32>, vector<8x256xf32>, vector<8x256xf32>, vector<8x256xf32>, vector<8x256xf32>, vector<8x256xf32>, vector<8x256xf32>, vector<8x256xf32> -> vector<72x256xf32>
    %cst_391 = arith.constant dense<0.000000e+00> : vector<8x256xf32>
    %499 = tpu.matmul %473, %498, %cst_391 {dimension_numbers = #tpu.dot_dimension_numbers<[1], [0], [0], [1], [0, 0, 1, 1], [], []>} : vector<8x72xf32>, vector<72x256xf32>, vector<8x256xf32> -> vector<8x256xf32>
    %500 = vector.broadcast %475 : vector<8x1xf32> to vector<8x256xf32>
    %501 = arith.addf %499, %500 : vector<8x256xf32>
    %502 = arith.addf %501, %433 : vector<8x256xf32>
    %c7 = arith.constant 7 : index
    %c0_392 = arith.constant 0 : index
    %c0_393 = arith.constant 0 : index
    %503 = vector.load %arg2[%c7, %c0_392, %c0_393] : memref<8x8x72xf32, #tpu.memory_space<vmem>>, vector<1x8x72xf32>
    %504 = vector.shape_cast %503 : vector<1x8x72xf32> to vector<8x72xf32>
    %c7_394 = arith.constant 7 : index
    %c0_395 = arith.constant 0 : index
    %c0_396 = arith.constant 0 : index
    %505 = vector.load %arg3[%c7_394, %c0_395, %c0_396] : memref<8x8x1xf32, #tpu.memory_space<vmem>>, vector<1x8x1xf32>
    %506 = vector.shape_cast %505 : vector<1x8x1xf32> to vector<8x1xf32>
    %c0_397 = arith.constant 0 : index
    %c128_398 = arith.constant 128 : index
    %507 = vector.load %arg7[%c0_397, %c128_398] : memref<8x512xf32, #tpu.memory_space<vmem>>, vector<8x256xf32>
    tpu.vector_store %arg7[%c0_397, %c128_398], %502 {strides = array<i32>} : memref<8x512xf32, #tpu.memory_space<vmem>>, vector<8x256xf32>,
    %c0_399 = arith.constant 0 : index
    %c111_400 = arith.constant 111 : index
    %508 = vector.load %arg7[%c0_399, %c111_400] : memref<8x512xf32, #tpu.memory_space<vmem>>, vector<8x256xf32>
    %509 = vector.broadcast %13 : vector<1x256xf32> to vector<8x256xf32>
    %510 = arith.mulf %508, %509 : vector<8x256xf32>
    %c0_401 = arith.constant 0 : index
    %c112_402 = arith.constant 112 : index
    %511 = vector.load %arg7[%c0_401, %c112_402] : memref<8x512xf32, #tpu.memory_space<vmem>>, vector<8x256xf32>
    %c0_403 = arith.constant 0 : index
    %c113_404 = arith.constant 113 : index
    %512 = vector.load %arg7[%c0_403, %c113_404] : memref<8x512xf32, #tpu.memory_space<vmem>>, vector<8x256xf32>
    %513 = vector.broadcast %17 : vector<1x256xf32> to vector<8x256xf32>
    %514 = arith.mulf %512, %513 : vector<8x256xf32>
    %c0_405 = arith.constant 0 : index
    %c127_406 = arith.constant 127 : index
    %515 = vector.load %arg7[%c0_405, %c127_406] : memref<8x512xf32, #tpu.memory_space<vmem>>, vector<8x256xf32>
    %516 = vector.broadcast %13 : vector<1x256xf32> to vector<8x256xf32>
    %517 = arith.mulf %515, %516 : vector<8x256xf32>
    %c0_407 = arith.constant 0 : index
    %c128_408 = arith.constant 128 : index
    %518 = vector.load %arg7[%c0_407, %c128_408] : memref<8x512xf32, #tpu.memory_space<vmem>>, vector<8x256xf32>
    %c0_409 = arith.constant 0 : index
    %c129_410 = arith.constant 129 : index
    %519 = vector.load %arg7[%c0_409, %c129_410] : memref<8x512xf32, #tpu.memory_space<vmem>>, vector<8x256xf32>
    %520 = vector.broadcast %17 : vector<1x256xf32> to vector<8x256xf32>
    %521 = arith.mulf %519, %520 : vector<8x256xf32>
    %c0_411 = arith.constant 0 : index
    %c143_412 = arith.constant 143 : index
    %522 = vector.load %arg7[%c0_411, %c143_412] : memref<8x512xf32, #tpu.memory_space<vmem>>, vector<8x256xf32>
    %523 = vector.broadcast %13 : vector<1x256xf32> to vector<8x256xf32>
    %524 = arith.mulf %522, %523 : vector<8x256xf32>
    %c0_413 = arith.constant 0 : index
    %c144_414 = arith.constant 144 : index
    %525 = vector.load %arg7[%c0_413, %c144_414] : memref<8x512xf32, #tpu.memory_space<vmem>>, vector<8x256xf32>
    %c0_415 = arith.constant 0 : index
    %c145_416 = arith.constant 145 : index
    %526 = vector.load %arg7[%c0_415, %c145_416] : memref<8x512xf32, #tpu.memory_space<vmem>>, vector<8x256xf32>
    %527 = vector.broadcast %17 : vector<1x256xf32> to vector<8x256xf32>
    %528 = arith.mulf %526, %527 : vector<8x256xf32>
    %529 = tpu.concatenate %510, %511, %514, %517, %518, %521, %524, %525, %528 in 0 : vector<8x256xf32>, vector<8x256xf32>, vector<8x256xf32>, vector<8x256xf32>, vector<8x256xf32>, vector<8x256xf32>, vector<8x256xf32>, vector<8x256xf32>, vector<8x256xf32> -> vector<72x256xf32>
    %cst_417 = arith.constant dense<0.000000e+00> : vector<8x256xf32>
    %530 = tpu.matmul %504, %529, %cst_417 {dimension_numbers = #tpu.dot_dimension_numbers<[1], [0], [0], [1], [0, 0, 1, 1], [], []>} : vector<8x72xf32>, vector<72x256xf32>, vector<8x256xf32> -> vector<8x256xf32>
    %531 = vector.broadcast %506 : vector<8x1xf32> to vector<8x256xf32>
    %532 = arith.addf %530, %531 : vector<8x256xf32>
    %cst_418 = arith.constant 5.000000e-01 : f32
    %533 = vector.broadcast %cst_418 : f32 to vector<8x256xf32>
    %534 = arith.mulf %533, %532 : vector<8x256xf32>
    %cst_419 = arith.constant 0.707106769 : f32
    %535 = vector.broadcast %cst_419 : f32 to vector<8x256xf32>
    %536 = arith.mulf %532, %535 : vector<8x256xf32>
    %537 = math.erf %536 : vector<8x256xf32>
    %cst_420 = arith.constant 1.000000e+00 : f32
    %538 = vector.broadcast %cst_420 : f32 to vector<8x256xf32>
    %539 = arith.addf %538, %537 : vector<8x256xf32>
    %540 = arith.mulf %534, %539 : vector<8x256xf32>
    %c7_421 = arith.constant 7 : index
    %c0_422 = arith.constant 0 : index
    %c0_423 = arith.constant 0 : index
    %541 = vector.load %arg4[%c7_421, %c0_422, %c0_423] : memref<8x8x72xf32, #tpu.memory_space<vmem>>, vector<1x8x72xf32>
    %542 = vector.shape_cast %541 : vector<1x8x72xf32> to vector<8x72xf32>
    %c7_424 = arith.constant 7 : index
    %c0_425 = arith.constant 0 : index
    %c0_426 = arith.constant 0 : index
    %543 = vector.load %arg5[%c7_424, %c0_425, %c0_426] : memref<8x8x1xf32, #tpu.memory_space<vmem>>, vector<1x8x1xf32>
    %544 = vector.shape_cast %543 : vector<1x8x1xf32> to vector<8x1xf32>
    %c0_427 = arith.constant 0 : index
    %c128_428 = arith.constant 128 : index
    %545 = vector.load %arg7[%c0_427, %c128_428] : memref<8x512xf32, #tpu.memory_space<vmem>>, vector<8x256xf32>
    tpu.vector_store %arg7[%c0_427, %c128_428], %540 {strides = array<i32>} : memref<8x512xf32, #tpu.memory_space<vmem>>, vector<8x256xf32>,
    %c0_429 = arith.constant 0 : index
    %c111_430 = arith.constant 111 : index
    %546 = vector.load %arg7[%c0_429, %c111_430] : memref<8x512xf32, #tpu.memory_space<vmem>>, vector<8x256xf32>
    %547 = vector.broadcast %13 : vector<1x256xf32> to vector<8x256xf32>
    %548 = arith.mulf %546, %547 : vector<8x256xf32>
    %c0_431 = arith.constant 0 : index
    %c112_432 = arith.constant 112 : index
    %549 = vector.load %arg7[%c0_431, %c112_432] : memref<8x512xf32, #tpu.memory_space<vmem>>, vector<8x256xf32>
    %c0_433 = arith.constant 0 : index
    %c113_434 = arith.constant 113 : index
    %550 = vector.load %arg7[%c0_433, %c113_434] : memref<8x512xf32, #tpu.memory_space<vmem>>, vector<8x256xf32>
    %551 = vector.broadcast %17 : vector<1x256xf32> to vector<8x256xf32>
    %552 = arith.mulf %550, %551 : vector<8x256xf32>
    %c0_435 = arith.constant 0 : index
    %c127_436 = arith.constant 127 : index
    %553 = vector.load %arg7[%c0_435, %c127_436] : memref<8x512xf32, #tpu.memory_space<vmem>>, vector<8x256xf32>
    %554 = vector.broadcast %13 : vector<1x256xf32> to vector<8x256xf32>
    %555 = arith.mulf %553, %554 : vector<8x256xf32>
    %c0_437 = arith.constant 0 : index
    %c128_438 = arith.constant 128 : index
    %556 = vector.load %arg7[%c0_437, %c128_438] : memref<8x512xf32, #tpu.memory_space<vmem>>, vector<8x256xf32>
    %c0_439 = arith.constant 0 : index
    %c129_440 = arith.constant 129 : index
    %557 = vector.load %arg7[%c0_439, %c129_440] : memref<8x512xf32, #tpu.memory_space<vmem>>, vector<8x256xf32>
    %558 = vector.broadcast %17 : vector<1x256xf32> to vector<8x256xf32>
    %559 = arith.mulf %557, %558 : vector<8x256xf32>
    %c0_441 = arith.constant 0 : index
    %c143_442 = arith.constant 143 : index
    %560 = vector.load %arg7[%c0_441, %c143_442] : memref<8x512xf32, #tpu.memory_space<vmem>>, vector<8x256xf32>
    %561 = vector.broadcast %13 : vector<1x256xf32> to vector<8x256xf32>
    %562 = arith.mulf %560, %561 : vector<8x256xf32>
    %c0_443 = arith.constant 0 : index
    %c144_444 = arith.constant 144 : index
    %563 = vector.load %arg7[%c0_443, %c144_444] : memref<8x512xf32, #tpu.memory_space<vmem>>, vector<8x256xf32>
    %c0_445 = arith.constant 0 : index
    %c145_446 = arith.constant 145 : index
    %564 = vector.load %arg7[%c0_445, %c145_446] : memref<8x512xf32, #tpu.memory_space<vmem>>, vector<8x256xf32>
    %565 = vector.broadcast %17 : vector<1x256xf32> to vector<8x256xf32>
    %566 = arith.mulf %564, %565 : vector<8x256xf32>
    %567 = tpu.concatenate %548, %549, %552, %555, %556, %559, %562, %563, %566 in 0 : vector<8x256xf32>, vector<8x256xf32>, vector<8x256xf32>, vector<8x256xf32>, vector<8x256xf32>, vector<8x256xf32>, vector<8x256xf32>, vector<8x256xf32>, vector<8x256xf32> -> vector<72x256xf32>
    %cst_447 = arith.constant dense<0.000000e+00> : vector<8x256xf32>
    %568 = tpu.matmul %542, %567, %cst_447 {dimension_numbers = #tpu.dot_dimension_numbers<[1], [0], [0], [1], [0, 0, 1, 1], [], []>} : vector<8x72xf32>, vector<72x256xf32>, vector<8x256xf32> -> vector<8x256xf32>
    %569 = vector.broadcast %544 : vector<8x1xf32> to vector<8x256xf32>
    %570 = arith.addf %568, %569 : vector<8x256xf32>
    %571 = arith.addf %570, %502 : vector<8x256xf32>
    %c0_448 = arith.constant 0 : index
    %c0_449 = arith.constant 0 : index
    %c0_450 = arith.constant 0 : index
    %572 = vector.load %arg6[%c0_448, %c0_449, %c0_450] : memref<1x8x256xf32, #tpu.memory_space<vmem>>, vector<1x8x256xf32>
    %573 = vector.shape_cast %572 : vector<1x8x256xf32> to vector<8x256xf32>
    %574 = vector.shape_cast %571 : vector<8x256xf32> to vector<1x8x256xf32>
    tpu.vector_store %arg6[%c0_448, %c0_449, %c0_450], %574 {strides = array<i32>} : memref<1x8x256xf32, #tpu.memory_space<vmem>>, vector<1x8x256xf32>,
    return
  }
  func.func @transform_0(%arg0: i32) -> (i32, i32, i32) {
    %c0_i32 = arith.constant 0 : i32
    %c0_i32_0 = arith.constant 0 : i32
    %c0_i32_1 = arith.constant 0 : i32
    return %arg0, %c0_i32, %c0_i32_0 : i32, i32, i32
  }
  func.func @transform_1(%arg0: i32) -> (i32, i32, i32) {
    %c0_i32 = arith.constant 0 : i32
    %c0_i32_0 = arith.constant 0 : i32
    %c0_i32_1 = arith.constant 0 : i32
    %c0_i32_2 = arith.constant 0 : i32
    return %c0_i32, %c0_i32_0, %c0_i32_1 : i32, i32, i32
  }
  func.func @transform_2(%arg0: i32) -> (i32, i32, i32) {
    %c0_i32 = arith.constant 0 : i32
    %c0_i32_0 = arith.constant 0 : i32
    %c0_i32_1 = arith.constant 0 : i32
    %c0_i32_2 = arith.constant 0 : i32
    return %c0_i32, %c0_i32_0, %c0_i32_1 : i32, i32, i32
  }
  func.func @transform_3(%arg0: i32) -> (i32, i32, i32) {
    %c0_i32 = arith.constant 0 : i32
    %c0_i32_0 = arith.constant 0 : i32
    %c0_i32_1 = arith.constant 0 : i32
    %c0_i32_2 = arith.constant 0 : i32
    return %c0_i32, %c0_i32_0, %c0_i32_1 : i32, i32, i32
  }
  func.func @transform_4(%arg0: i32) -> (i32, i32, i32) {
    %c0_i32 = arith.constant 0 : i32
    %c0_i32_0 = arith.constant 0 : i32
    %c0_i32_1 = arith.constant 0 : i32
    %c0_i32_2 = arith.constant 0 : i32
    return %c0_i32, %c0_i32_0, %c0_i32_1 : i32, i32, i32
  }
  func.func @transform_5(%arg0: i32) -> (i32, i32, i32) {
    %c0_i32 = arith.constant 0 : i32
    %c0_i32_0 = arith.constant 0 : i32
    %c0_i32_1 = arith.constant 0 : i32
    return %arg0, %c0_i32, %c0_i32_0 : i32, i32, i32
  }
}

</mosaic_0001>

<llo_original>
// kernel: dblock_forward.1
$region0: #{dblock_forward.1}
  #allocation0 [shape = 'u32[]', space=smem, size = 0x4, offset = 0x4, fixed_abs, tag = 'smem constant byte address 0x4 - core index']
  #allocation1 [shape = 'u32[144,128]{1,0:T(1,128)}', space=vmem, size = 0x12000, scoped, tag = 'internal scratch']
  #allocation2 [shape = 'f32[8,512]{1,0:T(8,128)}', space=vmem, size = 0x4000, scoped, tag = 'scratch operand']
  %s0 = inlined_call_operand.vmem [shape: f32[2,8,256], index: 0, kind: input, shape index: {}]
  %s1 = inlined_call_operand.vmem [shape: f32[8,8,72], index: 1, kind: input, shape index: {}]
  %s2 = inlined_call_operand.vmem [shape: f32[8,8,1], index: 2, kind: input, shape index: {}]
  %s3 = inlined_call_operand.vmem [shape: f32[8,8,72], index: 3, kind: input, shape index: {}]
  %s4 = inlined_call_operand.vmem [shape: f32[8,8,1], index: 4, kind: input, shape index: {}]
  %s5 = inlined_call_operand.vmem [shape: f32[2,8,256], index: 5, kind: output, shape index: {}]
  %s6 = sld [smem:[#allocation0]]
  $region53: #{dblock_forward.1} parent=0
    _
  %s8 = ssub.s32 1, %s6
  %s9 = scalar_select 0, %s8, %s6
  loop: start=0, step=1, limit=4
  $region2: #{dblock_forward.1} parent=0 // loop_pre_header
    _
  $region3: #{dblock_forward.1} parent=0 // loop_header
    %s11 = sphi 0, %s15
    %p12 = scmp.ge.s32.totalorder %s11, 4
    %s21 = sphi 0, %s23
    %s24 = sphi 0, %s21
    %s25 = sphi 0, %s24
    %s41 = sphi 0, %s25
    %s45 = sphi 0, %s45
    %s47 = sphi 0, %s45
    %s48 = sphi 0, %s47
    %s62 = sphi 0, %s48
    %s66 = sphi 0, %s66
    %s68 = sphi 0, %s66
    %s69 = sphi 0, %s68
    %s83 = sphi 0, %s69
    %s87 = sphi 0, %s87
    %s89 = sphi 0, %s87
    %s90 = sphi 0, %s89
    %s104 = sphi 0, %s90
    %s108 = sphi 0, %s108
    %s110 = sphi 0, %s108
    %s111 = sphi 0, %s110
    %s125 = sphi 0, %s111
    %s131 = sphi 0, %s133
    %s134 = sphi 0, %s131
    %s135 = sphi 0, %s134
    %s151 = sphi 0, %s135
  $region4: #{dblock_forward.1} parent=0 // loop_header_branch
    %14 = sbr.rel (%p12) target = $region8
  $region5: #{dblock_forward.1} parent=0 // loop_body
    %s16 = ssub.s32 %s11, 1
    %s17 = ssub.s32 %s11, 2
    %s18 = sadd.s32 %s11, 1
    %s19 = ssub.s32 %s11, %s18
    %p20 = scmp.eq.s32.totalorder %s19, 0
    %s22 = sadd.s32 %s21, 1
    %s23 = scalar_select %p20, %s21, %s22
    %p26 = pneg %p20
    %p27 = scmp.eq.s32.totalorder %s11, 1
    %p28 = por %p26, %p27
    %p29 = scmp.ne.s32.totalorder %s21, %s24
    %p30 = scmp.eq.s32.totalorder %s11, 0
    %p31 = por %p29, %p30
    %p32 = scmp.ne.s32.totalorder %s21, %s24
    %p33 = scmp.eq.s32.totalorder %s16, 1
    %p34 = por %p32, %p33
    %p35 = scmp.ne.s32.totalorder %s24, %s25
    %p36 = scmp.eq.s32.totalorder %s16, 0
    %p37 = por %p35, %p36
    %p38 = scmp.ne.s32.totalorder %s24, %s25
    %p39 = scmp.eq.s32.totalorder %s17, 1
    %p40 = por %p38, %p39
    %p42 = scmp.ne.s32.totalorder %s25, %s41
    %p43 = scmp.eq.s32.totalorder %s17, 0
    %p44 = por %p42, %p43
    %s46 = sadd.s32 %s45, 1
    %p49 = scmp.eq.s32.totalorder %s11, 1
    %p50 = scmp.ne.s32.totalorder %s45, %s47
    %p51 = scmp.eq.s32.totalorder %s11, 0
    %p52 = por %p50, %p51
    %p53 = scmp.ne.s32.totalorder %s45, %s47
    %p54 = scmp.eq.s32.totalorder %s16, 1
    %p55 = por %p53, %p54
    %p56 = scmp.ne.s32.totalorder %s47, %s48
    %p57 = scmp.eq.s32.totalorder %s16, 0
    %p58 = por %p56, %p57
    %p59 = scmp.ne.s32.totalorder %s47, %s48
    %p60 = scmp.eq.s32.totalorder %s17, 1
    %p61 = por %p59, %p60
    %p63 = scmp.ne.s32.totalorder %s48, %s62
    %p64 = scmp.eq.s32.totalorder %s17, 0
    %p65 = por %p63, %p64
    %s67 = sadd.s32 %s66, 1
    %p70 = scmp.eq.s32.totalorder %s11, 1
    %p71 = scmp.ne.s32.totalorder %s66, %s68
    %p72 = scmp.eq.s32.totalorder %s11, 0
    %p73 = por %p71, %p72
    %p74 = scmp.ne.s32.totalorder %s66, %s68
    %p75 = scmp.eq.s32.totalorder %s16, 1
    %p76 = por %p74, %p75
    %p77 = scmp.ne.s32.totalorder %s68, %s69
    %p78 = scmp.eq.s32.totalorder %s16, 0
    %p79 = por %p77, %p78
    %p80 = scmp.ne.s32.totalorder %s68, %s69
    %p81 = scmp.eq.s32.totalorder %s17, 1
    %p82 = por %p80, %p81
    %p84 = scmp.ne.s32.totalorder %s69, %s83
    %p85 = scmp.eq.s32.totalorder %s17, 0
    %p86 = por %p84, %p85
    %s88 = sadd.s32 %s87, 1
    %p91 = scmp.eq.s32.totalorder %s11, 1
    %p92 = scmp.ne.s32.totalorder %s87, %s89
    %p93 = scmp.eq.s32.totalorder %s11, 0
    %p94 = por %p92, %p93
    %p95 = scmp.ne.s32.totalorder %s87, %s89
    %p96 = scmp.eq.s32.totalorder %s16, 1
    %p97 = por %p95, %p96
    %p98 = scmp.ne.s32.totalorder %s89, %s90
    %p99 = scmp.eq.s32.totalorder %s16, 0
    %p100 = por %p98, %p99
    %p101 = scmp.ne.s32.totalorder %s89, %s90
    %p102 = scmp.eq.s32.totalorder %s17, 1
    %p103 = por %p101, %p102
    %p105 = scmp.ne.s32.totalorder %s90, %s104
    %p106 = scmp.eq.s32.totalorder %s17, 0
    %p107 = por %p105, %p106
    %s109 = sadd.s32 %s108, 1
    %p112 = scmp.eq.s32.totalorder %s11, 1
    %p113 = scmp.ne.s32.totalorder %s108, %s110
    %p114 = scmp.eq.s32.totalorder %s11, 0
    %p115 = por %p113, %p114
    %p116 = scmp.ne.s32.totalorder %s108, %s110
    %p117 = scmp.eq.s32.totalorder %s16, 1
    %p118 = por %p116, %p117
    %p119 = scmp.ne.s32.totalorder %s110, %s111
    %p120 = scmp.eq.s32.totalorder %s16, 0
    %p121 = por %p119, %p120
    %p122 = scmp.ne.s32.totalorder %s110, %s111
    %p123 = scmp.eq.s32.totalorder %s17, 1
    %p124 = por %p122, %p123
    %p126 = scmp.ne.s32.totalorder %s111, %s125
    %p127 = scmp.eq.s32.totalorder %s17, 0
    %p128 = por %p126, %p127
    %s129 = ssub.s32 %s11, %s18
    %p130 = scmp.eq.s32.totalorder %s129, 0
    %s132 = sadd.s32 %s131, 1
    %s133 = scalar_select %p130, %s131, %s132
    %p136 = pneg %p130
    %p137 = scmp.eq.s32.totalorder %s11, 1
    %p138 = por %p136, %p137
    %p139 = scmp.ne.s32.totalorder %s131, %s134
    %p140 = scmp.eq.s32.totalorder %s11, 0
    %p141 = por %p139, %p140
    %p142 = scmp.ne.s32.totalorder %s131, %s134
    %p143 = scmp.eq.s32.totalorder %s16, 1
    %p144 = por %p142, %p143
    %p145 = scmp.ne.s32.totalorder %s134, %s135
    %p146 = scmp.eq.s32.totalorder %s16, 0
    %p147 = por %p145, %p146
    %p148 = scmp.ne.s32.totalorder %s134, %s135
    %p149 = scmp.eq.s32.totalorder %s17, 1
    %p150 = por %p148, %p149
    %p152 = scmp.ne.s32.totalorder %s135, %s151
    %p153 = scmp.eq.s32.totalorder %s17, 0
    %p154 = por %p152, %p153
    %p155 = scmp.le.s32.totalorder 1, %s11
    %p156 = scmp.lt.s32.totalorder %s11, 3
    %p157 = pnand %p155, %p156
    %p158 = pneg %p157
    // Predicated region
    $region9: #{dblock_forward.1} parent=5 // pred_check
      _
    $region10: #{dblock_forward.1} parent=5 // pred_check_branch
      %160 = sbr.rel (%p157) target = $region12
    $region11: #{dblock_forward.1} parent=5 // pred_region
      %s161 = ssub.s32 %s11, 1
      // Predicated region
      $region13: #{dblock_forward.1} parent=11 // pred_check
        %p162 = pneg %p58
      $region14: #{dblock_forward.1} parent=11 // pred_check_branch
        %164 = sbr.rel (%p162) target = $region16
      $region15: #{dblock_forward.1} parent=11 // pred_region
        _
      $region16: #{dblock_forward.1} parent=11 // pred_fallthru
        _
      // Predicated region
      $region17: #{dblock_forward.1} parent=11 // pred_check
        %p165 = pneg %p79
      $region18: #{dblock_forward.1} parent=11 // pred_check_branch
        %167 = sbr.rel (%p165) target = $region20
      $region19: #{dblock_forward.1} parent=11 // pred_region
        _
      $region20: #{dblock_forward.1} parent=11 // pred_fallthru
        _
      // Predicated region
      $region21: #{dblock_forward.1} parent=11 // pred_check
        %p168 = pneg %p100
      $region22: #{dblock_forward.1} parent=11 // pred_check_branch
        %170 = sbr.rel (%p168) target = $region24
      $region23: #{dblock_forward.1} parent=11 // pred_region
        _
      $region24: #{dblock_forward.1} parent=11 // pred_fallthru
        _
      // Predicated region
      $region25: #{dblock_forward.1} parent=11 // pred_check
        %p171 = pneg %p121
      $region26: #{dblock_forward.1} parent=11 // pred_check_branch
        %173 = sbr.rel (%p171) target = $region28
      $region27: #{dblock_forward.1} parent=11 // pred_region
        _
      $region28: #{dblock_forward.1} parent=11 // pred_fallthru
        _
    $region12: #{dblock_forward.1} parent=5 // pred_fallthru
      _
    %p174 = scmp.lt.s32.totalorder %s11, 2
    // Predicated region
    $region29: #{dblock_forward.1} parent=5 // pred_check
      %p175 = pneg %p174
    $region30: #{dblock_forward.1} parent=5 // pred_check_branch
      %177 = sbr.rel (%p175) target = $region32
    $region31: #{dblock_forward.1} parent=5 // pred_region
      // Predicated region
      $region33: #{dblock_forward.1} parent=31 // pred_check
        %p178 = pneg %p31
      $region34: #{dblock_forward.1} parent=31 // pred_check_branch
        %180 = sbr.rel (%p178) target = $region36
      $region35: #{dblock_forward.1} parent=31 // pred_region
        %p181 = scmp.lt.s32.totalorder %s11, 1
        %s182 = scalar_select %p181, %s11, 1
        %s183 = smul.addr %s182, 2
        %s184 = smul.addr %s183, 8
        %s185 = scalar_lea.vmem %s0, %s184
      $region36: #{dblock_forward.1} parent=31 // pred_fallthru
        _
    $region32: #{dblock_forward.1} parent=5 // pred_fallthru
      _
    %p186 = scmp.le.s32.totalorder 1, %s11
    %p187 = scmp.lt.s32.totalorder %s11, 3
    %p188 = pnand %p186, %p187
    %p189 = pneg %p188
    // Predicated region
    $region37: #{dblock_forward.1} parent=5 // pred_check
      _
    $region38: #{dblock_forward.1} parent=5 // pred_check_branch
      %191 = sbr.rel (%p188) target = $region40
    $region39: #{dblock_forward.1} parent=5 // pred_region
      %s192 = ssub.s32 %s11, 1
      %p193 = scmp.lt.s32.totalorder %s16, 1
      %s194 = scalar_select %p193, %s16, 1
      %s195 = smul.addr %s194, 2
      %s196 = smul.addr %s195, 8
      %s197 = scalar_lea.vmem %s0, %s196
      %p198 = pneg %p37
      %p199 = pneg %p34
      %p200 = pneg %p58
      %p201 = pneg %p55
      %p202 = pneg %p79
      %p203 = pneg %p76
      %p204 = pneg %p100
      %p205 = pneg %p97
      %p206 = pneg %p121
      %p207 = pneg %p118
      %p208 = pneg %p147
      %p209 = pneg %p144
      %p210 = scmp.lt.s32.totalorder %s16, 1
      %s211 = scalar_select %p210, %s16, 1
      %s212 = smul.addr %s211, 2
      %s213 = smul.addr %s212, 8
      %s214 = scalar_lea.vmem %s5, %s213
      %p215 = scmp.lt.s32.totalorder %s16, 1
      %s216 = scalar_select %p215, %s16, 1
      %s217 = smul.addr %s216, 2
      %s218 = smul.addr %s217, 8
      %s219 = scalar_lea.vmem %s0, %s218
      %p220 = scmp.lt.s32.totalorder %s16, 1
      %s221 = scalar_select %p220, %s16, 1
      %s222 = smul.addr %s221, 2
      %s223 = smul.addr %s222, 8
      %s224 = scalar_lea.vmem %s5, %s223
      %225 = vst [vmem:[#allocation2] sm:$0xff] 0.0
      %226 = vst [vmem:[#allocation2 + $0x8] sm:$0xff] 0.0
      %227 = vst [vmem:[#allocation2 + $0x10] sm:$0xff] 0.0
      %228 = vst [vmem:[#allocation2 + $0x18] sm:$0xff] 0.0
      %v229 = vlaneseq
      %v230 = vand.u32 %v229, 127
      %v231 = vadd.s32 %v230, 128
      %v232 = vcvt.s32.f32 %v230
      %v233 = vcvt.s32.f32 %v231
      %v234 = vrcp.pop 16.0
      %v235 = vmul.f32 %v232, %v234
      %v236 = vmul.f32 %v233, %v234
      %v237 = vfloor.f32 %v235
      %v238 = vfloor.f32 %v236
      %v239 = vmul.f32 %v237, 16.0
      %v240 = vmul.f32 %v238, 16.0
      %v241 = vsub.f32 %v232, %v239
      %v242 = vsub.f32 %v233, %v240
      %vm243 = vcmp.gt.f32.partialorder %v241, 0.5
      %vm244 = vcmp.gt.f32.partialorder %v242, 0.5
      %v245 = vsel %vm243, 1, 0
      %v246 = vsel %vm244, 1, 0
      %v247 = vcvt.s32.f32 %v245
      %v248 = vcvt.s32.f32 %v246
      %vm249 = vcmp.lt.f32.partialorder %v241, 14.5
      %vm250 = vcmp.lt.f32.partialorder %v242, 14.5
      %v251 = vsel %vm249, 1, 0
      %v252 = vsel %vm250, 1, 0
      %v253 = vcvt.s32.f32 %v251
      %v254 = vcvt.s32.f32 %v252
      %v255 = vld [vmem:[%s219] sm:$0xff]
      %v256 = vld [vmem:[%s219 + $0x8] sm:$0xff]
      %v257 = vld [vmem:[%s1] sm:$0xff]
      %v258 = vld [vmem:[%s2] sm:$0xff]
      %259 = vst [vmem:[#allocation2 + $0x8] sm:$0xff] %v255
      %260 = vst [vmem:[#allocation2 + $0x10] sm:$0xff] %v256
      %v261 = vld [vmem:[#allocation2] sm:$0xff]
      %v262 = vld [vmem:[#allocation2 + $0x8] sm:$0xff]
      %v263 = vld [vmem:[#allocation2 + $0x10] sm:$0xff]
      %266 = vrot.lane.b32.xlu0 %v247, 111
      %v267 = vpop.permute.xlu0 %266
      %268 = vrot.lane.b32.xlu0 %v248, 111
      %v269 = vpop.permute.xlu0 %268
      %vm270 = vcmask 908288
      %v271 = vsel %vm270, %v267, %v269
      %v275 = vmul.f32 %v261, %v267
      %v276 = vmul.f32 %v262, %v271
      %v277 = vmul.f32 %v263, %v269
      %280 = vrot.lane.b32.xlu0 %v253, 113
      %v281 = vpop.permute.xlu0 %280
      %282 = vrot.lane.b32.xlu0 %v254, 113
      %v283 = vpop.permute.xlu0 %282
      %vm284 = vcmask 924672
      %v285 = vsel %vm284, %v281, %v283
      %v289 = vmul.f32 %v261, %v281
      %v290 = vmul.f32 %v262, %v285
      %v291 = vmul.f32 %v263, %v283
      %292 = vrot.lane.b32.xlu0 %v247, 127
      %v293 = vpop.permute.xlu0 %292
      %294 = vrot.lane.b32.xlu0 %v248, 127
      %v295 = vpop.permute.xlu0 %294
      %vm296 = vcmask 1039360
      %v297 = vsel %vm296, %v293, %v295
      %v301 = vmul.f32 %v261, %v293
      %v302 = vmul.f32 %v262, %v297
      %v303 = vmul.f32 %v263, %v295
      %v304 = vld [vmem:[#allocation2 + $0x8] sm:$0xff]
      %v305 = vld [vmem:[#allocation2 + $0x10] sm:$0xff]
      %v306 = vld [vmem:[#allocation2 + $0x18] sm:$0xff]
      %307 = vrot.lane.b32.xlu0 %v253, 1
      %v308 = vpop.permute.xlu0 %307
      %309 = vrot.lane.b32.xlu0 %v254, 1
      %v310 = vpop.permute.xlu0 %309
      %vm311 = vcmask 7168
      %v312 = vsel %vm311, %v308, %v310
      %v316 = vmul.f32 %v304, %v308
      %v317 = vmul.f32 %v305, %v312
      %v318 = vmul.f32 %v306, %v310
      %319 = vrot.lane.b32.xlu0 %v247, 15
      %v320 = vpop.permute.xlu0 %319
      %321 = vrot.lane.b32.xlu0 %v248, 15
      %v322 = vpop.permute.xlu0 %321
      %vm323 = vcmask 121856
      %v324 = vsel %vm323, %v320, %v322
      %v328 = vmul.f32 %v304, %v320
      %v329 = vmul.f32 %v305, %v324
      %v330 = vmul.f32 %v306, %v322
      %331 = vrot.lane.b32.xlu0 %v253, 17
      %v332 = vpop.permute.xlu0 %331
      %333 = vrot.lane.b32.xlu0 %v254, 17
      %v334 = vpop.permute.xlu0 %333
      %vm335 = vcmask 138240
      %v336 = vsel %vm335, %v332, %v334
      %v340 = vmul.f32 %v304, %v332
      %v341 = vmul.f32 %v305, %v336
      %v342 = vmul.f32 %v306, %v334
      %346 = vrot.lane.b32.xlu0 %v261, 127
      %v347 = vpop.permute.xlu0 %346
      %348 = vrot.lane.b32.xlu0 %v262, 127
      %v349 = vpop.permute.xlu0 %348
      %350 = vrot.lane.b32.xlu0 %v263, 127
      %v351 = vpop.permute.xlu0 %350
      %v352 = vsel %vm296, %v347, %v349
      %v353 = vsel %vm296, %v349, %v351
      %357 = vrot.lane.b32.xlu0 %v289, 126
      %v358 = vpop.permute.xlu0 %357
      %359 = vrot.lane.b32.xlu0 %v290, 126
      %v360 = vpop.permute.xlu0 %359
      %361 = vrot.lane.b32.xlu0 %v291, 126
      %v362 = vpop.permute.xlu0 %361
      %vm363 = vcmask 1031168
      %v364 = vsel %vm363, %v358, %v360
      %v365 = vsel %vm363, %v360, %v362
      %369 = vrot.lane.b32.xlu0 %v301, 112
      %v370 = vpop.permute.xlu0 %369
      %371 = vrot.lane.b32.xlu0 %v302, 112
      %v372 = vpop.permute.xlu0 %371
      %373 = vrot.lane.b32.xlu0 %v303, 112
      %v374 = vpop.permute.xlu0 %373
      %vm375 = vcmask 916480
      %v376 = vsel %vm375, %v370, %v372
      %v377 = vsel %vm375, %v372, %v374
      %378 = vrot.lane.b32.xlu0 %v262, 111
      %v379 = vpop.permute.xlu0 %378
      %380 = vrot.lane.b32.xlu0 %v263, 111
      %v381 = vpop.permute.xlu0 %380
      %v382 = vsel %vm270, %v379, %v381
      %386 = vrot.lane.b32.xlu0 %v316, 110
      %v387 = vpop.permute.xlu0 %386
      %388 = vrot.lane.b32.xlu0 %v317, 110
      %v389 = vpop.permute.xlu0 %388
      %390 = vrot.lane.b32.xlu0 %v318, 110
      %v391 = vpop.permute.xlu0 %390
      %vm392 = vcmask 900096
      %v393 = vsel %vm392, %v387, %v389
      %v394 = vsel %vm392, %v389, %v391
      %398 = vrot.lane.b32.xlu0 %v328, 96
      %v399 = vpop.permute.xlu0 %398
      %400 = vrot.lane.b32.xlu0 %v329, 96
      %v401 = vpop.permute.xlu0 %400
      %402 = vrot.lane.b32.xlu0 %v330, 96
      %v403 = vpop.permute.xlu0 %402
      %vm404 = vcmask 785408
      %v405 = vsel %vm404, %v399, %v401
      %v406 = vsel %vm404, %v401, %v403
      %410 = vrot.lane.b32.xlu0 %v304, 95
      %v411 = vpop.permute.xlu0 %410
      %412 = vrot.lane.b32.xlu0 %v305, 95
      %v413 = vpop.permute.xlu0 %412
      %414 = vrot.lane.b32.xlu0 %v306, 95
      %v415 = vpop.permute.xlu0 %414
      %vm416 = vcmask 777216
      %v417 = vsel %vm416, %v411, %v413
      %v418 = vsel %vm416, %v413, %v415
      %422 = vrot.lane.b32.xlu0 %v340, 94
      %v423 = vpop.permute.xlu0 %422
      %424 = vrot.lane.b32.xlu0 %v341, 94
      %v425 = vpop.permute.xlu0 %424
      %426 = vrot.lane.b32.xlu0 %v342, 94
      %v427 = vpop.permute.xlu0 %426
      %vm428 = vcmask 769024
      %v429 = vsel %vm428, %v423, %v425
      %v430 = vsel %vm428, %v425, %v427
      %432 = vset.pattern.permute.xlu0 0
      %433 = vperm.xlu0 %432, %v258
      %v434 = vpop.permute.xlu0 %433
      %439 = vrot.lane.b32.xlu0 %v275, 17
      %v440 = vpop.permute.xlu0 %439
      %441 = vrot.lane.b32.xlu0 %v276, 17
      %v442 = vpop.permute.xlu0 %441
      %443 = vrot.lane.b32.xlu0 %v277, 17
      %v444 = vpop.permute.xlu0 %443
      %445 = vrot.lane.b32.xlu0 %v352, 17
      %v446 = vpop.permute.xlu0 %445
      %447 = vrot.lane.b32.xlu0 %v353, 17
      %v448 = vpop.permute.xlu0 %447
      %449 = vrot.lane.b32.xlu0 %v351, 17
      %v450 = vpop.permute.xlu0 %449
      %451 = vrot.lane.b32.xlu0 %v364, 17
      %v452 = vpop.permute.xlu0 %451
      %453 = vrot.lane.b32.xlu0 %v365, 17
      %v454 = vpop.permute.xlu0 %453
      %455 = vrot.lane.b32.xlu0 %v362, 17
      %v456 = vpop.permute.xlu0 %455
      %457 = vrot.lane.b32.xlu0 %v376, 17
      %v458 = vpop.permute.xlu0 %457
      %459 = vrot.lane.b32.xlu0 %v377, 17
      %v460 = vpop.permute.xlu0 %459
      %461 = vrot.lane.b32.xlu0 %v374, 17
      %v462 = vpop.permute.xlu0 %461
      %463 = vrot.lane.b32.xlu0 %v379, 17
      %v464 = vpop.permute.xlu0 %463
      %465 = vrot.lane.b32.xlu0 %v382, 17
      %v466 = vpop.permute.xlu0 %465
      %467 = vrot.lane.b32.xlu0 %v381, 17
      %v468 = vpop.permute.xlu0 %467
      %469 = vrot.lane.b32.xlu0 %v387, 17
      %v470 = vpop.permute.xlu0 %469
      %471 = vrot.lane.b32.xlu0 %v393, 17
      %v472 = vpop.permute.xlu0 %471
      %473 = vrot.lane.b32.xlu0 %v394, 17
      %v474 = vpop.permute.xlu0 %473
      %475 = vrot.lane.b32.xlu0 %v399, 17
      %v476 = vpop.permute.xlu0 %475
      %477 = vrot.lane.b32.xlu0 %v405, 17
      %v478 = vpop.permute.xlu0 %477
      %479 = vrot.lane.b32.xlu0 %v406, 17
      %v480 = vpop.permute.xlu0 %479
      %481 = vrot.lane.b32.xlu0 %v411, 17
      %v482 = vpop.permute.xlu0 %481
      %483 = vrot.lane.b32.xlu0 %v417, 17
      %v484 = vpop.permute.xlu0 %483
      %485 = vrot.lane.b32.xlu0 %v418, 17
      %v486 = vpop.permute.xlu0 %485
      %487 = vrot.lane.b32.xlu0 %v423, 17
      %v488 = vpop.permute.xlu0 %487
      %489 = vrot.lane.b32.xlu0 %v429, 17
      %v490 = vpop.permute.xlu0 %489
      %491 = vrot.lane.b32.xlu0 %v430, 17
      %v492 = vpop.permute.xlu0 %491
      %v493 = vsel %vm335, %v440, %v442
      %v494 = vsel %vm335, %v442, %v444
      %v495 = vsel %vm335, %v446, %v448
      %v496 = vsel %vm335, %v448, %v450
      %v497 = vsel %vm335, %v452, %v454
      %v498 = vsel %vm335, %v454, %v456
      %v499 = vsel %vm335, %v458, %v460
      %v500 = vsel %vm335, %v460, %v462
      %v501 = vsel %vm335, %v464, %v466
      %v502 = vsel %vm335, %v466, %v468
      %v503 = vsel %vm335, %v470, %v472
      %v504 = vsel %vm335, %v472, %v474
      %v505 = vsel %vm335, %v476, %v478
      %v506 = vsel %vm335, %v478, %v480
      %v507 = vsel %vm335, %v482, %v484
      %v508 = vsel %vm335, %v484, %v486
      %v509 = vsel %vm335, %v488, %v490
      %v510 = vsel %vm335, %v490, %v492
      %vm529 = vcmask 588800
      %v531 = vsel %vm529, %v257, 0
      %533 = vmatprep.subr.mxu0 0.0
      %534 = vmatpush1.msra.mxu0 0.0
      %535 = vmatprep.subr.mxu0 0.0
      %536 = vmatpush1.msra.mxu0 0.0
      %537 = vmatprep.subr.mxu0 0.0
      %538 = vmatpush1.msra.mxu0 0.0
      %539 = vmatprep.subr.mxu0 0.0
      %540 = vmatpush1.msra.mxu0 0.0
      %541 = vmatprep.subr.mxu0 0.0
      %542 = vmatpush1.msra.mxu0 0.0
      %543 = vmatprep.subr.mxu0 0.0
      %544 = vmatpush1.msra.mxu0 0.0
      %545 = vmatprep.subr.mxu0 0.0
      %546 = vmatpush1.msra.mxu0 0.0
      %547 = vmatprep.subr.mxu0 %v510
      %548 = vmatpush1.msra.mxu0 %v509
      %549 = vmatprep.subr.mxu0 %v508
      %550 = vmatpush1.msra.mxu0 %v507
      %551 = vmatprep.subr.mxu0 %v506
      %552 = vmatpush1.msra.mxu0 %v505
      %553 = vmatprep.subr.mxu0 %v504
      %554 = vmatpush1.msra.mxu0 %v503
      %555 = vmatprep.subr.mxu0 %v502
      %556 = vmatpush1.msra.mxu0 %v501
      %557 = vmatprep.subr.mxu0 %v500
      %558 = vmatpush1.msra.mxu0 %v499
      %559 = vmatprep.subr.mxu0 %v498
      %560 = vmatpush1.msra.mxu0 %v497
      %561 = vmatprep.subr.mxu0 %v496
      %562 = vmatpush1.msra.mxu0 %v495
      %563 = vmatprep.subr.mxu0 %v494
      %564 = vmatpush1.msra.mxu0 %v493
      %565 = vmatprep.subr.mxu0 0.0
      %566 = vmatpush2.msra.mxu0 0.0
      %567 = vmatprep.subr.mxu0 0.0
      %568 = vmatpush2.msra.mxu0 0.0
      %569 = vmatprep.subr.mxu0 0.0
      %570 = vmatpush2.msra.mxu0 0.0
      %571 = vmatprep.subr.mxu0 0.0
      %572 = vmatpush2.msra.mxu0 0.0
      %573 = vmatprep.subr.mxu0 0.0
      %574 = vmatpush2.msra.mxu0 0.0
      %575 = vmatprep.subr.mxu0 0.0
      %576 = vmatpush2.msra.mxu0 0.0
      %577 = vmatprep.subr.mxu0 0.0
      %578 = vmatpush2.msra.mxu0 0.0
      %579 = vmatprep.subr.mxu0 0.0
      %580 = vmatpush2.msra.mxu0 0.0
      %581 = vmatprep.subr.mxu0 0.0
      %582 = vmatpush2.msra.mxu0 0.0
      %583 = vmatprep.subr.mxu0 0.0
      %584 = vmatpush2.msra.mxu0 0.0
      %585 = vmatprep.subr.mxu0 0.0
      %586 = vmatpush2.msra.mxu0 0.0
      %587 = vmatprep.subr.mxu0 0.0
      %588 = vmatpush2.msra.mxu0 0.0
      %589 = vmatprep.subr.mxu0 0.0
      %590 = vmatpush2.msra.mxu0 0.0
      %591 = vmatprep.subr.mxu0 0.0
      %592 = vmatpush2.msra.mxu0 0.0
      %593 = vmatprep.subr.mxu0 0.0
      %594 = vmatpush2.msra.mxu0 0.0
      %595 = vmatprep.subr.mxu0 0.0
      %596 = vmatpush2.msra.mxu0 0.0
      %597 = vmatprep.mubr.f32.mxu0 0.0
      %598 = vmatmul.mubr.f32.gmra.mxu0 %v531
      %v599 = vpop.f32.mrf.mxu0
      %v600 = vadd.f32 %v434, %v599
      %v601 = vpop.f32.mrf.mxu0
      %v602 = vadd.f32 %v434, %v601
      %603 = vdwg.mxu0
      %v604 = vmul.f32 %v600, 0.5
      %v605 = vmul.f32 %v602, 0.5
      %v606 = vmul.f32 %v600, 0.70710677
      %v607 = vmul.f32 %v602, 0.70710677
      %v608 = verf.f32.pop %v606
      %v609 = verf.f32.pop %v607
      %v610 = vadd.f32 %v608, 1.0
      %v611 = vadd.f32 %v609, 1.0
      %v612 = vmul.f32 %v604, %v610
      %v613 = vmul.f32 %v605, %v611
      %v614 = vld [vmem:[%s3] sm:$0xff]
      %v615 = vld [vmem:[%s4] sm:$0xff]
      %616 = vst [vmem:[#allocation2 + $0x8] sm:$0xff] %v612
      %617 = vst [vmem:[#allocation2 + $0x10] sm:$0xff] %v613
      %v618 = vld [vmem:[#allocation2] sm:$0xff]
      %v619 = vld [vmem:[#allocation2 + $0x8] sm:$0xff]
      %v620 = vld [vmem:[#allocation2 + $0x10] sm:$0xff]
      %v621 = vmul.f32 %v618, %v267
      %v622 = vmul.f32 %v619, %v271
      %v623 = vmul.f32 %v620, %v269
      %v624 = vmul.f32 %v618, %v281
      %v625 = vmul.f32 %v619, %v285
      %v626 = vmul.f32 %v620, %v283
      %v627 = vmul.f32 %v618, %v293
      %v628 = vmul.f32 %v619, %v297
      %v629 = vmul.f32 %v620, %v295
      %v630 = vld [vmem:[#allocation2 + $0x8] sm:$0xff]
      %v631 = vld [vmem:[#allocation2 + $0x10] sm:$0xff]
      %v632 = vld [vmem:[#allocation2 + $0x18] sm:$0xff]
      %v633 = vmul.f32 %v630, %v308
      %v634 = vmul.f32 %v631, %v312
      %v635 = vmul.f32 %v632, %v310
      %v636 = vmul.f32 %v630, %v320
      %v637 = vmul.f32 %v631, %v324
      %v638 = vmul.f32 %v632, %v322
      %v639 = vmul.f32 %v630, %v332
      %v640 = vmul.f32 %v631, %v336
      %v641 = vmul.f32 %v632, %v334
      %645 = vrot.lane.b32.xlu0 %v618, 127
      %v646 = vpop.permute.xlu0 %645
      %647 = vrot.lane.b32.xlu0 %v619, 127
      %v648 = vpop.permute.xlu0 %647
      %649 = vrot.lane.b32.xlu0 %v620, 127
      %v650 = vpop.permute.xlu0 %649
      %v651 = vsel %vm296, %v646, %v648
      %v652 = vsel %vm296, %v648, %v650
      %656 = vrot.lane.b32.xlu0 %v624, 126
      %v657 = vpop.permute.xlu0 %656
      %658 = vrot.lane.b32.xlu0 %v625, 126
      %v659 = vpop.permute.xlu0 %658
      %660 = vrot.lane.b32.xlu0 %v626, 126
      %v661 = vpop.permute.xlu0 %660
      %v662 = vsel %vm363, %v657, %v659
      %v663 = vsel %vm363, %v659, %v661
      %667 = vrot.lane.b32.xlu0 %v627, 112
      %v668 = vpop.permute.xlu0 %667
      %669 = vrot.lane.b32.xlu0 %v628, 112
      %v670 = vpop.permute.xlu0 %669
      %671 = vrot.lane.b32.xlu0 %v629, 112
      %v672 = vpop.permute.xlu0 %671
      %v673 = vsel %vm375, %v668, %v670
      %v674 = vsel %vm375, %v670, %v672
      %675 = vrot.lane.b32.xlu0 %v619, 111
      %v676 = vpop.permute.xlu0 %675
      %677 = vrot.lane.b32.xlu0 %v620, 111
      %v678 = vpop.permute.xlu0 %677
      %v679 = vsel %vm270, %v676, %v678
      %683 = vrot.lane.b32.xlu0 %v633, 110
      %v684 = vpop.permute.xlu0 %683
      %685 = vrot.lane.b32.xlu0 %v634, 110
      %v686 = vpop.permute.xlu0 %685
      %687 = vrot.lane.b32.xlu0 %v635, 110
      %v688 = vpop.permute.xlu0 %687
      %v689 = vsel %vm392, %v684, %v686
      %v690 = vsel %vm392, %v686, %v688
      %694 = vrot.lane.b32.xlu0 %v636, 96
      %v695 = vpop.permute.xlu0 %694
      %696 = vrot.lane.b32.xlu0 %v637, 96
      %v697 = vpop.permute.xlu0 %696
      %698 = vrot.lane.b32.xlu0 %v638, 96
      %v699 = vpop.permute.xlu0 %698
      %v700 = vsel %vm404, %v695, %v697
      %v701 = vsel %vm404, %v697, %v699
      %705 = vrot.lane.b32.xlu0 %v630, 95
      %v706 = vpop.permute.xlu0 %705
      %707 = vrot.lane.b32.xlu0 %v631, 95
      %v708 = vpop.permute.xlu0 %707
      %709 = vrot.lane.b32.xlu0 %v632, 95
      %v710 = vpop.permute.xlu0 %709
      %v711 = vsel %vm416, %v706, %v708
      %v712 = vsel %vm416, %v708, %v710
      %716 = vrot.lane.b32.xlu0 %v639, 94
      %v717 = vpop.permute.xlu0 %716
      %718 = vrot.lane.b32.xlu0 %v640, 94
      %v719 = vpop.permute.xlu0 %718
      %720 = vrot.lane.b32.xlu0 %v641, 94
      %v721 = vpop.permute.xlu0 %720
      %v722 = vsel %vm428, %v717, %v719
      %v723 = vsel %vm428, %v719, %v721
      %725 = vset.pattern.permute.xlu0 0
      %726 = vperm.xlu0 %725, %v615
      %v727 = vpop.permute.xlu0 %726
      %732 = vrot.lane.b32.xlu0 %v621, 17
      %v733 = vpop.permute.xlu0 %732
      %734 = vrot.lane.b32.xlu0 %v622, 17
      %v735 = vpop.permute.xlu0 %734
      %736 = vrot.lane.b32.xlu0 %v623, 17
      %v737 = vpop.permute.xlu0 %736
      %738 = vrot.lane.b32.xlu0 %v651, 17
      %v739 = vpop.permute.xlu0 %738
      %740 = vrot.lane.b32.xlu0 %v652, 17
      %v741 = vpop.permute.xlu0 %740
      %742 = vrot.lane.b32.xlu0 %v650, 17
      %v743 = vpop.permute.xlu0 %742
      %744 = vrot.lane.b32.xlu0 %v662, 17
      %v745 = vpop.permute.xlu0 %744
      %746 = vrot.lane.b32.xlu0 %v663, 17
      %v747 = vpop.permute.xlu0 %746
      %748 = vrot.lane.b32.xlu0 %v661, 17
      %v749 = vpop.permute.xlu0 %748
      %750 = vrot.lane.b32.xlu0 %v673, 17
      %v751 = vpop.permute.xlu0 %750
      %752 = vrot.lane.b32.xlu0 %v674, 17
      %v753 = vpop.permute.xlu0 %752
      %754 = vrot.lane.b32.xlu0 %v672, 17
      %v755 = vpop.permute.xlu0 %754
      %756 = vrot.lane.b32.xlu0 %v676, 17
      %v757 = vpop.permute.xlu0 %756
      %758 = vrot.lane.b32.xlu0 %v679, 17
      %v759 = vpop.permute.xlu0 %758
      %760 = vrot.lane.b32.xlu0 %v678, 17
      %v761 = vpop.permute.xlu0 %760
      %762 = vrot.lane.b32.xlu0 %v684, 17
      %v763 = vpop.permute.xlu0 %762
      %764 = vrot.lane.b32.xlu0 %v689, 17
      %v765 = vpop.permute.xlu0 %764
      %766 = vrot.lane.b32.xlu0 %v690, 17
      %v767 = vpop.permute.xlu0 %766
      %768 = vrot.lane.b32.xlu0 %v695, 17
      %v769 = vpop.permute.xlu0 %768
      %770 = vrot.lane.b32.xlu0 %v700, 17
      %v771 = vpop.permute.xlu0 %770
      %772 = vrot.lane.b32.xlu0 %v701, 17
      %v773 = vpop.permute.xlu0 %772
      %774 = vrot.lane.b32.xlu0 %v706, 17
      %v775 = vpop.permute.xlu0 %774
      %776 = vrot.lane.b32.xlu0 %v711, 17
      %v777 = vpop.permute.xlu0 %776
      %778 = vrot.lane.b32.xlu0 %v712, 17
      %v779 = vpop.permute.xlu0 %778
      %780 = vrot.lane.b32.xlu0 %v717, 17
      %v781 = vpop.permute.xlu0 %780
      %782 = vrot.lane.b32.xlu0 %v722, 17
      %v783 = vpop.permute.xlu0 %782
      %784 = vrot.lane.b32.xlu0 %v723, 17
      %v785 = vpop.permute.xlu0 %784
      %v786 = vsel %vm335, %v733, %v735
      %v787 = vsel %vm335, %v735, %v737
      %v788 = vsel %vm335, %v739, %v741
      %v789 = vsel %vm335, %v741, %v743
      %v790 = vsel %vm335, %v745, %v747
      %v791 = vsel %vm335, %v747, %v749
      %v792 = vsel %vm335, %v751, %v753
      %v793 = vsel %vm335, %v753, %v755
      %v794 = vsel %vm335, %v757, %v759
      %v795 = vsel %vm335, %v759, %v761
      %v796 = vsel %vm335, %v763, %v765
      %v797 = vsel %vm335, %v765, %v767
      %v798 = vsel %vm335, %v769, %v771
      %v799 = vsel %vm335, %v771, %v773
      %v800 = vsel %vm335, %v775, %v777
      %v801 = vsel %vm335, %v777, %v779
      %v802 = vsel %vm335, %v781, %v783
      %v803 = vsel %vm335, %v783, %v785
      %v823 = vsel %vm529, %v614, 0
      %825 = vmatprep.subr.mxu0 0.0
      %826 = vmatpush1.msra.mxu0 0.0
      %827 = vmatprep.subr.mxu0 0.0
      %828 = vmatpush1.msra.mxu0 0.0
      %829 = vmatprep.subr.mxu0 0.0
      %830 = vmatpush1.msra.mxu0 0.0
      %831 = vmatprep.subr.mxu0 0.0
      %832 = vmatpush1.msra.mxu0 0.0
      %833 = vmatprep.subr.mxu0 0.0
      %834 = vmatpush1.msra.mxu0 0.0
      %835 = vmatprep.subr.mxu0 0.0
      %836 = vmatpush1.msra.mxu0 0.0
      %837 = vmatprep.subr.mxu0 0.0
      %838 = vmatpush1.msra.mxu0 0.0
      %839 = vmatprep.subr.mxu0 %v803
      %840 = vmatpush1.msra.mxu0 %v802
      %841 = vmatprep.subr.mxu0 %v801
      %842 = vmatpush1.msra.mxu0 %v800
      %843 = vmatprep.subr.mxu0 %v799
      %844 = vmatpush1.msra.mxu0 %v798
      %845 = vmatprep.subr.mxu0 %v797
      %846 = vmatpush1.msra.mxu0 %v796
      %847 = vmatprep.subr.mxu0 %v795
      %848 = vmatpush1.msra.mxu0 %v794
      %849 = vmatprep.subr.mxu0 %v793
      %850 = vmatpush1.msra.mxu0 %v792
      %851 = vmatprep.subr.mxu0 %v791
      %852 = vmatpush1.msra.mxu0 %v790
      %853 = vmatprep.subr.mxu0 %v789
      %854 = vmatpush1.msra.mxu0 %v788
      %855 = vmatprep.subr.mxu0 %v787
      %856 = vmatpush1.msra.mxu0 %v786
      %857 = vmatprep.subr.mxu0 0.0
      %858 = vmatpush2.msra.mxu0 0.0
      %859 = vmatprep.subr.mxu0 0.0
      %860 = vmatpush2.msra.mxu0 0.0
      %861 = vmatprep.subr.mxu0 0.0
      %862 = vmatpush2.msra.mxu0 0.0
      %863 = vmatprep.subr.mxu0 0.0
      %864 = vmatpush2.msra.mxu0 0.0
      %865 = vmatprep.subr.mxu0 0.0
      %866 = vmatpush2.msra.mxu0 0.0
      %867 = vmatprep.subr.mxu0 0.0
      %868 = vmatpush2.msra.mxu0 0.0
      %869 = vmatprep.subr.mxu0 0.0
      %870 = vmatpush2.msra.mxu0 0.0
      %871 = vmatprep.subr.mxu0 0.0
      %872 = vmatpush2.msra.mxu0 0.0
      %873 = vmatprep.subr.mxu0 0.0
      %874 = vmatpush2.msra.mxu0 0.0
      %875 = vmatprep.subr.mxu0 0.0
      %876 = vmatpush2.msra.mxu0 0.0
      %877 = vmatprep.subr.mxu0 0.0
      %878 = vmatpush2.msra.mxu0 0.0
      %879 = vmatprep.subr.mxu0 0.0
      %880 = vmatpush2.msra.mxu0 0.0
      %881 = vmatprep.subr.mxu0 0.0
      %882 = vmatpush2.msra.mxu0 0.0
      %883 = vmatprep.subr.mxu0 0.0
      %884 = vmatpush2.msra.mxu0 0.0
      %885 = vmatprep.subr.mxu0 0.0
      %886 = vmatpush2.msra.mxu0 0.0
      %887 = vmatprep.subr.mxu0 0.0
      %888 = vmatpush2.msra.mxu0 0.0
      %889 = vmatprep.mubr.f32.mxu0 0.0
      %890 = vmatmul.mubr.f32.gmra.mxu0 %v823
      %v891 = vpop.f32.mrf.mxu0
      %v892 = vadd.f32 %v727, %v891
      %v893 = vpop.f32.mrf.mxu0
      %v894 = vadd.f32 %v727, %v893
      %895 = vdwg.mxu0
      %v896 = vadd.f32 %v892, %v255
      %v897 = vadd.f32 %v894, %v256
      %s898 = scalar_lea.vmem %s1, 8
      %v899 = vld [vmem:[%s898] sm:$0xff]
      %s900 = scalar_lea.vmem %s2, 8
      %v901 = vld [vmem:[%s900] sm:$0xff]
      %902 = vst [vmem:[#allocation2 + $0x8] sm:$0xff] %v896
      %903 = vst [vmem:[#allocation2 + $0x10] sm:$0xff] %v897
      %v904 = vld [vmem:[#allocation2] sm:$0xff]
      %v905 = vld [vmem:[#allocation2 + $0x8] sm:$0xff]
      %v906 = vld [vmem:[#allocation2 + $0x10] sm:$0xff]
      %v907 = vmul.f32 %v904, %v267
      %v908 = vmul.f32 %v905, %v271
      %v909 = vmul.f32 %v906, %v269
      %v910 = vmul.f32 %v904, %v281
      %v911 = vmul.f32 %v905, %v285
      %v912 = vmul.f32 %v906, %v283
      %v913 = vmul.f32 %v904, %v293
      %v914 = vmul.f32 %v905, %v297
      %v915 = vmul.f32 %v906, %v295
      %v916 = vld [vmem:[#allocation2 + $0x8] sm:$0xff]
      %v917 = vld [vmem:[#allocation2 + $0x10] sm:$0xff]
      %v918 = vld [vmem:[#allocation2 + $0x18] sm:$0xff]
      %v919 = vmul.f32 %v916, %v308
      %v920 = vmul.f32 %v917, %v312
      %v921 = vmul.f32 %v918, %v310
      %v922 = vmul.f32 %v916, %v320
      %v923 = vmul.f32 %v917, %v324
      %v924 = vmul.f32 %v918, %v322
      %v925 = vmul.f32 %v916, %v332
      %v926 = vmul.f32 %v917, %v336
      %v927 = vmul.f32 %v918, %v334
      %931 = vrot.lane.b32.xlu0 %v904, 127
      %v932 = vpop.permute.xlu0 %931
      %933 = vrot.lane.b32.xlu0 %v905, 127
      %v934 = vpop.permute.xlu0 %933
      %935 = vrot.lane.b32.xlu0 %v906, 127
      %v936 = vpop.permute.xlu0 %935
      %v937 = vsel %vm296, %v932, %v934
      %v938 = vsel %vm296, %v934, %v936
      %942 = vrot.lane.b32.xlu0 %v910, 126
      %v943 = vpop.permute.xlu0 %942
      %944 = vrot.lane.b32.xlu0 %v911, 126
      %v945 = vpop.permute.xlu0 %944
      %946 = vrot.lane.b32.xlu0 %v912, 126
      %v947 = vpop.permute.xlu0 %946
      %v948 = vsel %vm363, %v943, %v945
      %v949 = vsel %vm363, %v945, %v947
      %953 = vrot.lane.b32.xlu0 %v913, 112
      %v954 = vpop.permute.xlu0 %953
      %955 = vrot.lane.b32.xlu0 %v914, 112
      %v956 = vpop.permute.xlu0 %955
      %957 = vrot.lane.b32.xlu0 %v915, 112
      %v958 = vpop.permute.xlu0 %957
      %v959 = vsel %vm375, %v954, %v956
      %v960 = vsel %vm375, %v956, %v958
      %961 = vrot.lane.b32.xlu0 %v905, 111
      %v962 = vpop.permute.xlu0 %961
      %963 = vrot.lane.b32.xlu0 %v906, 111
      %v964 = vpop.permute.xlu0 %963
      %v965 = vsel %vm270, %v962, %v964
      %969 = vrot.lane.b32.xlu0 %v919, 110
      %v970 = vpop.permute.xlu0 %969
      %971 = vrot.lane.b32.xlu0 %v920, 110
      %v972 = vpop.permute.xlu0 %971
      %973 = vrot.lane.b32.xlu0 %v921, 110
      %v974 = vpop.permute.xlu0 %973
      %v975 = vsel %vm392, %v970, %v972
      %v976 = vsel %vm392, %v972, %v974
      %980 = vrot.lane.b32.xlu0 %v922, 96
      %v981 = vpop.permute.xlu0 %980
      %982 = vrot.lane.b32.xlu0 %v923, 96
      %v983 = vpop.permute.xlu0 %982
      %984 = vrot.lane.b32.xlu0 %v924, 96
      %v985 = vpop.permute.xlu0 %984
      %v986 = vsel %vm404, %v981, %v983
      %v987 = vsel %vm404, %v983, %v985
      %991 = vrot.lane.b32.xlu0 %v916, 95
      %v992 = vpop.permute.xlu0 %991
      %993 = vrot.lane.b32.xlu0 %v917, 95
      %v994 = vpop.permute.xlu0 %993
      %995 = vrot.lane.b32.xlu0 %v918, 95
      %v996 = vpop.permute.xlu0 %995
      %v997 = vsel %vm416, %v992, %v994
      %v998 = vsel %vm416, %v994, %v996
      %1002 = vrot.lane.b32.xlu0 %v925, 94
      %v1003 = vpop.permute.xlu0 %1002
      %1004 = vrot.lane.b32.xlu0 %v926, 94
      %v1005 = vpop.permute.xlu0 %1004
      %1006 = vrot.lane.b32.xlu0 %v927, 94
      %v1007 = vpop.permute.xlu0 %1006
      %v1008 = vsel %vm428, %v1003, %v1005
      %v1009 = vsel %vm428, %v1005, %v1007
      %1011 = vset.pattern.permute.xlu0 0
      %1012 = vperm.xlu0 %1011, %v901
      %v1013 = vpop.permute.xlu0 %1012
      %1018 = vrot.lane.b32.xlu0 %v907, 17
      %v1019 = vpop.permute.xlu0 %1018
      %1020 = vrot.lane.b32.xlu0 %v908, 17
      %v1021 = vpop.permute.xlu0 %1020
      %1022 = vrot.lane.b32.xlu0 %v909, 17
      %v1023 = vpop.permute.xlu0 %1022
      %1024 = vrot.lane.b32.xlu0 %v937, 17
      %v1025 = vpop.permute.xlu0 %1024
      %1026 = vrot.lane.b32.xlu0 %v938, 17
      %v1027 = vpop.permute.xlu0 %1026
      %1028 = vrot.lane.b32.xlu0 %v936, 17
      %v1029 = vpop.permute.xlu0 %1028
      %1030 = vrot.lane.b32.xlu0 %v948, 17
      %v1031 = vpop.permute.xlu0 %1030
      %1032 = vrot.lane.b32.xlu0 %v949, 17
      %v1033 = vpop.permute.xlu0 %1032
      %1034 = vrot.lane.b32.xlu0 %v947, 17
      %v1035 = vpop.permute.xlu0 %1034
      %1036 = vrot.lane.b32.xlu0 %v959, 17
      %v1037 = vpop.permute.xlu0 %1036
      %1038 = vrot.lane.b32.xlu0 %v960, 17
      %v1039 = vpop.permute.xlu0 %1038
      %1040 = vrot.lane.b32.xlu0 %v958, 17
      %v1041 = vpop.permute.xlu0 %1040
      %1042 = vrot.lane.b32.xlu0 %v962, 17
      %v1043 = vpop.permute.xlu0 %1042
      %1044 = vrot.lane.b32.xlu0 %v965, 17
      %v1045 = vpop.permute.xlu0 %1044
      %1046 = vrot.lane.b32.xlu0 %v964, 17
      %v1047 = vpop.permute.xlu0 %1046
      %1048 = vrot.lane.b32.xlu0 %v970, 17
      %v1049 = vpop.permute.xlu0 %1048
      %1050 = vrot.lane.b32.xlu0 %v975, 17
      %v1051 = vpop.permute.xlu0 %1050
      %1052 = vrot.lane.b32.xlu0 %v976, 17
      %v1053 = vpop.permute.xlu0 %1052
      %1054 = vrot.lane.b32.xlu0 %v981, 17
      %v1055 = vpop.permute.xlu0 %1054
      %1056 = vrot.lane.b32.xlu0 %v986, 17
      %v1057 = vpop.permute.xlu0 %1056
      %1058 = vrot.lane.b32.xlu0 %v987, 17
      %v1059 = vpop.permute.xlu0 %1058
      %1060 = vrot.lane.b32.xlu0 %v992, 17
      %v1061 = vpop.permute.xlu0 %1060
      %1062 = vrot.lane.b32.xlu0 %v997, 17
      %v1063 = vpop.permute.xlu0 %1062
      %1064 = vrot.lane.b32.xlu0 %v998, 17
      %v1065 = vpop.permute.xlu0 %1064
      %1066 = vrot.lane.b32.xlu0 %v1003, 17
      %v1067 = vpop.permute.xlu0 %1066
      %1068 = vrot.lane.b32.xlu0 %v1008, 17
      %v1069 = vpop.permute.xlu0 %1068
      %1070 = vrot.lane.b32.xlu0 %v1009, 17
      %v1071 = vpop.permute.xlu0 %1070
      %v1072 = vsel %vm335, %v1019, %v1021
      %v1073 = vsel %vm335, %v1021, %v1023
      %v1074 = vsel %vm335, %v1025, %v1027
      %v1075 = vsel %vm335, %v1027, %v1029
      %v1076 = vsel %vm335, %v1031, %v1033
      %v1077 = vsel %vm335, %v1033, %v1035
      %v1078 = vsel %vm335, %v1037, %v1039
      %v1079 = vsel %vm335, %v1039, %v1041
      %v1080 = vsel %vm335, %v1043, %v1045
      %v1081 = vsel %vm335, %v1045, %v1047
      %v1082 = vsel %vm335, %v1049, %v1051
      %v1083 = vsel %vm335, %v1051, %v1053
      %v1084 = vsel %vm335, %v1055, %v1057
      %v1085 = vsel %vm335, %v1057, %v1059
      %v1086 = vsel %vm335, %v1061, %v1063
      %v1087 = vsel %vm335, %v1063, %v1065
      %v1088 = vsel %vm335, %v1067, %v1069
      %v1089 = vsel %vm335, %v1069, %v1071
      %v1109 = vsel %vm529, %v899, 0
      %1111 = vmatprep.subr.mxu0 0.0
      %1112 = vmatpush1.msra.mxu0 0.0
      %1113 = vmatprep.subr.mxu0 0.0
      %1114 = vmatpush1.msra.mxu0 0.0
      %1115 = vmatprep.subr.mxu0 0.0
      %1116 = vmatpush1.msra.mxu0 0.0
      %1117 = vmatprep.subr.mxu0 0.0
      %1118 = vmatpush1.msra.mxu0 0.0
      %1119 = vmatprep.subr.mxu0 0.0
      %1120 = vmatpush1.msra.mxu0 0.0
      %1121 = vmatprep.subr.mxu0 0.0
      %1122 = vmatpush1.msra.mxu0 0.0
      %1123 = vmatprep.subr.mxu0 0.0
      %1124 = vmatpush1.msra.mxu0 0.0
      %1125 = vmatprep.subr.mxu0 %v1089
      %1126 = vmatpush1.msra.mxu0 %v1088
      %1127 = vmatprep.subr.mxu0 %v1087
      %1128 = vmatpush1.msra.mxu0 %v1086
      %1129 = vmatprep.subr.mxu0 %v1085
      %1130 = vmatpush1.msra.mxu0 %v1084
      %1131 = vmatprep.subr.mxu0 %v1083
      %1132 = vmatpush1.msra.mxu0 %v1082
      %1133 = vmatprep.subr.mxu0 %v1081
      %1134 = vmatpush1.msra.mxu0 %v1080
      %1135 = vmatprep.subr.mxu0 %v1079
      %1136 = vmatpush1.msra.mxu0 %v1078
      %1137 = vmatprep.subr.mxu0 %v1077
      %1138 = vmatpush1.msra.mxu0 %v1076
      %1139 = vmatprep.subr.mxu0 %v1075
      %1140 = vmatpush1.msra.mxu0 %v1074
      %1141 = vmatprep.subr.mxu0 %v1073
      %1142 = vmatpush1.msra.mxu0 %v1072
      %1143 = vmatprep.subr.mxu0 0.0
      %1144 = vmatpush2.msra.mxu0 0.0
      %1145 = vmatprep.subr.mxu0 0.0
      %1146 = vmatpush2.msra.mxu0 0.0
      %1147 = vmatprep.subr.mxu0 0.0
      %1148 = vmatpush2.msra.mxu0 0.0
      %1149 = vmatprep.subr.mxu0 0.0
      %1150 = vmatpush2.msra.mxu0 0.0
      %1151 = vmatprep.subr.mxu0 0.0
      %1152 = vmatpush2.msra.mxu0 0.0
      %1153 = vmatprep.subr.mxu0 0.0
      %1154 = vmatpush2.msra.mxu0 0.0
      %1155 = vmatprep.subr.mxu0 0.0
      %1156 = vmatpush2.msra.mxu0 0.0
      %1157 = vmatprep.subr.mxu0 0.0
      %1158 = vmatpush2.msra.mxu0 0.0
      %1159 = vmatprep.subr.mxu0 0.0
      %1160 = vmatpush2.msra.mxu0 0.0
      %1161 = vmatprep.subr.mxu0 0.0
      %1162 = vmatpush2.msra.mxu0 0.0
      %1163 = vmatprep.subr.mxu0 0.0
      %1164 = vmatpush2.msra.mxu0 0.0
      %1165 = vmatprep.subr.mxu0 0.0
      %1166 = vmatpush2.msra.mxu0 0.0
      %1167 = vmatprep.subr.mxu0 0.0
      %1168 = vmatpush2.msra.mxu0 0.0
      %1169 = vmatprep.subr.mxu0 0.0
      %1170 = vmatpush2.msra.mxu0 0.0
      %1171 = vmatprep.subr.mxu0 0.0
      %1172 = vmatpush2.msra.mxu0 0.0
      %1173 = vmatprep.subr.mxu0 0.0
      %1174 = vmatpush2.msra.mxu0 0.0
      %1175 = vmatprep.mubr.f32.mxu0 0.0
      %1176 = vmatmul.mubr.f32.gmra.mxu0 %v1109
      %v1177 = vpop.f32.mrf.mxu0
      %v1178 = vadd.f32 %v1013, %v1177
      %v1179 = vpop.f32.mrf.mxu0
      %v1180 = vadd.f32 %v1013, %v1179
      %1181 = vdwg.mxu0
      %v1182 = vmul.f32 %v1178, 0.5
      %v1183 = vmul.f32 %v1180, 0.5
      %v1184 = vmul.f32 %v1178, 0.70710677
      %v1185 = vmul.f32 %v1180, 0.70710677
      %v1186 = verf.f32.pop %v1184
      %v1187 = verf.f32.pop %v1185
      %v1188 = vadd.f32 %v1186, 1.0
      %v1189 = vadd.f32 %v1187, 1.0
      %v1190 = vmul.f32 %v1182, %v1188
      %v1191 = vmul.f32 %v1183, %v1189
      %s1192 = scalar_lea.vmem %s3, 8
      %v1193 = vld [vmem:[%s1192] sm:$0xff]
      %s1194 = scalar_lea.vmem %s4, 8
      %v1195 = vld [vmem:[%s1194] sm:$0xff]
      %1196 = vst [vmem:[#allocation2 + $0x8] sm:$0xff] %v1190
      %1197 = vst [vmem:[#allocation2 + $0x10] sm:$0xff] %v1191
      %v1198 = vld [vmem:[#allocation2] sm:$0xff]
      %v1199 = vld [vmem:[#allocation2 + $0x8] sm:$0xff]
      %v1200 = vld [vmem:[#allocation2 + $0x10] sm:$0xff]
      %v1201 = vmul.f32 %v1198, %v267
      %v1202 = vmul.f32 %v1199, %v271
      %v1203 = vmul.f32 %v1200, %v269
      %v1204 = vmul.f32 %v1198, %v281
      %v1205 = vmul.f32 %v1199, %v285
      %v1206 = vmul.f32 %v1200, %v283
      %v1207 = vmul.f32 %v1198, %v293
      %v1208 = vmul.f32 %v1199, %v297
      %v1209 = vmul.f32 %v1200, %v295
      %v1210 = vld [vmem:[#allocation2 + $0x8] sm:$0xff]
      %v1211 = vld [vmem:[#allocation2 + $0x10] sm:$0xff]
      %v1212 = vld [vmem:[#allocation2 + $0x18] sm:$0xff]
      %v1213 = vmul.f32 %v1210, %v308
      %v1214 = vmul.f32 %v1211, %v312
      %v1215 = vmul.f32 %v1212, %v310
      %v1216 = vmul.f32 %v1210, %v320
      %v1217 = vmul.f32 %v1211, %v324
      %v1218 = vmul.f32 %v1212, %v322
      %v1219 = vmul.f32 %v1210, %v332
      %v1220 = vmul.f32 %v1211, %v336
      %v1221 = vmul.f32 %v1212, %v334
      %1225 = vrot.lane.b32.xlu0 %v1198, 127
      %v1226 = vpop.permute.xlu0 %1225
      %1227 = vrot.lane.b32.xlu0 %v1199, 127
      %v1228 = vpop.permute.xlu0 %1227
      %1229 = vrot.lane.b32.xlu0 %v1200, 127
      %v1230 = vpop.permute.xlu0 %1229
      %v1231 = vsel %vm296, %v1226, %v1228
      %v1232 = vsel %vm296, %v1228, %v1230
      %1236 = vrot.lane.b32.xlu0 %v1204, 126
      %v1237 = vpop.permute.xlu0 %1236
      %1238 = vrot.lane.b32.xlu0 %v1205, 126
      %v1239 = vpop.permute.xlu0 %1238
      %1240 = vrot.lane.b32.xlu0 %v1206, 126
      %v1241 = vpop.permute.xlu0 %1240
      %v1242 = vsel %vm363, %v1237, %v1239
      %v1243 = vsel %vm363, %v1239, %v1241
      %1247 = vrot.lane.b32.xlu0 %v1207, 112
      %v1248 = vpop.permute.xlu0 %1247
      %1249 = vrot.lane.b32.xlu0 %v1208, 112
      %v1250 = vpop.permute.xlu0 %1249
      %1251 = vrot.lane.b32.xlu0 %v1209, 112
      %v1252 = vpop.permute.xlu0 %1251
      %v1253 = vsel %vm375, %v1248, %v1250
      %v1254 = vsel %vm375, %v1250, %v1252
      %1255 = vrot.lane.b32.xlu0 %v1199, 111
      %v1256 = vpop.permute.xlu0 %1255
      %1257 = vrot.lane.b32.xlu0 %v1200, 111
      %v1258 = vpop.permute.xlu0 %1257
      %v1259 = vsel %vm270, %v1256, %v1258
      %1263 = vrot.lane.b32.xlu0 %v1213, 110
      %v1264 = vpop.permute.xlu0 %1263
      %1265 = vrot.lane.b32.xlu0 %v1214, 110
      %v1266 = vpop.permute.xlu0 %1265
      %1267 = vrot.lane.b32.xlu0 %v1215, 110
      %v1268 = vpop.permute.xlu0 %1267
      %v1269 = vsel %vm392, %v1264, %v1266
      %v1270 = vsel %vm392, %v1266, %v1268
      %1274 = vrot.lane.b32.xlu0 %v1216, 96
      %v1275 = vpop.permute.xlu0 %1274
      %1276 = vrot.lane.b32.xlu0 %v1217, 96
      %v1277 = vpop.permute.xlu0 %1276
      %1278 = vrot.lane.b32.xlu0 %v1218, 96
      %v1279 = vpop.permute.xlu0 %1278
      %v1280 = vsel %vm404, %v1275, %v1277
      %v1281 = vsel %vm404, %v1277, %v1279
      %1285 = vrot.lane.b32.xlu0 %v1210, 95
      %v1286 = vpop.permute.xlu0 %1285
      %1287 = vrot.lane.b32.xlu0 %v1211, 95
      %v1288 = vpop.permute.xlu0 %1287
      %1289 = vrot.lane.b32.xlu0 %v1212, 95
      %v1290 = vpop.permute.xlu0 %1289
      %v1291 = vsel %vm416, %v1286, %v1288
      %v1292 = vsel %vm416, %v1288, %v1290
      %1296 = vrot.lane.b32.xlu0 %v1219, 94
      %v1297 = vpop.permute.xlu0 %1296
      %1298 = vrot.lane.b32.xlu0 %v1220, 94
      %v1299 = vpop.permute.xlu0 %1298
      %1300 = vrot.lane.b32.xlu0 %v1221, 94
      %v1301 = vpop.permute.xlu0 %1300
      %v1302 = vsel %vm428, %v1297, %v1299
      %v1303 = vsel %vm428, %v1299, %v1301
      %1305 = vset.pattern.permute.xlu0 0
      %1306 = vperm.xlu0 %1305, %v1195
      %v1307 = vpop.permute.xlu0 %1306
      %1312 = vrot.lane.b32.xlu0 %v1201, 17
      %v1313 = vpop.permute.xlu0 %1312
      %1314 = vrot.lane.b32.xlu0 %v1202, 17
      %v1315 = vpop.permute.xlu0 %1314
      %1316 = vrot.lane.b32.xlu0 %v1203, 17
      %v1317 = vpop.permute.xlu0 %1316
      %1318 = vrot.lane.b32.xlu0 %v1231, 17
      %v1319 = vpop.permute.xlu0 %1318
      %1320 = vrot.lane.b32.xlu0 %v1232, 17
      %v1321 = vpop.permute.xlu0 %1320
      %1322 = vrot.lane.b32.xlu0 %v1230, 17
      %v1323 = vpop.permute.xlu0 %1322
      %1324 = vrot.lane.b32.xlu0 %v1242, 17
      %v1325 = vpop.permute.xlu0 %1324
      %1326 = vrot.lane.b32.xlu0 %v1243, 17
      %v1327 = vpop.permute.xlu0 %1326
      %1328 = vrot.lane.b32.xlu0 %v1241, 17
      %v1329 = vpop.permute.xlu0 %1328
      %1330 = vrot.lane.b32.xlu0 %v1253, 17
      %v1331 = vpop.permute.xlu0 %1330
      %1332 = vrot.lane.b32.xlu0 %v1254, 17
      %v1333 = vpop.permute.xlu0 %1332
      %1334 = vrot.lane.b32.xlu0 %v1252, 17
      %v1335 = vpop.permute.xlu0 %1334
      %1336 = vrot.lane.b32.xlu0 %v1256, 17
      %v1337 = vpop.permute.xlu0 %1336
      %1338 = vrot.lane.b32.xlu0 %v1259, 17
      %v1339 = vpop.permute.xlu0 %1338
      %1340 = vrot.lane.b32.xlu0 %v1258, 17
      %v1341 = vpop.permute.xlu0 %1340
      %1342 = vrot.lane.b32.xlu0 %v1264, 17
      %v1343 = vpop.permute.xlu0 %1342
      %1344 = vrot.lane.b32.xlu0 %v1269, 17
      %v1345 = vpop.permute.xlu0 %1344
      %1346 = vrot.lane.b32.xlu0 %v1270, 17
      %v1347 = vpop.permute.xlu0 %1346
      %1348 = vrot.lane.b32.xlu0 %v1275, 17
      %v1349 = vpop.permute.xlu0 %1348
      %1350 = vrot.lane.b32.xlu0 %v1280, 17
      %v1351 = vpop.permute.xlu0 %1350
      %1352 = vrot.lane.b32.xlu0 %v1281, 17
      %v1353 = vpop.permute.xlu0 %1352
      %1354 = vrot.lane.b32.xlu0 %v1286, 17
      %v1355 = vpop.permute.xlu0 %1354
      %1356 = vrot.lane.b32.xlu0 %v1291, 17
      %v1357 = vpop.permute.xlu0 %1356
      %1358 = vrot.lane.b32.xlu0 %v1292, 17
      %v1359 = vpop.permute.xlu0 %1358
      %1360 = vrot.lane.b32.xlu0 %v1297, 17
      %v1361 = vpop.permute.xlu0 %1360
      %1362 = vrot.lane.b32.xlu0 %v1302, 17
      %v1363 = vpop.permute.xlu0 %1362
      %1364 = vrot.lane.b32.xlu0 %v1303, 17
      %v1365 = vpop.permute.xlu0 %1364
      %v1366 = vsel %vm335, %v1313, %v1315
      %v1367 = vsel %vm335, %v1315, %v1317
      %v1368 = vsel %vm335, %v1319, %v1321
      %v1369 = vsel %vm335, %v1321, %v1323
      %v1370 = vsel %vm335, %v1325, %v1327
      %v1371 = vsel %vm335, %v1327, %v1329
      %v1372 = vsel %vm335, %v1331, %v1333
      %v1373 = vsel %vm335, %v1333, %v1335
      %v1374 = vsel %vm335, %v1337, %v1339
      %v1375 = vsel %vm335, %v1339, %v1341
      %v1376 = vsel %vm335, %v1343, %v1345
      %v1377 = vsel %vm335, %v1345, %v1347
      %v1378 = vsel %vm335, %v1349, %v1351
      %v1379 = vsel %vm335, %v1351, %v1353
      %v1380 = vsel %vm335, %v1355, %v1357
      %v1381 = vsel %vm335, %v1357, %v1359
      %v1382 = vsel %vm335, %v1361, %v1363
      %v1383 = vsel %vm335, %v1363, %v1365
      %v1403 = vsel %vm529, %v1193, 0
      %1405 = vmatprep.subr.mxu0 0.0
      %1406 = vmatpush1.msra.mxu0 0.0
      %1407 = vmatprep.subr.mxu0 0.0
      %1408 = vmatpush1.msra.mxu0 0.0
      %1409 = vmatprep.subr.mxu0 0.0
      %1410 = vmatpush1.msra.mxu0 0.0
      %1411 = vmatprep.subr.mxu0 0.0
      %1412 = vmatpush1.msra.mxu0 0.0
      %1413 = vmatprep.subr.mxu0 0.0
      %1414 = vmatpush1.msra.mxu0 0.0
      %1415 = vmatprep.subr.mxu0 0.0
      %1416 = vmatpush1.msra.mxu0 0.0
      %1417 = vmatprep.subr.mxu0 0.0
      %1418 = vmatpush1.msra.mxu0 0.0
      %1419 = vmatprep.subr.mxu0 %v1383
      %1420 = vmatpush1.msra.mxu0 %v1382
      %1421 = vmatprep.subr.mxu0 %v1381
      %1422 = vmatpush1.msra.mxu0 %v1380
      %1423 = vmatprep.subr.mxu0 %v1379
      %1424 = vmatpush1.msra.mxu0 %v1378
      %1425 = vmatprep.subr.mxu0 %v1377
      %1426 = vmatpush1.msra.mxu0 %v1376
      %1427 = vmatprep.subr.mxu0 %v1375
      %1428 = vmatpush1.msra.mxu0 %v1374
      %1429 = vmatprep.subr.mxu0 %v1373
      %1430 = vmatpush1.msra.mxu0 %v1372
      %1431 = vmatprep.subr.mxu0 %v1371
      %1432 = vmatpush1.msra.mxu0 %v1370
      %1433 = vmatprep.subr.mxu0 %v1369
      %1434 = vmatpush1.msra.mxu0 %v1368
      %1435 = vmatprep.subr.mxu0 %v1367
      %1436 = vmatpush1.msra.mxu0 %v1366
      %1437 = vmatprep.subr.mxu0 0.0
      %1438 = vmatpush2.msra.mxu0 0.0
      %1439 = vmatprep.subr.mxu0 0.0
      %1440 = vmatpush2.msra.mxu0 0.0
      %1441 = vmatprep.subr.mxu0 0.0
      %1442 = vmatpush2.msra.mxu0 0.0
      %1443 = vmatprep.subr.mxu0 0.0
      %1444 = vmatpush2.msra.mxu0 0.0
      %1445 = vmatprep.subr.mxu0 0.0
      %1446 = vmatpush2.msra.mxu0 0.0
      %1447 = vmatprep.subr.mxu0 0.0
      %1448 = vmatpush2.msra.mxu0 0.0
      %1449 = vmatprep.subr.mxu0 0.0
      %1450 = vmatpush2.msra.mxu0 0.0
      %1451 = vmatprep.subr.mxu0 0.0
      %1452 = vmatpush2.msra.mxu0 0.0
      %1453 = vmatprep.subr.mxu0 0.0
      %1454 = vmatpush2.msra.mxu0 0.0
      %1455 = vmatprep.subr.mxu0 0.0
      %1456 = vmatpush2.msra.mxu0 0.0
      %1457 = vmatprep.subr.mxu0 0.0
      %1458 = vmatpush2.msra.mxu0 0.0
      %1459 = vmatprep.subr.mxu0 0.0
      %1460 = vmatpush2.msra.mxu0 0.0
      %1461 = vmatprep.subr.mxu0 0.0
      %1462 = vmatpush2.msra.mxu0 0.0
      %1463 = vmatprep.subr.mxu0 0.0
      %1464 = vmatpush2.msra.mxu0 0.0
      %1465 = vmatprep.subr.mxu0 0.0
      %1466 = vmatpush2.msra.mxu0 0.0
      %1467 = vmatprep.subr.mxu0 0.0
      %1468 = vmatpush2.msra.mxu0 0.0
      %1469 = vmatprep.mubr.f32.mxu0 0.0
      %1470 = vmatmul.mubr.f32.gmra.mxu0 %v1403
      %v1471 = vpop.f32.mrf.mxu0
      %v1472 = vadd.f32 %v1307, %v1471
      %v1473 = vpop.f32.mrf.mxu0
      %v1474 = vadd.f32 %v1307, %v1473
      %1475 = vdwg.mxu0
      %v1476 = vadd.f32 %v1472, %v896
      %v1477 = vadd.f32 %v1474, %v897
      %s1478 = scalar_lea.vmem %s1, 16
      %v1479 = vld [vmem:[%s1478] sm:$0xff]
      %s1480 = scalar_lea.vmem %s2, 16
      %v1481 = vld [vmem:[%s1480] sm:$0xff]
      %1482 = vst [vmem:[#allocation2 + $0x8] sm:$0xff] %v1476
      %1483 = vst [vmem:[#allocation2 + $0x10] sm:$0xff] %v1477
      %v1484 = vld [vmem:[#allocation2] sm:$0xff]
      %v1485 = vld [vmem:[#allocation2 + $0x8] sm:$0xff]
      %v1486 = vld [vmem:[#allocation2 + $0x10] sm:$0xff]
      %v1487 = vmul.f32 %v1484, %v267
      %v1488 = vmul.f32 %v1485, %v271
      %v1489 = vmul.f32 %v1486, %v269
      %v1490 = vmul.f32 %v1484, %v281
      %v1491 = vmul.f32 %v1485, %v285
      %v1492 = vmul.f32 %v1486, %v283
      %v1493 = vmul.f32 %v1484, %v293
      %v1494 = vmul.f32 %v1485, %v297
      %v1495 = vmul.f32 %v1486, %v295
      %v1496 = vld [vmem:[#allocation2 + $0x8] sm:$0xff]
      %v1497 = vld [vmem:[#allocation2 + $0x10] sm:$0xff]
      %v1498 = vld [vmem:[#allocation2 + $0x18] sm:$0xff]
      %v1499 = vmul.f32 %v1496, %v308
      %v1500 = vmul.f32 %v1497, %v312
      %v1501 = vmul.f32 %v1498, %v310
      %v1502 = vmul.f32 %v1496, %v320
      %v1503 = vmul.f32 %v1497, %v324
      %v1504 = vmul.f32 %v1498, %v322
      %v1505 = vmul.f32 %v1496, %v332
      %v1506 = vmul.f32 %v1497, %v336
      %v1507 = vmul.f32 %v1498, %v334
      %1511 = vrot.lane.b32.xlu0 %v1484, 127
      %v1512 = vpop.permute.xlu0 %1511
      %1513 = vrot.lane.b32.xlu0 %v1485, 127
      %v1514 = vpop.permute.xlu0 %1513
      %1515 = vrot.lane.b32.xlu0 %v1486, 127
      %v1516 = vpop.permute.xlu0 %1515
      %v1517 = vsel %vm296, %v1512, %v1514
      %v1518 = vsel %vm296, %v1514, %v1516
      %1522 = vrot.lane.b32.xlu0 %v1490, 126
      %v1523 = vpop.permute.xlu0 %1522
      %1524 = vrot.lane.b32.xlu0 %v1491, 126
      %v1525 = vpop.permute.xlu0 %1524
      %1526 = vrot.lane.b32.xlu0 %v1492, 126
      %v1527 = vpop.permute.xlu0 %1526
      %v1528 = vsel %vm363, %v1523, %v1525
      %v1529 = vsel %vm363, %v1525, %v1527
      %1533 = vrot.lane.b32.xlu0 %v1493, 112
      %v1534 = vpop.permute.xlu0 %1533
      %1535 = vrot.lane.b32.xlu0 %v1494, 112
      %v1536 = vpop.permute.xlu0 %1535
      %1537 = vrot.lane.b32.xlu0 %v1495, 112
      %v1538 = vpop.permute.xlu0 %1537
      %v1539 = vsel %vm375, %v1534, %v1536
      %v1540 = vsel %vm375, %v1536, %v1538
      %1541 = vrot.lane.b32.xlu0 %v1485, 111
      %v1542 = vpop.permute.xlu0 %1541
      %1543 = vrot.lane.b32.xlu0 %v1486, 111
      %v1544 = vpop.permute.xlu0 %1543
      %v1545 = vsel %vm270, %v1542, %v1544
      %1549 = vrot.lane.b32.xlu0 %v1499, 110
      %v1550 = vpop.permute.xlu0 %1549
      %1551 = vrot.lane.b32.xlu0 %v1500, 110
      %v1552 = vpop.permute.xlu0 %1551
      %1553 = vrot.lane.b32.xlu0 %v1501, 110
      %v1554 = vpop.permute.xlu0 %1553
      %v1555 = vsel %vm392, %v1550, %v1552
      %v1556 = vsel %vm392, %v1552, %v1554
      %1560 = vrot.lane.b32.xlu0 %v1502, 96
      %v1561 = vpop.permute.xlu0 %1560
      %1562 = vrot.lane.b32.xlu0 %v1503, 96
      %v1563 = vpop.permute.xlu0 %1562
      %1564 = vrot.lane.b32.xlu0 %v1504, 96
      %v1565 = vpop.permute.xlu0 %1564
      %v1566 = vsel %vm404, %v1561, %v1563
      %v1567 = vsel %vm404, %v1563, %v1565
      %1571 = vrot.lane.b32.xlu0 %v1496, 95
      %v1572 = vpop.permute.xlu0 %1571
      %1573 = vrot.lane.b32.xlu0 %v1497, 95
      %v1574 = vpop.permute.xlu0 %1573
      %1575 = vrot.lane.b32.xlu0 %v1498, 95
      %v1576 = vpop.permute.xlu0 %1575
      %v1577 = vsel %vm416, %v1572, %v1574
      %v1578 = vsel %vm416, %v1574, %v1576
      %1582 = vrot.lane.b32.xlu0 %v1505, 94
      %v1583 = vpop.permute.xlu0 %1582
      %1584 = vrot.lane.b32.xlu0 %v1506, 94
      %v1585 = vpop.permute.xlu0 %1584
      %1586 = vrot.lane.b32.xlu0 %v1507, 94
      %v1587 = vpop.permute.xlu0 %1586
      %v1588 = vsel %vm428, %v1583, %v1585
      %v1589 = vsel %vm428, %v1585, %v1587
      %1591 = vset.pattern.permute.xlu0 0
      %1592 = vperm.xlu0 %1591, %v1481
      %v1593 = vpop.permute.xlu0 %1592
      %1598 = vrot.lane.b32.xlu0 %v1487, 17
      %v1599 = vpop.permute.xlu0 %1598
      %1600 = vrot.lane.b32.xlu0 %v1488, 17
      %v1601 = vpop.permute.xlu0 %1600
      %1602 = vrot.lane.b32.xlu0 %v1489, 17
      %v1603 = vpop.permute.xlu0 %1602
      %1604 = vrot.lane.b32.xlu0 %v1517, 17
      %v1605 = vpop.permute.xlu0 %1604
      %1606 = vrot.lane.b32.xlu0 %v1518, 17
      %v1607 = vpop.permute.xlu0 %1606
      %1608 = vrot.lane.b32.xlu0 %v1516, 17
      %v1609 = vpop.permute.xlu0 %1608
      %1610 = vrot.lane.b32.xlu0 %v1528, 17
      %v1611 = vpop.permute.xlu0 %1610
      %1612 = vrot.lane.b32.xlu0 %v1529, 17
      %v1613 = vpop.permute.xlu0 %1612
      %1614 = vrot.lane.b32.xlu0 %v1527, 17
      %v1615 = vpop.permute.xlu0 %1614
      %1616 = vrot.lane.b32.xlu0 %v1539, 17
      %v1617 = vpop.permute.xlu0 %1616
      %1618 = vrot.lane.b32.xlu0 %v1540, 17
      %v1619 = vpop.permute.xlu0 %1618
      %1620 = vrot.lane.b32.xlu0 %v1538, 17
      %v1621 = vpop.permute.xlu0 %1620
      %1622 = vrot.lane.b32.xlu0 %v1542, 17
      %v1623 = vpop.permute.xlu0 %1622
      %1624 = vrot.lane.b32.xlu0 %v1545, 17
      %v1625 = vpop.permute.xlu0 %1624
      %1626 = vrot.lane.b32.xlu0 %v1544, 17
      %v1627 = vpop.permute.xlu0 %1626
      %1628 = vrot.lane.b32.xlu0 %v1550, 17
      %v1629 = vpop.permute.xlu0 %1628
      %1630 = vrot.lane.b32.xlu0 %v1555, 17
      %v1631 = vpop.permute.xlu0 %1630
      %1632 = vrot.lane.b32.xlu0 %v1556, 17
      %v1633 = vpop.permute.xlu0 %1632
      %1634 = vrot.lane.b32.xlu0 %v1561, 17
      %v1635 = vpop.permute.xlu0 %1634
      %1636 = vrot.lane.b32.xlu0 %v1566, 17
      %v1637 = vpop.permute.xlu0 %1636
      %1638 = vrot.lane.b32.xlu0 %v1567, 17
      %v1639 = vpop.permute.xlu0 %1638
      %1640 = vrot.lane.b32.xlu0 %v1572, 17
      %v1641 = vpop.permute.xlu0 %1640
      %1642 = vrot.lane.b32.xlu0 %v1577, 17
      %v1643 = vpop.permute.xlu0 %1642
      %1644 = vrot.lane.b32.xlu0 %v1578, 17
      %v1645 = vpop.permute.xlu0 %1644
      %1646 = vrot.lane.b32.xlu0 %v1583, 17
      %v1647 = vpop.permute.xlu0 %1646
      %1648 = vrot.lane.b32.xlu0 %v1588, 17
      %v1649 = vpop.permute.xlu0 %1648
      %1650 = vrot.lane.b32.xlu0 %v1589, 17
      %v1651 = vpop.permute.xlu0 %1650
      %v1652 = vsel %vm335, %v1599, %v1601
      %v1653 = vsel %vm335, %v1601, %v1603
      %v1654 = vsel %vm335, %v1605, %v1607
      %v1655 = vsel %vm335, %v1607, %v1609
      %v1656 = vsel %vm335, %v1611, %v1613
      %v1657 = vsel %vm335, %v1613, %v1615
      %v1658 = vsel %vm335, %v1617, %v1619
      %v1659 = vsel %vm335, %v1619, %v1621
      %v1660 = vsel %vm335, %v1623, %v1625
      %v1661 = vsel %vm335, %v1625, %v1627
      %v1662 = vsel %vm335, %v1629, %v1631
      %v1663 = vsel %vm335, %v1631, %v1633
      %v1664 = vsel %vm335, %v1635, %v1637
      %v1665 = vsel %vm335, %v1637, %v1639
      %v1666 = vsel %vm335, %v1641, %v1643
      %v1667 = vsel %vm335, %v1643, %v1645
      %v1668 = vsel %vm335, %v1647, %v1649
      %v1669 = vsel %vm335, %v1649, %v1651
      %v1689 = vsel %vm529, %v1479, 0
      %1691 = vmatprep.subr.mxu0 0.0
      %1692 = vmatpush1.msra.mxu0 0.0
      %1693 = vmatprep.subr.mxu0 0.0
      %1694 = vmatpush1.msra.mxu0 0.0
      %1695 = vmatprep.subr.mxu0 0.0
      %1696 = vmatpush1.msra.mxu0 0.0
      %1697 = vmatprep.subr.mxu0 0.0
      %1698 = vmatpush1.msra.mxu0 0.0
      %1699 = vmatprep.subr.mxu0 0.0
      %1700 = vmatpush1.msra.mxu0 0.0
      %1701 = vmatprep.subr.mxu0 0.0
      %1702 = vmatpush1.msra.mxu0 0.0
      %1703 = vmatprep.subr.mxu0 0.0
      %1704 = vmatpush1.msra.mxu0 0.0
      %1705 = vmatprep.subr.mxu0 %v1669
      %1706 = vmatpush1.msra.mxu0 %v1668
      %1707 = vmatprep.subr.mxu0 %v1667
      %1708 = vmatpush1.msra.mxu0 %v1666
      %1709 = vmatprep.subr.mxu0 %v1665
      %1710 = vmatpush1.msra.mxu0 %v1664
      %1711 = vmatprep.subr.mxu0 %v1663
      %1712 = vmatpush1.msra.mxu0 %v1662
      %1713 = vmatprep.subr.mxu0 %v1661
      %1714 = vmatpush1.msra.mxu0 %v1660
      %1715 = vmatprep.subr.mxu0 %v1659
      %1716 = vmatpush1.msra.mxu0 %v1658
      %1717 = vmatprep.subr.mxu0 %v1657
      %1718 = vmatpush1.msra.mxu0 %v1656
      %1719 = vmatprep.subr.mxu0 %v1655
      %1720 = vmatpush1.msra.mxu0 %v1654
      %1721 = vmatprep.subr.mxu0 %v1653
      %1722 = vmatpush1.msra.mxu0 %v1652
      %1723 = vmatprep.subr.mxu0 0.0
      %1724 = vmatpush2.msra.mxu0 0.0
      %1725 = vmatprep.subr.mxu0 0.0
      %1726 = vmatpush2.msra.mxu0 0.0
      %1727 = vmatprep.subr.mxu0 0.0
      %1728 = vmatpush2.msra.mxu0 0.0
      %1729 = vmatprep.subr.mxu0 0.0
      %1730 = vmatpush2.msra.mxu0 0.0
      %1731 = vmatprep.subr.mxu0 0.0
      %1732 = vmatpush2.msra.mxu0 0.0
      %1733 = vmatprep.subr.mxu0 0.0
      %1734 = vmatpush2.msra.mxu0 0.0
      %1735 = vmatprep.subr.mxu0 0.0
      %1736 = vmatpush2.msra.mxu0 0.0
      %1737 = vmatprep.subr.mxu0 0.0
      %1738 = vmatpush2.msra.mxu0 0.0
      %1739 = vmatprep.subr.mxu0 0.0
      %1740 = vmatpush2.msra.mxu0 0.0
      %1741 = vmatprep.subr.mxu0 0.0
      %1742 = vmatpush2.msra.mxu0 0.0
      %1743 = vmatprep.subr.mxu0 0.0
      %1744 = vmatpush2.msra.mxu0 0.0
      %1745 = vmatprep.subr.mxu0 0.0
      %1746 = vmatpush2.msra.mxu0 0.0
      %1747 = vmatprep.subr.mxu0 0.0
      %1748 = vmatpush2.msra.mxu0 0.0
      %1749 = vmatprep.subr.mxu0 0.0
      %1750 = vmatpush2.msra.mxu0 0.0
      %1751 = vmatprep.subr.mxu0 0.0
      %1752 = vmatpush2.msra.mxu0 0.0
      %1753 = vmatprep.subr.mxu0 0.0
      %1754 = vmatpush2.msra.mxu0 0.0
      %1755 = vmatprep.mubr.f32.mxu0 0.0
      %1756 = vmatmul.mubr.f32.gmra.mxu0 %v1689
      %v1757 = vpop.f32.mrf.mxu0
      %v1758 = vadd.f32 %v1593, %v1757
      %v1759 = vpop.f32.mrf.mxu0
      %v1760 = vadd.f32 %v1593, %v1759
      %1761 = vdwg.mxu0
      %v1762 = vmul.f32 %v1758, 0.5
      %v1763 = vmul.f32 %v1760, 0.5
      %v1764 = vmul.f32 %v1758, 0.70710677
      %v1765 = vmul.f32 %v1760, 0.70710677
      %v1766 = verf.f32.pop %v1764
      %v1767 = verf.f32.pop %v1765
      %v1768 = vadd.f32 %v1766, 1.0
      %v1769 = vadd.f32 %v1767, 1.0
      %v1770 = vmul.f32 %v1762, %v1768
      %v1771 = vmul.f32 %v1763, %v1769
      %s1772 = scalar_lea.vmem %s3, 16
      %v1773 = vld [vmem:[%s1772] sm:$0xff]
      %s1774 = scalar_lea.vmem %s4, 16
      %v1775 = vld [vmem:[%s1774] sm:$0xff]
      %1776 = vst [vmem:[#allocation2 + $0x8] sm:$0xff] %v1770
      %1777 = vst [vmem:[#allocation2 + $0x10] sm:$0xff] %v1771
      %v1778 = vld [vmem:[#allocation2] sm:$0xff]
      %v1779 = vld [vmem:[#allocation2 + $0x8] sm:$0xff]
      %v1780 = vld [vmem:[#allocation2 + $0x10] sm:$0xff]
      %v1781 = vmul.f32 %v1778, %v267
      %v1782 = vmul.f32 %v1779, %v271
      %v1783 = vmul.f32 %v1780, %v269
      %v1784 = vmul.f32 %v1778, %v281
      %v1785 = vmul.f32 %v1779, %v285
      %v1786 = vmul.f32 %v1780, %v283
      %v1787 = vmul.f32 %v1778, %v293
      %v1788 = vmul.f32 %v1779, %v297
      %v1789 = vmul.f32 %v1780, %v295
      %v1790 = vld [vmem:[#allocation2 + $0x8] sm:$0xff]
      %v1791 = vld [vmem:[#allocation2 + $0x10] sm:$0xff]
      %v1792 = vld [vmem:[#allocation2 + $0x18] sm:$0xff]
      %v1793 = vmul.f32 %v1790, %v308
      %v1794 = vmul.f32 %v1791, %v312
      %v1795 = vmul.f32 %v1792, %v310
      %v1796 = vmul.f32 %v1790, %v320
      %v1797 = vmul.f32 %v1791, %v324
      %v1798 = vmul.f32 %v1792, %v322
      %v1799 = vmul.f32 %v1790, %v332
      %v1800 = vmul.f32 %v1791, %v336
      %v1801 = vmul.f32 %v1792, %v334
      %1805 = vrot.lane.b32.xlu0 %v1778, 127
      %v1806 = vpop.permute.xlu0 %1805
      %1807 = vrot.lane.b32.xlu0 %v1779, 127
      %v1808 = vpop.permute.xlu0 %1807
      %1809 = vrot.lane.b32.xlu0 %v1780, 127
      %v1810 = vpop.permute.xlu0 %1809
      %v1811 = vsel %vm296, %v1806, %v1808
      %v1812 = vsel %vm296, %v1808, %v1810
      %1816 = vrot.lane.b32.xlu0 %v1784, 126
      %v1817 = vpop.permute.xlu0 %1816
      %1818 = vrot.lane.b32.xlu0 %v1785, 126
      %v1819 = vpop.permute.xlu0 %1818
      %1820 = vrot.lane.b32.xlu0 %v1786, 126
      %v1821 = vpop.permute.xlu0 %1820
      %v1822 = vsel %vm363, %v1817, %v1819
      %v1823 = vsel %vm363, %v1819, %v1821
      %1827 = vrot.lane.b32.xlu0 %v1787, 112
      %v1828 = vpop.permute.xlu0 %1827
      %1829 = vrot.lane.b32.xlu0 %v1788, 112
      %v1830 = vpop.permute.xlu0 %1829
      %1831 = vrot.lane.b32.xlu0 %v1789, 112
      %v1832 = vpop.permute.xlu0 %1831
      %v1833 = vsel %vm375, %v1828, %v1830
      %v1834 = vsel %vm375, %v1830, %v1832
      %1835 = vrot.lane.b32.xlu0 %v1779, 111
      %v1836 = vpop.permute.xlu0 %1835
      %1837 = vrot.lane.b32.xlu0 %v1780, 111
      %v1838 = vpop.permute.xlu0 %1837
      %v1839 = vsel %vm270, %v1836, %v1838
      %1843 = vrot.lane.b32.xlu0 %v1793, 110
      %v1844 = vpop.permute.xlu0 %1843
      %1845 = vrot.lane.b32.xlu0 %v1794, 110
      %v1846 = vpop.permute.xlu0 %1845
      %1847 = vrot.lane.b32.xlu0 %v1795, 110
      %v1848 = vpop.permute.xlu0 %1847
      %v1849 = vsel %vm392, %v1844, %v1846
      %v1850 = vsel %vm392, %v1846, %v1848
      %1854 = vrot.lane.b32.xlu0 %v1796, 96
      %v1855 = vpop.permute.xlu0 %1854
      %1856 = vrot.lane.b32.xlu0 %v1797, 96
      %v1857 = vpop.permute.xlu0 %1856
      %1858 = vrot.lane.b32.xlu0 %v1798, 96
      %v1859 = vpop.permute.xlu0 %1858
      %v1860 = vsel %vm404, %v1855, %v1857
      %v1861 = vsel %vm404, %v1857, %v1859
      %1865 = vrot.lane.b32.xlu0 %v1790, 95
      %v1866 = vpop.permute.xlu0 %1865
      %1867 = vrot.lane.b32.xlu0 %v1791, 95
      %v1868 = vpop.permute.xlu0 %1867
      %1869 = vrot.lane.b32.xlu0 %v1792, 95
      %v1870 = vpop.permute.xlu0 %1869
      %v1871 = vsel %vm416, %v1866, %v1868
      %v1872 = vsel %vm416, %v1868, %v1870
      %1876 = vrot.lane.b32.xlu0 %v1799, 94
      %v1877 = vpop.permute.xlu0 %1876
      %1878 = vrot.lane.b32.xlu0 %v1800, 94
      %v1879 = vpop.permute.xlu0 %1878
      %1880 = vrot.lane.b32.xlu0 %v1801, 94
      %v1881 = vpop.permute.xlu0 %1880
      %v1882 = vsel %vm428, %v1877, %v1879
      %v1883 = vsel %vm428, %v1879, %v1881
      %1885 = vset.pattern.permute.xlu0 0
      %1886 = vperm.xlu0 %1885, %v1775
      %v1887 = vpop.permute.xlu0 %1886
      %1892 = vrot.lane.b32.xlu0 %v1781, 17
      %v1893 = vpop.permute.xlu0 %1892
      %1894 = vrot.lane.b32.xlu0 %v1782, 17
      %v1895 = vpop.permute.xlu0 %1894
      %1896 = vrot.lane.b32.xlu0 %v1783, 17
      %v1897 = vpop.permute.xlu0 %1896
      %1898 = vrot.lane.b32.xlu0 %v1811, 17
      %v1899 = vpop.permute.xlu0 %1898
      %1900 = vrot.lane.b32.xlu0 %v1812, 17
      %v1901 = vpop.permute.xlu0 %1900
      %1902 = vrot.lane.b32.xlu0 %v1810, 17
      %v1903 = vpop.permute.xlu0 %1902
      %1904 = vrot.lane.b32.xlu0 %v1822, 17
      %v1905 = vpop.permute.xlu0 %1904
      %1906 = vrot.lane.b32.xlu0 %v1823, 17
      %v1907 = vpop.permute.xlu0 %1906
      %1908 = vrot.lane.b32.xlu0 %v1821, 17
      %v1909 = vpop.permute.xlu0 %1908
      %1910 = vrot.lane.b32.xlu0 %v1833, 17
      %v1911 = vpop.permute.xlu0 %1910
      %1912 = vrot.lane.b32.xlu0 %v1834, 17
      %v1913 = vpop.permute.xlu0 %1912
      %1914 = vrot.lane.b32.xlu0 %v1832, 17
      %v1915 = vpop.permute.xlu0 %1914
      %1916 = vrot.lane.b32.xlu0 %v1836, 17
      %v1917 = vpop.permute.xlu0 %1916
      %1918 = vrot.lane.b32.xlu0 %v1839, 17
      %v1919 = vpop.permute.xlu0 %1918
      %1920 = vrot.lane.b32.xlu0 %v1838, 17
      %v1921 = vpop.permute.xlu0 %1920
      %1922 = vrot.lane.b32.xlu0 %v1844, 17
      %v1923 = vpop.permute.xlu0 %1922
      %1924 = vrot.lane.b32.xlu0 %v1849, 17
      %v1925 = vpop.permute.xlu0 %1924
      %1926 = vrot.lane.b32.xlu0 %v1850, 17
      %v1927 = vpop.permute.xlu0 %1926
      %1928 = vrot.lane.b32.xlu0 %v1855, 17
      %v1929 = vpop.permute.xlu0 %1928
      %1930 = vrot.lane.b32.xlu0 %v1860, 17
      %v1931 = vpop.permute.xlu0 %1930
      %1932 = vrot.lane.b32.xlu0 %v1861, 17
      %v1933 = vpop.permute.xlu0 %1932
      %1934 = vrot.lane.b32.xlu0 %v1866, 17
      %v1935 = vpop.permute.xlu0 %1934
      %1936 = vrot.lane.b32.xlu0 %v1871, 17
      %v1937 = vpop.permute.xlu0 %1936
      %1938 = vrot.lane.b32.xlu0 %v1872, 17
      %v1939 = vpop.permute.xlu0 %1938
      %1940 = vrot.lane.b32.xlu0 %v1877, 17
      %v1941 = vpop.permute.xlu0 %1940
      %1942 = vrot.lane.b32.xlu0 %v1882, 17
      %v1943 = vpop.permute.xlu0 %1942
      %1944 = vrot.lane.b32.xlu0 %v1883, 17
      %v1945 = vpop.permute.xlu0 %1944
      %v1946 = vsel %vm335, %v1893, %v1895
      %v1947 = vsel %vm335, %v1895, %v1897
      %v1948 = vsel %vm335, %v1899, %v1901
      %v1949 = vsel %vm335, %v1901, %v1903
      %v1950 = vsel %vm335, %v1905, %v1907
      %v1951 = vsel %vm335, %v1907, %v1909
      %v1952 = vsel %vm335, %v1911, %v1913
      %v1953 = vsel %vm335, %v1913, %v1915
      %v1954 = vsel %vm335, %v1917, %v1919
      %v1955 = vsel %vm335, %v1919, %v1921
      %v1956 = vsel %vm335, %v1923, %v1925
      %v1957 = vsel %vm335, %v1925, %v1927
      %v1958 = vsel %vm335, %v1929, %v1931
      %v1959 = vsel %vm335, %v1931, %v1933
      %v1960 = vsel %vm335, %v1935, %v1937
      %v1961 = vsel %vm335, %v1937, %v1939
      %v1962 = vsel %vm335, %v1941, %v1943
      %v1963 = vsel %vm335, %v1943, %v1945
      %v1983 = vsel %vm529, %v1773, 0
      %1985 = vmatprep.subr.mxu0 0.0
      %1986 = vmatpush1.msra.mxu0 0.0
      %1987 = vmatprep.subr.mxu0 0.0
      %1988 = vmatpush1.msra.mxu0 0.0
      %1989 = vmatprep.subr.mxu0 0.0
      %1990 = vmatpush1.msra.mxu0 0.0
      %1991 = vmatprep.subr.mxu0 0.0
      %1992 = vmatpush1.msra.mxu0 0.0
      %1993 = vmatprep.subr.mxu0 0.0
      %1994 = vmatpush1.msra.mxu0 0.0
      %1995 = vmatprep.subr.mxu0 0.0
      %1996 = vmatpush1.msra.mxu0 0.0
      %1997 = vmatprep.subr.mxu0 0.0
      %1998 = vmatpush1.msra.mxu0 0.0
      %1999 = vmatprep.subr.mxu0 %v1963
      %2000 = vmatpush1.msra.mxu0 %v1962
      %2001 = vmatprep.subr.mxu0 %v1961
      %2002 = vmatpush1.msra.mxu0 %v1960
      %2003 = vmatprep.subr.mxu0 %v1959
      %2004 = vmatpush1.msra.mxu0 %v1958
      %2005 = vmatprep.subr.mxu0 %v1957
      %2006 = vmatpush1.msra.mxu0 %v1956
      %2007 = vmatprep.subr.mxu0 %v1955
      %2008 = vmatpush1.msra.mxu0 %v1954
      %2009 = vmatprep.subr.mxu0 %v1953
      %2010 = vmatpush1.msra.mxu0 %v1952
      %2011 = vmatprep.subr.mxu0 %v1951
      %2012 = vmatpush1.msra.mxu0 %v1950
      %2013 = vmatprep.subr.mxu0 %v1949
      %2014 = vmatpush1.msra.mxu0 %v1948
      %2015 = vmatprep.subr.mxu0 %v1947
      %2016 = vmatpush1.msra.mxu0 %v1946
      %2017 = vmatprep.subr.mxu0 0.0
      %2018 = vmatpush2.msra.mxu0 0.0
      %2019 = vmatprep.subr.mxu0 0.0
      %2020 = vmatpush2.msra.mxu0 0.0
      %2021 = vmatprep.subr.mxu0 0.0
      %2022 = vmatpush2.msra.mxu0 0.0
      %2023 = vmatprep.subr.mxu0 0.0
      %2024 = vmatpush2.msra.mxu0 0.0
      %2025 = vmatprep.subr.mxu0 0.0
      %2026 = vmatpush2.msra.mxu0 0.0
      %2027 = vmatprep.subr.mxu0 0.0
      %2028 = vmatpush2.msra.mxu0 0.0
      %2029 = vmatprep.subr.mxu0 0.0
      %2030 = vmatpush2.msra.mxu0 0.0
      %2031 = vmatprep.subr.mxu0 0.0
      %2032 = vmatpush2.msra.mxu0 0.0
      %2033 = vmatprep.subr.mxu0 0.0
      %2034 = vmatpush2.msra.mxu0 0.0
      %2035 = vmatprep.subr.mxu0 0.0
      %2036 = vmatpush2.msra.mxu0 0.0
      %2037 = vmatprep.subr.mxu0 0.0
      %2038 = vmatpush2.msra.mxu0 0.0
      %2039 = vmatprep.subr.mxu0 0.0
      %2040 = vmatpush2.msra.mxu0 0.0
      %2041 = vmatprep.subr.mxu0 0.0
      %2042 = vmatpush2.msra.mxu0 0.0
      %2043 = vmatprep.subr.mxu0 0.0
      %2044 = vmatpush2.msra.mxu0 0.0
      %2045 = vmatprep.subr.mxu0 0.0
      %2046 = vmatpush2.msra.mxu0 0.0
      %2047 = vmatprep.subr.mxu0 0.0
      %2048 = vmatpush2.msra.mxu0 0.0
      %2049 = vmatprep.mubr.f32.mxu0 0.0
      %2050 = vmatmul.mubr.f32.gmra.mxu0 %v1983
      %v2051 = vpop.f32.mrf.mxu0
      %v2052 = vadd.f32 %v1887, %v2051
      %v2053 = vpop.f32.mrf.mxu0
      %v2054 = vadd.f32 %v1887, %v2053
      %2055 = vdwg.mxu0
      %v2056 = vadd.f32 %v2052, %v1476
      %v2057 = vadd.f32 %v2054, %v1477
      %s2058 = scalar_lea.vmem %s1, 24
      %v2059 = vld [vmem:[%s2058] sm:$0xff]
      %s2060 = scalar_lea.vmem %s2, 24
      %v2061 = vld [vmem:[%s2060] sm:$0xff]
      %2062 = vst [vmem:[#allocation2 + $0x8] sm:$0xff] %v2056
      %2063 = vst [vmem:[#allocation2 + $0x10] sm:$0xff] %v2057
      %v2064 = vld [vmem:[#allocation2] sm:$0xff]
      %v2065 = vld [vmem:[#allocation2 + $0x8] sm:$0xff]
      %v2066 = vld [vmem:[#allocation2 + $0x10] sm:$0xff]
      %v2067 = vmul.f32 %v2064, %v267
      %v2068 = vmul.f32 %v2065, %v271
      %v2069 = vmul.f32 %v2066, %v269
      %v2070 = vmul.f32 %v2064, %v281
      %v2071 = vmul.f32 %v2065, %v285
      %v2072 = vmul.f32 %v2066, %v283
      %v2073 = vmul.f32 %v2064, %v293
      %v2074 = vmul.f32 %v2065, %v297
      %v2075 = vmul.f32 %v2066, %v295
      %v2076 = vld [vmem:[#allocation2 + $0x8] sm:$0xff]
      %v2077 = vld [vmem:[#allocation2 + $0x10] sm:$0xff]
      %v2078 = vld [vmem:[#allocation2 + $0x18] sm:$0xff]
      %v2079 = vmul.f32 %v2076, %v308
      %v2080 = vmul.f32 %v2077, %v312
      %v2081 = vmul.f32 %v2078, %v310
      %v2082 = vmul.f32 %v2076, %v320
      %v2083 = vmul.f32 %v2077, %v324
      %v2084 = vmul.f32 %v2078, %v322
      %v2085 = vmul.f32 %v2076, %v332
      %v2086 = vmul.f32 %v2077, %v336
      %v2087 = vmul.f32 %v2078, %v334
      %2091 = vrot.lane.b32.xlu0 %v2064, 127
      %v2092 = vpop.permute.xlu0 %2091
      %2093 = vrot.lane.b32.xlu0 %v2065, 127
      %v2094 = vpop.permute.xlu0 %2093
      %2095 = vrot.lane.b32.xlu0 %v2066, 127
      %v2096 = vpop.permute.xlu0 %2095
      %v2097 = vsel %vm296, %v2092, %v2094
      %v2098 = vsel %vm296, %v2094, %v2096
      %2102 = vrot.lane.b32.xlu0 %v2070, 126
      %v2103 = vpop.permute.xlu0 %2102
      %2104 = vrot.lane.b32.xlu0 %v2071, 126
      %v2105 = vpop.permute.xlu0 %2104
      %2106 = vrot.lane.b32.xlu0 %v2072, 126
      %v2107 = vpop.permute.xlu0 %2106
      %v2108 = vsel %vm363, %v2103, %v2105
      %v2109 = vsel %vm363, %v2105, %v2107
      %2113 = vrot.lane.b32.xlu0 %v2073, 112
      %v2114 = vpop.permute.xlu0 %2113
      %2115 = vrot.lane.b32.xlu0 %v2074, 112
      %v2116 = vpop.permute.xlu0 %2115
      %2117 = vrot.lane.b32.xlu0 %v2075, 112
      %v2118 = vpop.permute.xlu0 %2117
      %v2119 = vsel %vm375, %v2114, %v2116
      %v2120 = vsel %vm375, %v2116, %v2118
      %2121 = vrot.lane.b32.xlu0 %v2065, 111
      %v2122 = vpop.permute.xlu0 %2121
      %2123 = vrot.lane.b32.xlu0 %v2066, 111
      %v2124 = vpop.permute.xlu0 %2123
      %v2125 = vsel %vm270, %v2122, %v2124
      %2129 = vrot.lane.b32.xlu0 %v2079, 110
      %v2130 = vpop.permute.xlu0 %2129
      %2131 = vrot.lane.b32.xlu0 %v2080, 110
      %v2132 = vpop.permute.xlu0 %2131
      %2133 = vrot.lane.b32.xlu0 %v2081, 110
      %v2134 = vpop.permute.xlu0 %2133
      %v2135 = vsel %vm392, %v2130, %v2132
      %v2136 = vsel %vm392, %v2132, %v2134
      %2140 = vrot.lane.b32.xlu0 %v2082, 96
      %v2141 = vpop.permute.xlu0 %2140
      %2142 = vrot.lane.b32.xlu0 %v2083, 96
      %v2143 = vpop.permute.xlu0 %2142
      %2144 = vrot.lane.b32.xlu0 %v2084, 96
      %v2145 = vpop.permute.xlu0 %2144
      %v2146 = vsel %vm404, %v2141, %v2143
      %v2147 = vsel %vm404, %v2143, %v2145
      %2151 = vrot.lane.b32.xlu0 %v2076, 95
      %v2152 = vpop.permute.xlu0 %2151
      %2153 = vrot.lane.b32.xlu0 %v2077, 95
      %v2154 = vpop.permute.xlu0 %2153
      %2155 = vrot.lane.b32.xlu0 %v2078, 95
      %v2156 = vpop.permute.xlu0 %2155
      %v2157 = vsel %vm416, %v2152, %v2154
      %v2158 = vsel %vm416, %v2154, %v2156
      %2162 = vrot.lane.b32.xlu0 %v2085, 94
      %v2163 = vpop.permute.xlu0 %2162
      %2164 = vrot.lane.b32.xlu0 %v2086, 94
      %v2165 = vpop.permute.xlu0 %2164
      %2166 = vrot.lane.b32.xlu0 %v2087, 94
      %v2167 = vpop.permute.xlu0 %2166
      %v2168 = vsel %vm428, %v2163, %v2165
      %v2169 = vsel %vm428, %v2165, %v2167
      %2171 = vset.pattern.permute.xlu0 0
      %2172 = vperm.xlu0 %2171, %v2061
      %v2173 = vpop.permute.xlu0 %2172
      %2178 = vrot.lane.b32.xlu0 %v2067, 17
      %v2179 = vpop.permute.xlu0 %2178
      %2180 = vrot.lane.b32.xlu0 %v2068, 17
      %v2181 = vpop.permute.xlu0 %2180
      %2182 = vrot.lane.b32.xlu0 %v2069, 17
      %v2183 = vpop.permute.xlu0 %2182
      %2184 = vrot.lane.b32.xlu0 %v2097, 17
      %v2185 = vpop.permute.xlu0 %2184
      %2186 = vrot.lane.b32.xlu0 %v2098, 17
      %v2187 = vpop.permute.xlu0 %2186
      %2188 = vrot.lane.b32.xlu0 %v2096, 17
      %v2189 = vpop.permute.xlu0 %2188
      %2190 = vrot.lane.b32.xlu0 %v2108, 17
      %v2191 = vpop.permute.xlu0 %2190
      %2192 = vrot.lane.b32.xlu0 %v2109, 17
      %v2193 = vpop.permute.xlu0 %2192
      %2194 = vrot.lane.b32.xlu0 %v2107, 17
      %v2195 = vpop.permute.xlu0 %2194
      %2196 = vrot.lane.b32.xlu0 %v2119, 17
      %v2197 = vpop.permute.xlu0 %2196
      %2198 = vrot.lane.b32.xlu0 %v2120, 17
      %v2199 = vpop.permute.xlu0 %2198
      %2200 = vrot.lane.b32.xlu0 %v2118, 17
      %v2201 = vpop.permute.xlu0 %2200
      %2202 = vrot.lane.b32.xlu0 %v2122, 17
      %v2203 = vpop.permute.xlu0 %2202
      %2204 = vrot.lane.b32.xlu0 %v2125, 17
      %v2205 = vpop.permute.xlu0 %2204
      %2206 = vrot.lane.b32.xlu0 %v2124, 17
      %v2207 = vpop.permute.xlu0 %2206
      %2208 = vrot.lane.b32.xlu0 %v2130, 17
      %v2209 = vpop.permute.xlu0 %2208
      %2210 = vrot.lane.b32.xlu0 %v2135, 17
      %v2211 = vpop.permute.xlu0 %2210
      %2212 = vrot.lane.b32.xlu0 %v2136, 17
      %v2213 = vpop.permute.xlu0 %2212
      %2214 = vrot.lane.b32.xlu0 %v2141, 17
      %v2215 = vpop.permute.xlu0 %2214
      %2216 = vrot.lane.b32.xlu0 %v2146, 17
      %v2217 = vpop.permute.xlu0 %2216
      %2218 = vrot.lane.b32.xlu0 %v2147, 17
      %v2219 = vpop.permute.xlu0 %2218
      %2220 = vrot.lane.b32.xlu0 %v2152, 17
      %v2221 = vpop.permute.xlu0 %2220
      %2222 = vrot.lane.b32.xlu0 %v2157, 17
      %v2223 = vpop.permute.xlu0 %2222
      %2224 = vrot.lane.b32.xlu0 %v2158, 17
      %v2225 = vpop.permute.xlu0 %2224
      %2226 = vrot.lane.b32.xlu0 %v2163, 17
      %v2227 = vpop.permute.xlu0 %2226
      %2228 = vrot.lane.b32.xlu0 %v2168, 17
      %v2229 = vpop.permute.xlu0 %2228
      %2230 = vrot.lane.b32.xlu0 %v2169, 17
      %v2231 = vpop.permute.xlu0 %2230
      %v2232 = vsel %vm335, %v2179, %v2181
      %v2233 = vsel %vm335, %v2181, %v2183
      %v2234 = vsel %vm335, %v2185, %v2187
      %v2235 = vsel %vm335, %v2187, %v2189
      %v2236 = vsel %vm335, %v2191, %v2193
      %v2237 = vsel %vm335, %v2193, %v2195
      %v2238 = vsel %vm335, %v2197, %v2199
      %v2239 = vsel %vm335, %v2199, %v2201
      %v2240 = vsel %vm335, %v2203, %v2205
      %v2241 = vsel %vm335, %v2205, %v2207
      %v2242 = vsel %vm335, %v2209, %v2211
      %v2243 = vsel %vm335, %v2211, %v2213
      %v2244 = vsel %vm335, %v2215, %v2217
      %v2245 = vsel %vm335, %v2217, %v2219
      %v2246 = vsel %vm335, %v2221, %v2223
      %v2247 = vsel %vm335, %v2223, %v2225
      %v2248 = vsel %vm335, %v2227, %v2229
      %v2249 = vsel %vm335, %v2229, %v2231
      %v2269 = vsel %vm529, %v2059, 0
      %2271 = vmatprep.subr.mxu0 0.0
      %2272 = vmatpush1.msra.mxu0 0.0
      %2273 = vmatprep.subr.mxu0 0.0
      %2274 = vmatpush1.msra.mxu0 0.0
      %2275 = vmatprep.subr.mxu0 0.0
      %2276 = vmatpush1.msra.mxu0 0.0
      %2277 = vmatprep.subr.mxu0 0.0
      %2278 = vmatpush1.msra.mxu0 0.0
      %2279 = vmatprep.subr.mxu0 0.0
      %2280 = vmatpush1.msra.mxu0 0.0
      %2281 = vmatprep.subr.mxu0 0.0
      %2282 = vmatpush1.msra.mxu0 0.0
      %2283 = vmatprep.subr.mxu0 0.0
      %2284 = vmatpush1.msra.mxu0 0.0
      %2285 = vmatprep.subr.mxu0 %v2249
      %2286 = vmatpush1.msra.mxu0 %v2248
      %2287 = vmatprep.subr.mxu0 %v2247
      %2288 = vmatpush1.msra.mxu0 %v2246
      %2289 = vmatprep.subr.mxu0 %v2245
      %2290 = vmatpush1.msra.mxu0 %v2244
      %2291 = vmatprep.subr.mxu0 %v2243
      %2292 = vmatpush1.msra.mxu0 %v2242
      %2293 = vmatprep.subr.mxu0 %v2241
      %2294 = vmatpush1.msra.mxu0 %v2240
      %2295 = vmatprep.subr.mxu0 %v2239
      %2296 = vmatpush1.msra.mxu0 %v2238
      %2297 = vmatprep.subr.mxu0 %v2237
      %2298 = vmatpush1.msra.mxu0 %v2236
      %2299 = vmatprep.subr.mxu0 %v2235
      %2300 = vmatpush1.msra.mxu0 %v2234
      %2301 = vmatprep.subr.mxu0 %v2233
      %2302 = vmatpush1.msra.mxu0 %v2232
      %2303 = vmatprep.subr.mxu0 0.0
      %2304 = vmatpush2.msra.mxu0 0.0
      %2305 = vmatprep.subr.mxu0 0.0
      %2306 = vmatpush2.msra.mxu0 0.0
      %2307 = vmatprep.subr.mxu0 0.0
      %2308 = vmatpush2.msra.mxu0 0.0
      %2309 = vmatprep.subr.mxu0 0.0
      %2310 = vmatpush2.msra.mxu0 0.0
      %2311 = vmatprep.subr.mxu0 0.0
      %2312 = vmatpush2.msra.mxu0 0.0
      %2313 = vmatprep.subr.mxu0 0.0
      %2314 = vmatpush2.msra.mxu0 0.0
      %2315 = vmatprep.subr.mxu0 0.0
      %2316 = vmatpush2.msra.mxu0 0.0
      %2317 = vmatprep.subr.mxu0 0.0
      %2318 = vmatpush2.msra.mxu0 0.0
      %2319 = vmatprep.subr.mxu0 0.0
      %2320 = vmatpush2.msra.mxu0 0.0
      %2321 = vmatprep.subr.mxu0 0.0
      %2322 = vmatpush2.msra.mxu0 0.0
      %2323 = vmatprep.subr.mxu0 0.0
      %2324 = vmatpush2.msra.mxu0 0.0
      %2325 = vmatprep.subr.mxu0 0.0
      %2326 = vmatpush2.msra.mxu0 0.0
      %2327 = vmatprep.subr.mxu0 0.0
      %2328 = vmatpush2.msra.mxu0 0.0
      %2329 = vmatprep.subr.mxu0 0.0
      %2330 = vmatpush2.msra.mxu0 0.0
      %2331 = vmatprep.subr.mxu0 0.0
      %2332 = vmatpush2.msra.mxu0 0.0
      %2333 = vmatprep.subr.mxu0 0.0
      %2334 = vmatpush2.msra.mxu0 0.0
      %2335 = vmatprep.mubr.f32.mxu0 0.0
      %2336 = vmatmul.mubr.f32.gmra.mxu0 %v2269
      %v2337 = vpop.f32.mrf.mxu0
      %v2338 = vadd.f32 %v2173, %v2337
      %v2339 = vpop.f32.mrf.mxu0
      %v2340 = vadd.f32 %v2173, %v2339
      %2341 = vdwg.mxu0
      %v2342 = vmul.f32 %v2338, 0.5
      %v2343 = vmul.f32 %v2340, 0.5
      %v2344 = vmul.f32 %v2338, 0.70710677
      %v2345 = vmul.f32 %v2340, 0.70710677
      %v2346 = verf.f32.pop %v2344
      %v2347 = verf.f32.pop %v2345
      %v2348 = vadd.f32 %v2346, 1.0
      %v2349 = vadd.f32 %v2347, 1.0
      %v2350 = vmul.f32 %v2342, %v2348
      %v2351 = vmul.f32 %v2343, %v2349
      %s2352 = scalar_lea.vmem %s3, 24
      %v2353 = vld [vmem:[%s2352] sm:$0xff]
      %s2354 = scalar_lea.vmem %s4, 24
      %v2355 = vld [vmem:[%s2354] sm:$0xff]
      %2356 = vst [vmem:[#allocation2 + $0x8] sm:$0xff] %v2350
      %2357 = vst [vmem:[#allocation2 + $0x10] sm:$0xff] %v2351
      %v2358 = vld [vmem:[#allocation2] sm:$0xff]
      %v2359 = vld [vmem:[#allocation2 + $0x8] sm:$0xff]
      %v2360 = vld [vmem:[#allocation2 + $0x10] sm:$0xff]
      %v2361 = vmul.f32 %v2358, %v267
      %v2362 = vmul.f32 %v2359, %v271
      %v2363 = vmul.f32 %v2360, %v269
      %v2364 = vmul.f32 %v2358, %v281
      %v2365 = vmul.f32 %v2359, %v285
      %v2366 = vmul.f32 %v2360, %v283
      %v2367 = vmul.f32 %v2358, %v293
      %v2368 = vmul.f32 %v2359, %v297
      %v2369 = vmul.f32 %v2360, %v295
      %v2370 = vld [vmem:[#allocation2 + $0x8] sm:$0xff]
      %v2371 = vld [vmem:[#allocation2 + $0x10] sm:$0xff]
      %v2372 = vld [vmem:[#allocation2 + $0x18] sm:$0xff]
      %v2373 = vmul.f32 %v2370, %v308
      %v2374 = vmul.f32 %v2371, %v312
      %v2375 = vmul.f32 %v2372, %v310
      %v2376 = vmul.f32 %v2370, %v320
      %v2377 = vmul.f32 %v2371, %v324
      %v2378 = vmul.f32 %v2372, %v322
      %v2379 = vmul.f32 %v2370, %v332
      %v2380 = vmul.f32 %v2371, %v336
      %v2381 = vmul.f32 %v2372, %v334
      %2385 = vrot.lane.b32.xlu0 %v2358, 127
      %v2386 = vpop.permute.xlu0 %2385
      %2387 = vrot.lane.b32.xlu0 %v2359, 127
      %v2388 = vpop.permute.xlu0 %2387
      %2389 = vrot.lane.b32.xlu0 %v2360, 127
      %v2390 = vpop.permute.xlu0 %2389
      %v2391 = vsel %vm296, %v2386, %v2388
      %v2392 = vsel %vm296, %v2388, %v2390
      %2396 = vrot.lane.b32.xlu0 %v2364, 126
      %v2397 = vpop.permute.xlu0 %2396
      %2398 = vrot.lane.b32.xlu0 %v2365, 126
      %v2399 = vpop.permute.xlu0 %2398
      %2400 = vrot.lane.b32.xlu0 %v2366, 126
      %v2401 = vpop.permute.xlu0 %2400
      %v2402 = vsel %vm363, %v2397, %v2399
      %v2403 = vsel %vm363, %v2399, %v2401
      %2407 = vrot.lane.b32.xlu0 %v2367, 112
      %v2408 = vpop.permute.xlu0 %2407
      %2409 = vrot.lane.b32.xlu0 %v2368, 112
      %v2410 = vpop.permute.xlu0 %2409
      %2411 = vrot.lane.b32.xlu0 %v2369, 112
      %v2412 = vpop.permute.xlu0 %2411
      %v2413 = vsel %vm375, %v2408, %v2410
      %v2414 = vsel %vm375, %v2410, %v2412
      %2415 = vrot.lane.b32.xlu0 %v2359, 111
      %v2416 = vpop.permute.xlu0 %2415
      %2417 = vrot.lane.b32.xlu0 %v2360, 111
      %v2418 = vpop.permute.xlu0 %2417
      %v2419 = vsel %vm270, %v2416, %v2418
      %2423 = vrot.lane.b32.xlu0 %v2373, 110
      %v2424 = vpop.permute.xlu0 %2423
      %2425 = vrot.lane.b32.xlu0 %v2374, 110
      %v2426 = vpop.permute.xlu0 %2425
      %2427 = vrot.lane.b32.xlu0 %v2375, 110
      %v2428 = vpop.permute.xlu0 %2427
      %v2429 = vsel %vm392, %v2424, %v2426
      %v2430 = vsel %vm392, %v2426, %v2428
      %2434 = vrot.lane.b32.xlu0 %v2376, 96
      %v2435 = vpop.permute.xlu0 %2434
      %2436 = vrot.lane.b32.xlu0 %v2377, 96
      %v2437 = vpop.permute.xlu0 %2436
      %2438 = vrot.lane.b32.xlu0 %v2378, 96
      %v2439 = vpop.permute.xlu0 %2438
      %v2440 = vsel %vm404, %v2435, %v2437
      %v2441 = vsel %vm404, %v2437, %v2439
      %2445 = vrot.lane.b32.xlu0 %v2370, 95
      %v2446 = vpop.permute.xlu0 %2445
      %2447 = vrot.lane.b32.xlu0 %v2371, 95
      %v2448 = vpop.permute.xlu0 %2447
      %2449 = vrot.lane.b32.xlu0 %v2372, 95
      %v2450 = vpop.permute.xlu0 %2449
      %v2451 = vsel %vm416, %v2446, %v2448
      %v2452 = vsel %vm416, %v2448, %v2450
      %2456 = vrot.lane.b32.xlu0 %v2379, 94
      %v2457 = vpop.permute.xlu0 %2456
      %2458 = vrot.lane.b32.xlu0 %v2380, 94
      %v2459 = vpop.permute.xlu0 %2458
      %2460 = vrot.lane.b32.xlu0 %v2381, 94
      %v2461 = vpop.permute.xlu0 %2460
      %v2462 = vsel %vm428, %v2457, %v2459
      %v2463 = vsel %vm428, %v2459, %v2461
      %2465 = vset.pattern.permute.xlu0 0
      %2466 = vperm.xlu0 %2465, %v2355
      %v2467 = vpop.permute.xlu0 %2466
      %2472 = vrot.lane.b32.xlu0 %v2361, 17
      %v2473 = vpop.permute.xlu0 %2472
      %2474 = vrot.lane.b32.xlu0 %v2362, 17
      %v2475 = vpop.permute.xlu0 %2474
      %2476 = vrot.lane.b32.xlu0 %v2363, 17
      %v2477 = vpop.permute.xlu0 %2476
      %2478 = vrot.lane.b32.xlu0 %v2391, 17
      %v2479 = vpop.permute.xlu0 %2478
      %2480 = vrot.lane.b32.xlu0 %v2392, 17
      %v2481 = vpop.permute.xlu0 %2480
      %2482 = vrot.lane.b32.xlu0 %v2390, 17
      %v2483 = vpop.permute.xlu0 %2482
      %2484 = vrot.lane.b32.xlu0 %v2402, 17
      %v2485 = vpop.permute.xlu0 %2484
      %2486 = vrot.lane.b32.xlu0 %v2403, 17
      %v2487 = vpop.permute.xlu0 %2486
      %2488 = vrot.lane.b32.xlu0 %v2401, 17
      %v2489 = vpop.permute.xlu0 %2488
      %2490 = vrot.lane.b32.xlu0 %v2413, 17
      %v2491 = vpop.permute.xlu0 %2490
      %2492 = vrot.lane.b32.xlu0 %v2414, 17
      %v2493 = vpop.permute.xlu0 %2492
      %2494 = vrot.lane.b32.xlu0 %v2412, 17
      %v2495 = vpop.permute.xlu0 %2494
      %2496 = vrot.lane.b32.xlu0 %v2416, 17
      %v2497 = vpop.permute.xlu0 %2496
      %2498 = vrot.lane.b32.xlu0 %v2419, 17
      %v2499 = vpop.permute.xlu0 %2498
      %2500 = vrot.lane.b32.xlu0 %v2418, 17
      %v2501 = vpop.permute.xlu0 %2500
      %2502 = vrot.lane.b32.xlu0 %v2424, 17
      %v2503 = vpop.permute.xlu0 %2502
      %2504 = vrot.lane.b32.xlu0 %v2429, 17
      %v2505 = vpop.permute.xlu0 %2504
      %2506 = vrot.lane.b32.xlu0 %v2430, 17
      %v2507 = vpop.permute.xlu0 %2506
      %2508 = vrot.lane.b32.xlu0 %v2435, 17
      %v2509 = vpop.permute.xlu0 %2508
      %2510 = vrot.lane.b32.xlu0 %v2440, 17
      %v2511 = vpop.permute.xlu0 %2510
      %2512 = vrot.lane.b32.xlu0 %v2441, 17
      %v2513 = vpop.permute.xlu0 %2512
      %2514 = vrot.lane.b32.xlu0 %v2446, 17
      %v2515 = vpop.permute.xlu0 %2514
      %2516 = vrot.lane.b32.xlu0 %v2451, 17
      %v2517 = vpop.permute.xlu0 %2516
      %2518 = vrot.lane.b32.xlu0 %v2452, 17
      %v2519 = vpop.permute.xlu0 %2518
      %2520 = vrot.lane.b32.xlu0 %v2457, 17
      %v2521 = vpop.permute.xlu0 %2520
      %2522 = vrot.lane.b32.xlu0 %v2462, 17
      %v2523 = vpop.permute.xlu0 %2522
      %2524 = vrot.lane.b32.xlu0 %v2463, 17
      %v2525 = vpop.permute.xlu0 %2524
      %v2526 = vsel %vm335, %v2473, %v2475
      %v2527 = vsel %vm335, %v2475, %v2477
      %v2528 = vsel %vm335, %v2479, %v2481
      %v2529 = vsel %vm335, %v2481, %v2483
      %v2530 = vsel %vm335, %v2485, %v2487
      %v2531 = vsel %vm335, %v2487, %v2489
      %v2532 = vsel %vm335, %v2491, %v2493
      %v2533 = vsel %vm335, %v2493, %v2495
      %v2534 = vsel %vm335, %v2497, %v2499
      %v2535 = vsel %vm335, %v2499, %v2501
      %v2536 = vsel %vm335, %v2503, %v2505
      %v2537 = vsel %vm335, %v2505, %v2507
      %v2538 = vsel %vm335, %v2509, %v2511
      %v2539 = vsel %vm335, %v2511, %v2513
      %v2540 = vsel %vm335, %v2515, %v2517
      %v2541 = vsel %vm335, %v2517, %v2519
      %v2542 = vsel %vm335, %v2521, %v2523
      %v2543 = vsel %vm335, %v2523, %v2525
      %v2563 = vsel %vm529, %v2353, 0
      %2565 = vmatprep.subr.mxu0 0.0
      %2566 = vmatpush1.msra.mxu0 0.0
      %2567 = vmatprep.subr.mxu0 0.0
      %2568 = vmatpush1.msra.mxu0 0.0
      %2569 = vmatprep.subr.mxu0 0.0
      %2570 = vmatpush1.msra.mxu0 0.0
      %2571 = vmatprep.subr.mxu0 0.0
      %2572 = vmatpush1.msra.mxu0 0.0
      %2573 = vmatprep.subr.mxu0 0.0
      %2574 = vmatpush1.msra.mxu0 0.0
      %2575 = vmatprep.subr.mxu0 0.0
      %2576 = vmatpush1.msra.mxu0 0.0
      %2577 = vmatprep.subr.mxu0 0.0
      %2578 = vmatpush1.msra.mxu0 0.0
      %2579 = vmatprep.subr.mxu0 %v2543
      %2580 = vmatpush1.msra.mxu0 %v2542
      %2581 = vmatprep.subr.mxu0 %v2541
      %2582 = vmatpush1.msra.mxu0 %v2540
      %2583 = vmatprep.subr.mxu0 %v2539
      %2584 = vmatpush1.msra.mxu0 %v2538
      %2585 = vmatprep.subr.mxu0 %v2537
      %2586 = vmatpush1.msra.mxu0 %v2536
      %2587 = vmatprep.subr.mxu0 %v2535
      %2588 = vmatpush1.msra.mxu0 %v2534
      %2589 = vmatprep.subr.mxu0 %v2533
      %2590 = vmatpush1.msra.mxu0 %v2532
      %2591 = vmatprep.subr.mxu0 %v2531
      %2592 = vmatpush1.msra.mxu0 %v2530
      %2593 = vmatprep.subr.mxu0 %v2529
      %2594 = vmatpush1.msra.mxu0 %v2528
      %2595 = vmatprep.subr.mxu0 %v2527
      %2596 = vmatpush1.msra.mxu0 %v2526
      %2597 = vmatprep.subr.mxu0 0.0
      %2598 = vmatpush2.msra.mxu0 0.0
      %2599 = vmatprep.subr.mxu0 0.0
      %2600 = vmatpush2.msra.mxu0 0.0
      %2601 = vmatprep.subr.mxu0 0.0
      %2602 = vmatpush2.msra.mxu0 0.0
      %2603 = vmatprep.subr.mxu0 0.0
      %2604 = vmatpush2.msra.mxu0 0.0
      %2605 = vmatprep.subr.mxu0 0.0
      %2606 = vmatpush2.msra.mxu0 0.0
      %2607 = vmatprep.subr.mxu0 0.0
      %2608 = vmatpush2.msra.mxu0 0.0
      %2609 = vmatprep.subr.mxu0 0.0
      %2610 = vmatpush2.msra.mxu0 0.0
      %2611 = vmatprep.subr.mxu0 0.0
      %2612 = vmatpush2.msra.mxu0 0.0
      %2613 = vmatprep.subr.mxu0 0.0
      %2614 = vmatpush2.msra.mxu0 0.0
      %2615 = vmatprep.subr.mxu0 0.0
      %2616 = vmatpush2.msra.mxu0 0.0
      %2617 = vmatprep.subr.mxu0 0.0
      %2618 = vmatpush2.msra.mxu0 0.0
      %2619 = vmatprep.subr.mxu0 0.0
      %2620 = vmatpush2.msra.mxu0 0.0
      %2621 = vmatprep.subr.mxu0 0.0
      %2622 = vmatpush2.msra.mxu0 0.0
      %2623 = vmatprep.subr.mxu0 0.0
      %2624 = vmatpush2.msra.mxu0 0.0
      %2625 = vmatprep.subr.mxu0 0.0
      %2626 = vmatpush2.msra.mxu0 0.0
      %2627 = vmatprep.subr.mxu0 0.0
      %2628 = vmatpush2.msra.mxu0 0.0
      %2629 = vmatprep.mubr.f32.mxu0 0.0
      %2630 = vmatmul.mubr.f32.gmra.mxu0 %v2563
      %v2631 = vpop.f32.mrf.mxu0
      %v2632 = vadd.f32 %v2467, %v2631
      %v2633 = vpop.f32.mrf.mxu0
      %v2634 = vadd.f32 %v2467, %v2633
      %2635 = vdwg.mxu0
      %v2636 = vadd.f32 %v2632, %v2056
      %v2637 = vadd.f32 %v2634, %v2057
      %s2638 = scalar_lea.vmem %s1, 32
      %v2639 = vld [vmem:[%s2638] sm:$0xff]
      %s2640 = scalar_lea.vmem %s2, 32
      %v2641 = vld [vmem:[%s2640] sm:$0xff]
      %2642 = vst [vmem:[#allocation2 + $0x8] sm:$0xff] %v2636
      %2643 = vst [vmem:[#allocation2 + $0x10] sm:$0xff] %v2637
      %v2644 = vld [vmem:[#allocation2] sm:$0xff]
      %v2645 = vld [vmem:[#allocation2 + $0x8] sm:$0xff]
      %v2646 = vld [vmem:[#allocation2 + $0x10] sm:$0xff]
      %v2647 = vmul.f32 %v2644, %v267
      %v2648 = vmul.f32 %v2645, %v271
      %v2649 = vmul.f32 %v2646, %v269
      %v2650 = vmul.f32 %v2644, %v281
      %v2651 = vmul.f32 %v2645, %v285
      %v2652 = vmul.f32 %v2646, %v283
      %v2653 = vmul.f32 %v2644, %v293
      %v2654 = vmul.f32 %v2645, %v297
      %v2655 = vmul.f32 %v2646, %v295
      %v2656 = vld [vmem:[#allocation2 + $0x8] sm:$0xff]
      %v2657 = vld [vmem:[#allocation2 + $0x10] sm:$0xff]
      %v2658 = vld [vmem:[#allocation2 + $0x18] sm:$0xff]
      %v2659 = vmul.f32 %v2656, %v308
      %v2660 = vmul.f32 %v2657, %v312
      %v2661 = vmul.f32 %v2658, %v310
      %v2662 = vmul.f32 %v2656, %v320
      %v2663 = vmul.f32 %v2657, %v324
      %v2664 = vmul.f32 %v2658, %v322
      %v2665 = vmul.f32 %v2656, %v332
      %v2666 = vmul.f32 %v2657, %v336
      %v2667 = vmul.f32 %v2658, %v334
      %2671 = vrot.lane.b32.xlu0 %v2644, 127
      %v2672 = vpop.permute.xlu0 %2671
      %2673 = vrot.lane.b32.xlu0 %v2645, 127
      %v2674 = vpop.permute.xlu0 %2673
      %2675 = vrot.lane.b32.xlu0 %v2646, 127
      %v2676 = vpop.permute.xlu0 %2675
      %v2677 = vsel %vm296, %v2672, %v2674
      %v2678 = vsel %vm296, %v2674, %v2676
      %2682 = vrot.lane.b32.xlu0 %v2650, 126
      %v2683 = vpop.permute.xlu0 %2682
      %2684 = vrot.lane.b32.xlu0 %v2651, 126
      %v2685 = vpop.permute.xlu0 %2684
      %2686 = vrot.lane.b32.xlu0 %v2652, 126
      %v2687 = vpop.permute.xlu0 %2686
      %v2688 = vsel %vm363, %v2683, %v2685
      %v2689 = vsel %vm363, %v2685, %v2687
      %2693 = vrot.lane.b32.xlu0 %v2653, 112
      %v2694 = vpop.permute.xlu0 %2693
      %2695 = vrot.lane.b32.xlu0 %v2654, 112
      %v2696 = vpop.permute.xlu0 %2695
      %2697 = vrot.lane.b32.xlu0 %v2655, 112
      %v2698 = vpop.permute.xlu0 %2697
      %v2699 = vsel %vm375, %v2694, %v2696
      %v2700 = vsel %vm375, %v2696, %v2698
      %2701 = vrot.lane.b32.xlu0 %v2645, 111
      %v2702 = vpop.permute.xlu0 %2701
      %2703 = vrot.lane.b32.xlu0 %v2646, 111
      %v2704 = vpop.permute.xlu0 %2703
      %v2705 = vsel %vm270, %v2702, %v2704
      %2709 = vrot.lane.b32.xlu0 %v2659, 110
      %v2710 = vpop.permute.xlu0 %2709
      %2711 = vrot.lane.b32.xlu0 %v2660, 110
      %v2712 = vpop.permute.xlu0 %2711
      %2713 = vrot.lane.b32.xlu0 %v2661, 110
      %v2714 = vpop.permute.xlu0 %2713
      %v2715 = vsel %vm392, %v2710, %v2712
      %v2716 = vsel %vm392, %v2712, %v2714
      %2720 = vrot.lane.b32.xlu0 %v2662, 96
      %v2721 = vpop.permute.xlu0 %2720
      %2722 = vrot.lane.b32.xlu0 %v2663, 96
      %v2723 = vpop.permute.xlu0 %2722
      %2724 = vrot.lane.b32.xlu0 %v2664, 96
      %v2725 = vpop.permute.xlu0 %2724
      %v2726 = vsel %vm404, %v2721, %v2723
      %v2727 = vsel %vm404, %v2723, %v2725
      %2731 = vrot.lane.b32.xlu0 %v2656, 95
      %v2732 = vpop.permute.xlu0 %2731
      %2733 = vrot.lane.b32.xlu0 %v2657, 95
      %v2734 = vpop.permute.xlu0 %2733
      %2735 = vrot.lane.b32.xlu0 %v2658, 95
      %v2736 = vpop.permute.xlu0 %2735
      %v2737 = vsel %vm416, %v2732, %v2734
      %v2738 = vsel %vm416, %v2734, %v2736
      %2742 = vrot.lane.b32.xlu0 %v2665, 94
      %v2743 = vpop.permute.xlu0 %2742
      %2744 = vrot.lane.b32.xlu0 %v2666, 94
      %v2745 = vpop.permute.xlu0 %2744
      %2746 = vrot.lane.b32.xlu0 %v2667, 94
      %v2747 = vpop.permute.xlu0 %2746
      %v2748 = vsel %vm428, %v2743, %v2745
      %v2749 = vsel %vm428, %v2745, %v2747
      %2751 = vset.pattern.permute.xlu0 0
      %2752 = vperm.xlu0 %2751, %v2641
      %v2753 = vpop.permute.xlu0 %2752
      %2758 = vrot.lane.b32.xlu0 %v2647, 17
      %v2759 = vpop.permute.xlu0 %2758
      %2760 = vrot.lane.b32.xlu0 %v2648, 17
      %v2761 = vpop.permute.xlu0 %2760
      %2762 = vrot.lane.b32.xlu0 %v2649, 17
      %v2763 = vpop.permute.xlu0 %2762
      %2764 = vrot.lane.b32.xlu0 %v2677, 17
      %v2765 = vpop.permute.xlu0 %2764
      %2766 = vrot.lane.b32.xlu0 %v2678, 17
      %v2767 = vpop.permute.xlu0 %2766
      %2768 = vrot.lane.b32.xlu0 %v2676, 17
      %v2769 = vpop.permute.xlu0 %2768
      %2770 = vrot.lane.b32.xlu0 %v2688, 17
      %v2771 = vpop.permute.xlu0 %2770
      %2772 = vrot.lane.b32.xlu0 %v2689, 17
      %v2773 = vpop.permute.xlu0 %2772
      %2774 = vrot.lane.b32.xlu0 %v2687, 17
      %v2775 = vpop.permute.xlu0 %2774
      %2776 = vrot.lane.b32.xlu0 %v2699, 17
      %v2777 = vpop.permute.xlu0 %2776
      %2778 = vrot.lane.b32.xlu0 %v2700, 17
      %v2779 = vpop.permute.xlu0 %2778
      %2780 = vrot.lane.b32.xlu0 %v2698, 17
      %v2781 = vpop.permute.xlu0 %2780
      %2782 = vrot.lane.b32.xlu0 %v2702, 17
      %v2783 = vpop.permute.xlu0 %2782
      %2784 = vrot.lane.b32.xlu0 %v2705, 17
      %v2785 = vpop.permute.xlu0 %2784
      %2786 = vrot.lane.b32.xlu0 %v2704, 17
      %v2787 = vpop.permute.xlu0 %2786
      %2788 = vrot.lane.b32.xlu0 %v2710, 17
      %v2789 = vpop.permute.xlu0 %2788
      %2790 = vrot.lane.b32.xlu0 %v2715, 17
      %v2791 = vpop.permute.xlu0 %2790
      %2792 = vrot.lane.b32.xlu0 %v2716, 17
      %v2793 = vpop.permute.xlu0 %2792
      %2794 = vrot.lane.b32.xlu0 %v2721, 17
      %v2795 = vpop.permute.xlu0 %2794
      %2796 = vrot.lane.b32.xlu0 %v2726, 17
      %v2797 = vpop.permute.xlu0 %2796
      %2798 = vrot.lane.b32.xlu0 %v2727, 17
      %v2799 = vpop.permute.xlu0 %2798
      %2800 = vrot.lane.b32.xlu0 %v2732, 17
      %v2801 = vpop.permute.xlu0 %2800
      %2802 = vrot.lane.b32.xlu0 %v2737, 17
      %v2803 = vpop.permute.xlu0 %2802
      %2804 = vrot.lane.b32.xlu0 %v2738, 17
      %v2805 = vpop.permute.xlu0 %2804
      %2806 = vrot.lane.b32.xlu0 %v2743, 17
      %v2807 = vpop.permute.xlu0 %2806
      %2808 = vrot.lane.b32.xlu0 %v2748, 17
      %v2809 = vpop.permute.xlu0 %2808
      %2810 = vrot.lane.b32.xlu0 %v2749, 17
      %v2811 = vpop.permute.xlu0 %2810
      %v2812 = vsel %vm335, %v2759, %v2761
      %v2813 = vsel %vm335, %v2761, %v2763
      %v2814 = vsel %vm335, %v2765, %v2767
      %v2815 = vsel %vm335, %v2767, %v2769
      %v2816 = vsel %vm335, %v2771, %v2773
      %v2817 = vsel %vm335, %v2773, %v2775
      %v2818 = vsel %vm335, %v2777, %v2779
      %v2819 = vsel %vm335, %v2779, %v2781
      %v2820 = vsel %vm335, %v2783, %v2785
      %v2821 = vsel %vm335, %v2785, %v2787
      %v2822 = vsel %vm335, %v2789, %v2791
      %v2823 = vsel %vm335, %v2791, %v2793
      %v2824 = vsel %vm335, %v2795, %v2797
      %v2825 = vsel %vm335, %v2797, %v2799
      %v2826 = vsel %vm335, %v2801, %v2803
      %v2827 = vsel %vm335, %v2803, %v2805
      %v2828 = vsel %vm335, %v2807, %v2809
      %v2829 = vsel %vm335, %v2809, %v2811
      %v2849 = vsel %vm529, %v2639, 0
      %2851 = vmatprep.subr.mxu0 0.0
      %2852 = vmatpush1.msra.mxu0 0.0
      %2853 = vmatprep.subr.mxu0 0.0
      %2854 = vmatpush1.msra.mxu0 0.0
      %2855 = vmatprep.subr.mxu0 0.0
      %2856 = vmatpush1.msra.mxu0 0.0
      %2857 = vmatprep.subr.mxu0 0.0
      %2858 = vmatpush1.msra.mxu0 0.0
      %2859 = vmatprep.subr.mxu0 0.0
      %2860 = vmatpush1.msra.mxu0 0.0
      %2861 = vmatprep.subr.mxu0 0.0
      %2862 = vmatpush1.msra.mxu0 0.0
      %2863 = vmatprep.subr.mxu0 0.0
      %2864 = vmatpush1.msra.mxu0 0.0
      %2865 = vmatprep.subr.mxu0 %v2829
      %2866 = vmatpush1.msra.mxu0 %v2828
      %2867 = vmatprep.subr.mxu0 %v2827
      %2868 = vmatpush1.msra.mxu0 %v2826
      %2869 = vmatprep.subr.mxu0 %v2825
      %2870 = vmatpush1.msra.mxu0 %v2824
      %2871 = vmatprep.subr.mxu0 %v2823
      %2872 = vmatpush1.msra.mxu0 %v2822
      %2873 = vmatprep.subr.mxu0 %v2821
      %2874 = vmatpush1.msra.mxu0 %v2820
      %2875 = vmatprep.subr.mxu0 %v2819
      %2876 = vmatpush1.msra.mxu0 %v2818
      %2877 = vmatprep.subr.mxu0 %v2817
      %2878 = vmatpush1.msra.mxu0 %v2816
      %2879 = vmatprep.subr.mxu0 %v2815
      %2880 = vmatpush1.msra.mxu0 %v2814
      %2881 = vmatprep.subr.mxu0 %v2813
      %2882 = vmatpush1.msra.mxu0 %v2812
      %2883 = vmatprep.subr.mxu0 0.0
      %2884 = vmatpush2.msra.mxu0 0.0
      %2885 = vmatprep.subr.mxu0 0.0
      %2886 = vmatpush2.msra.mxu0 0.0
      %2887 = vmatprep.subr.mxu0 0.0
      %2888 = vmatpush2.msra.mxu0 0.0
      %2889 = vmatprep.subr.mxu0 0.0
      %2890 = vmatpush2.msra.mxu0 0.0
      %2891 = vmatprep.subr.mxu0 0.0
      %2892 = vmatpush2.msra.mxu0 0.0
      %2893 = vmatprep.subr.mxu0 0.0
      %2894 = vmatpush2.msra.mxu0 0.0
      %2895 = vmatprep.subr.mxu0 0.0
      %2896 = vmatpush2.msra.mxu0 0.0
      %2897 = vmatprep.subr.mxu0 0.0
      %2898 = vmatpush2.msra.mxu0 0.0
      %2899 = vmatprep.subr.mxu0 0.0
      %2900 = vmatpush2.msra.mxu0 0.0
      %2901 = vmatprep.subr.mxu0 0.0
      %2902 = vmatpush2.msra.mxu0 0.0
      %2903 = vmatprep.subr.mxu0 0.0
      %2904 = vmatpush2.msra.mxu0 0.0
      %2905 = vmatprep.subr.mxu0 0.0
      %2906 = vmatpush2.msra.mxu0 0.0
      %2907 = vmatprep.subr.mxu0 0.0
      %2908 = vmatpush2.msra.mxu0 0.0
      %2909 = vmatprep.subr.mxu0 0.0
      %2910 = vmatpush2.msra.mxu0 0.0
      %2911 = vmatprep.subr.mxu0 0.0
      %2912 = vmatpush2.msra.mxu0 0.0
      %2913 = vmatprep.subr.mxu0 0.0
      %2914 = vmatpush2.msra.mxu0 0.0
      %2915 = vmatprep.mubr.f32.mxu0 0.0
      %2916 = vmatmul.mubr.f32.gmra.mxu0 %v2849
      %v2917 = vpop.f32.mrf.mxu0
      %v2918 = vadd.f32 %v2753, %v2917
      %v2919 = vpop.f32.mrf.mxu0
      %v2920 = vadd.f32 %v2753, %v2919
      %2921 = vdwg.mxu0
      %v2922 = vmul.f32 %v2918, 0.5
      %v2923 = vmul.f32 %v2920, 0.5
      %v2924 = vmul.f32 %v2918, 0.70710677
      %v2925 = vmul.f32 %v2920, 0.70710677
      %v2926 = verf.f32.pop %v2924
      %v2927 = verf.f32.pop %v2925
      %v2928 = vadd.f32 %v2926, 1.0
      %v2929 = vadd.f32 %v2927, 1.0
      %v2930 = vmul.f32 %v2922, %v2928
      %v2931 = vmul.f32 %v2923, %v2929
      %s2932 = scalar_lea.vmem %s3, 32
      %v2933 = vld [vmem:[%s2932] sm:$0xff]
      %s2934 = scalar_lea.vmem %s4, 32
      %v2935 = vld [vmem:[%s2934] sm:$0xff]
      %2936 = vst [vmem:[#allocation2 + $0x8] sm:$0xff] %v2930
      %2937 = vst [vmem:[#allocation2 + $0x10] sm:$0xff] %v2931
      %v2938 = vld [vmem:[#allocation2] sm:$0xff]
      %v2939 = vld [vmem:[#allocation2 + $0x8] sm:$0xff]
      %v2940 = vld [vmem:[#allocation2 + $0x10] sm:$0xff]
      %v2941 = vmul.f32 %v2938, %v267
      %v2942 = vmul.f32 %v2939, %v271
      %v2943 = vmul.f32 %v2940, %v269
      %v2944 = vmul.f32 %v2938, %v281
      %v2945 = vmul.f32 %v2939, %v285
      %v2946 = vmul.f32 %v2940, %v283
      %v2947 = vmul.f32 %v2938, %v293
      %v2948 = vmul.f32 %v2939, %v297
      %v2949 = vmul.f32 %v2940, %v295
      %v2950 = vld [vmem:[#allocation2 + $0x8] sm:$0xff]
      %v2951 = vld [vmem:[#allocation2 + $0x10] sm:$0xff]
      %v2952 = vld [vmem:[#allocation2 + $0x18] sm:$0xff]
      %v2953 = vmul.f32 %v2950, %v308
      %v2954 = vmul.f32 %v2951, %v312
      %v2955 = vmul.f32 %v2952, %v310
      %v2956 = vmul.f32 %v2950, %v320
      %v2957 = vmul.f32 %v2951, %v324
      %v2958 = vmul.f32 %v2952, %v322
      %v2959 = vmul.f32 %v2950, %v332
      %v2960 = vmul.f32 %v2951, %v336
      %v2961 = vmul.f32 %v2952, %v334
      %2965 = vrot.lane.b32.xlu0 %v2938, 127
      %v2966 = vpop.permute.xlu0 %2965
      %2967 = vrot.lane.b32.xlu0 %v2939, 127
      %v2968 = vpop.permute.xlu0 %2967
      %2969 = vrot.lane.b32.xlu0 %v2940, 127
      %v2970 = vpop.permute.xlu0 %2969
      %v2971 = vsel %vm296, %v2966, %v2968
      %v2972 = vsel %vm296, %v2968, %v2970
      %2976 = vrot.lane.b32.xlu0 %v2944, 126
      %v2977 = vpop.permute.xlu0 %2976
      %2978 = vrot.lane.b32.xlu0 %v2945, 126
      %v2979 = vpop.permute.xlu0 %2978
      %2980 = vrot.lane.b32.xlu0 %v2946, 126
      %v2981 = vpop.permute.xlu0 %2980
      %v2982 = vsel %vm363, %v2977, %v2979
      %v2983 = vsel %vm363, %v2979, %v2981
      %2987 = vrot.lane.b32.xlu0 %v2947, 112
      %v2988 = vpop.permute.xlu0 %2987
      %2989 = vrot.lane.b32.xlu0 %v2948, 112
      %v2990 = vpop.permute.xlu0 %2989
      %2991 = vrot.lane.b32.xlu0 %v2949, 112
      %v2992 = vpop.permute.xlu0 %2991
      %v2993 = vsel %vm375, %v2988, %v2990
      %v2994 = vsel %vm375, %v2990, %v2992
      %2995 = vrot.lane.b32.xlu0 %v2939, 111
      %v2996 = vpop.permute.xlu0 %2995
      %2997 = vrot.lane.b32.xlu0 %v2940, 111
      %v2998 = vpop.permute.xlu0 %2997
      %v2999 = vsel %vm270, %v2996, %v2998
      %3003 = vrot.lane.b32.xlu0 %v2953, 110
      %v3004 = vpop.permute.xlu0 %3003
      %3005 = vrot.lane.b32.xlu0 %v2954, 110
      %v3006 = vpop.permute.xlu0 %3005
      %3007 = vrot.lane.b32.xlu0 %v2955, 110
      %v3008 = vpop.permute.xlu0 %3007
      %v3009 = vsel %vm392, %v3004, %v3006
      %v3010 = vsel %vm392, %v3006, %v3008
      %3014 = vrot.lane.b32.xlu0 %v2956, 96
      %v3015 = vpop.permute.xlu0 %3014
      %3016 = vrot.lane.b32.xlu0 %v2957, 96
      %v3017 = vpop.permute.xlu0 %3016
      %3018 = vrot.lane.b32.xlu0 %v2958, 96
      %v3019 = vpop.permute.xlu0 %3018
      %v3020 = vsel %vm404, %v3015, %v3017
      %v3021 = vsel %vm404, %v3017, %v3019
      %3025 = vrot.lane.b32.xlu0 %v2950, 95
      %v3026 = vpop.permute.xlu0 %3025
      %3027 = vrot.lane.b32.xlu0 %v2951, 95
      %v3028 = vpop.permute.xlu0 %3027
      %3029 = vrot.lane.b32.xlu0 %v2952, 95
      %v3030 = vpop.permute.xlu0 %3029
      %v3031 = vsel %vm416, %v3026, %v3028
      %v3032 = vsel %vm416, %v3028, %v3030
      %3036 = vrot.lane.b32.xlu0 %v2959, 94
      %v3037 = vpop.permute.xlu0 %3036
      %3038 = vrot.lane.b32.xlu0 %v2960, 94
      %v3039 = vpop.permute.xlu0 %3038
      %3040 = vrot.lane.b32.xlu0 %v2961, 94
      %v3041 = vpop.permute.xlu0 %3040
      %v3042 = vsel %vm428, %v3037, %v3039
      %v3043 = vsel %vm428, %v3039, %v3041
      %3045 = vset.pattern.permute.xlu0 0
      %3046 = vperm.xlu0 %3045, %v2935
      %v3047 = vpop.permute.xlu0 %3046
      %3052 = vrot.lane.b32.xlu0 %v2941, 17
      %v3053 = vpop.permute.xlu0 %3052
      %3054 = vrot.lane.b32.xlu0 %v2942, 17
      %v3055 = vpop.permute.xlu0 %3054
      %3056 = vrot.lane.b32.xlu0 %v2943, 17
      %v3057 = vpop.permute.xlu0 %3056
      %3058 = vrot.lane.b32.xlu0 %v2971, 17
      %v3059 = vpop.permute.xlu0 %3058
      %3060 = vrot.lane.b32.xlu0 %v2972, 17
      %v3061 = vpop.permute.xlu0 %3060
      %3062 = vrot.lane.b32.xlu0 %v2970, 17
      %v3063 = vpop.permute.xlu0 %3062
      %3064 = vrot.lane.b32.xlu0 %v2982, 17
      %v3065 = vpop.permute.xlu0 %3064
      %3066 = vrot.lane.b32.xlu0 %v2983, 17
      %v3067 = vpop.permute.xlu0 %3066
      %3068 = vrot.lane.b32.xlu0 %v2981, 17
      %v3069 = vpop.permute.xlu0 %3068
      %3070 = vrot.lane.b32.xlu0 %v2993, 17
      %v3071 = vpop.permute.xlu0 %3070
      %3072 = vrot.lane.b32.xlu0 %v2994, 17
      %v3073 = vpop.permute.xlu0 %3072
      %3074 = vrot.lane.b32.xlu0 %v2992, 17
      %v3075 = vpop.permute.xlu0 %3074
      %3076 = vrot.lane.b32.xlu0 %v2996, 17
      %v3077 = vpop.permute.xlu0 %3076
      %3078 = vrot.lane.b32.xlu0 %v2999, 17
      %v3079 = vpop.permute.xlu0 %3078
      %3080 = vrot.lane.b32.xlu0 %v2998, 17
      %v3081 = vpop.permute.xlu0 %3080
      %3082 = vrot.lane.b32.xlu0 %v3004, 17
      %v3083 = vpop.permute.xlu0 %3082
      %3084 = vrot.lane.b32.xlu0 %v3009, 17
      %v3085 = vpop.permute.xlu0 %3084
      %3086 = vrot.lane.b32.xlu0 %v3010, 17
      %v3087 = vpop.permute.xlu0 %3086
      %3088 = vrot.lane.b32.xlu0 %v3015, 17
      %v3089 = vpop.permute.xlu0 %3088
      %3090 = vrot.lane.b32.xlu0 %v3020, 17
      %v3091 = vpop.permute.xlu0 %3090
      %3092 = vrot.lane.b32.xlu0 %v3021, 17
      %v3093 = vpop.permute.xlu0 %3092
      %3094 = vrot.lane.b32.xlu0 %v3026, 17
      %v3095 = vpop.permute.xlu0 %3094
      %3096 = vrot.lane.b32.xlu0 %v3031, 17
      %v3097 = vpop.permute.xlu0 %3096
      %3098 = vrot.lane.b32.xlu0 %v3032, 17
      %v3099 = vpop.permute.xlu0 %3098
      %3100 = vrot.lane.b32.xlu0 %v3037, 17
      %v3101 = vpop.permute.xlu0 %3100
      %3102 = vrot.lane.b32.xlu0 %v3042, 17
      %v3103 = vpop.permute.xlu0 %3102
      %3104 = vrot.lane.b32.xlu0 %v3043, 17
      %v3105 = vpop.permute.xlu0 %3104
      %v3106 = vsel %vm335, %v3053, %v3055
      %v3107 = vsel %vm335, %v3055, %v3057
      %v3108 = vsel %vm335, %v3059, %v3061
      %v3109 = vsel %vm335, %v3061, %v3063
      %v3110 = vsel %vm335, %v3065, %v3067
      %v3111 = vsel %vm335, %v3067, %v3069
      %v3112 = vsel %vm335, %v3071, %v3073
      %v3113 = vsel %vm335, %v3073, %v3075
      %v3114 = vsel %vm335, %v3077, %v3079
      %v3115 = vsel %vm335, %v3079, %v3081
      %v3116 = vsel %vm335, %v3083, %v3085
      %v3117 = vsel %vm335, %v3085, %v3087
      %v3118 = vsel %vm335, %v3089, %v3091
      %v3119 = vsel %vm335, %v3091, %v3093
      %v3120 = vsel %vm335, %v3095, %v3097
      %v3121 = vsel %vm335, %v3097, %v3099
      %v3122 = vsel %vm335, %v3101, %v3103
      %v3123 = vsel %vm335, %v3103, %v3105
      %v3143 = vsel %vm529, %v2933, 0
      %3145 = vmatprep.subr.mxu0 0.0
      %3146 = vmatpush1.msra.mxu0 0.0
      %3147 = vmatprep.subr.mxu0 0.0
      %3148 = vmatpush1.msra.mxu0 0.0
      %3149 = vmatprep.subr.mxu0 0.0
      %3150 = vmatpush1.msra.mxu0 0.0
      %3151 = vmatprep.subr.mxu0 0.0
      %3152 = vmatpush1.msra.mxu0 0.0
      %3153 = vmatprep.subr.mxu0 0.0
      %3154 = vmatpush1.msra.mxu0 0.0
      %3155 = vmatprep.subr.mxu0 0.0
      %3156 = vmatpush1.msra.mxu0 0.0
      %3157 = vmatprep.subr.mxu0 0.0
      %3158 = vmatpush1.msra.mxu0 0.0
      %3159 = vmatprep.subr.mxu0 %v3123
      %3160 = vmatpush1.msra.mxu0 %v3122
      %3161 = vmatprep.subr.mxu0 %v3121
      %3162 = vmatpush1.msra.mxu0 %v3120
      %3163 = vmatprep.subr.mxu0 %v3119
      %3164 = vmatpush1.msra.mxu0 %v3118
      %3165 = vmatprep.subr.mxu0 %v3117
      %3166 = vmatpush1.msra.mxu0 %v3116
      %3167 = vmatprep.subr.mxu0 %v3115
      %3168 = vmatpush1.msra.mxu0 %v3114
      %3169 = vmatprep.subr.mxu0 %v3113
      %3170 = vmatpush1.msra.mxu0 %v3112
      %3171 = vmatprep.subr.mxu0 %v3111
      %3172 = vmatpush1.msra.mxu0 %v3110
      %3173 = vmatprep.subr.mxu0 %v3109
      %3174 = vmatpush1.msra.mxu0 %v3108
      %3175 = vmatprep.subr.mxu0 %v3107
      %3176 = vmatpush1.msra.mxu0 %v3106
      %3177 = vmatprep.subr.mxu0 0.0
      %3178 = vmatpush2.msra.mxu0 0.0
      %3179 = vmatprep.subr.mxu0 0.0
      %3180 = vmatpush2.msra.mxu0 0.0
      %3181 = vmatprep.subr.mxu0 0.0
      %3182 = vmatpush2.msra.mxu0 0.0
      %3183 = vmatprep.subr.mxu0 0.0
      %3184 = vmatpush2.msra.mxu0 0.0
      %3185 = vmatprep.subr.mxu0 0.0
      %3186 = vmatpush2.msra.mxu0 0.0
      %3187 = vmatprep.subr.mxu0 0.0
      %3188 = vmatpush2.msra.mxu0 0.0
      %3189 = vmatprep.subr.mxu0 0.0
      %3190 = vmatpush2.msra.mxu0 0.0
      %3191 = vmatprep.subr.mxu0 0.0
      %3192 = vmatpush2.msra.mxu0 0.0
      %3193 = vmatprep.subr.mxu0 0.0
      %3194 = vmatpush2.msra.mxu0 0.0
      %3195 = vmatprep.subr.mxu0 0.0
      %3196 = vmatpush2.msra.mxu0 0.0
      %3197 = vmatprep.subr.mxu0 0.0
      %3198 = vmatpush2.msra.mxu0 0.0
      %3199 = vmatprep.subr.mxu0 0.0
      %3200 = vmatpush2.msra.mxu0 0.0
      %3201 = vmatprep.subr.mxu0 0.0
      %3202 = vmatpush2.msra.mxu0 0.0
      %3203 = vmatprep.subr.mxu0 0.0
      %3204 = vmatpush2.msra.mxu0 0.0
      %3205 = vmatprep.subr.mxu0 0.0
      %3206 = vmatpush2.msra.mxu0 0.0
      %3207 = vmatprep.subr.mxu0 0.0
      %3208 = vmatpush2.msra.mxu0 0.0
      %3209 = vmatprep.mubr.f32.mxu0 0.0
      %3210 = vmatmul.mubr.f32.gmra.mxu0 %v3143
      %v3211 = vpop.f32.mrf.mxu0
      %v3212 = vadd.f32 %v3047, %v3211
      %v3213 = vpop.f32.mrf.mxu0
      %v3214 = vadd.f32 %v3047, %v3213
      %3215 = vdwg.mxu0
      %v3216 = vadd.f32 %v3212, %v2636
      %v3217 = vadd.f32 %v3214, %v2637
      %s3218 = scalar_lea.vmem %s1, 40
      %v3219 = vld [vmem:[%s3218] sm:$0xff]
      %s3220 = scalar_lea.vmem %s2, 40
      %v3221 = vld [vmem:[%s3220] sm:$0xff]
      %3222 = vst [vmem:[#allocation2 + $0x8] sm:$0xff] %v3216
      %3223 = vst [vmem:[#allocation2 + $0x10] sm:$0xff] %v3217
      %v3224 = vld [vmem:[#allocation2] sm:$0xff]
      %v3225 = vld [vmem:[#allocation2 + $0x8] sm:$0xff]
      %v3226 = vld [vmem:[#allocation2 + $0x10] sm:$0xff]
      %v3227 = vmul.f32 %v3224, %v267
      %v3228 = vmul.f32 %v3225, %v271
      %v3229 = vmul.f32 %v3226, %v269
      %v3230 = vmul.f32 %v3224, %v281
      %v3231 = vmul.f32 %v3225, %v285
      %v3232 = vmul.f32 %v3226, %v283
      %v3233 = vmul.f32 %v3224, %v293
      %v3234 = vmul.f32 %v3225, %v297
      %v3235 = vmul.f32 %v3226, %v295
      %v3236 = vld [vmem:[#allocation2 + $0x8] sm:$0xff]
      %v3237 = vld [vmem:[#allocation2 + $0x10] sm:$0xff]
      %v3238 = vld [vmem:[#allocation2 + $0x18] sm:$0xff]
      %v3239 = vmul.f32 %v3236, %v308
      %v3240 = vmul.f32 %v3237, %v312
      %v3241 = vmul.f32 %v3238, %v310
      %v3242 = vmul.f32 %v3236, %v320
      %v3243 = vmul.f32 %v3237, %v324
      %v3244 = vmul.f32 %v3238, %v322
      %v3245 = vmul.f32 %v3236, %v332
      %v3246 = vmul.f32 %v3237, %v336
      %v3247 = vmul.f32 %v3238, %v334
      %3251 = vrot.lane.b32.xlu0 %v3224, 127
      %v3252 = vpop.permute.xlu0 %3251
      %3253 = vrot.lane.b32.xlu0 %v3225, 127
      %v3254 = vpop.permute.xlu0 %3253
      %3255 = vrot.lane.b32.xlu0 %v3226, 127
      %v3256 = vpop.permute.xlu0 %3255
      %v3257 = vsel %vm296, %v3252, %v3254
      %v3258 = vsel %vm296, %v3254, %v3256
      %3262 = vrot.lane.b32.xlu0 %v3230, 126
      %v3263 = vpop.permute.xlu0 %3262
      %3264 = vrot.lane.b32.xlu0 %v3231, 126
      %v3265 = vpop.permute.xlu0 %3264
      %3266 = vrot.lane.b32.xlu0 %v3232, 126
      %v3267 = vpop.permute.xlu0 %3266
      %v3268 = vsel %vm363, %v3263, %v3265
      %v3269 = vsel %vm363, %v3265, %v3267
      %3273 = vrot.lane.b32.xlu0 %v3233, 112
      %v3274 = vpop.permute.xlu0 %3273
      %3275 = vrot.lane.b32.xlu0 %v3234, 112
      %v3276 = vpop.permute.xlu0 %3275
      %3277 = vrot.lane.b32.xlu0 %v3235, 112
      %v3278 = vpop.permute.xlu0 %3277
      %v3279 = vsel %vm375, %v3274, %v3276
      %v3280 = vsel %vm375, %v3276, %v3278
      %3281 = vrot.lane.b32.xlu0 %v3225, 111
      %v3282 = vpop.permute.xlu0 %3281
      %3283 = vrot.lane.b32.xlu0 %v3226, 111
      %v3284 = vpop.permute.xlu0 %3283
      %v3285 = vsel %vm270, %v3282, %v3284
      %3289 = vrot.lane.b32.xlu0 %v3239, 110
      %v3290 = vpop.permute.xlu0 %3289
      %3291 = vrot.lane.b32.xlu0 %v3240, 110
      %v3292 = vpop.permute.xlu0 %3291
      %3293 = vrot.lane.b32.xlu0 %v3241, 110
      %v3294 = vpop.permute.xlu0 %3293
      %v3295 = vsel %vm392, %v3290, %v3292
      %v3296 = vsel %vm392, %v3292, %v3294
      %3300 = vrot.lane.b32.xlu0 %v3242, 96
      %v3301 = vpop.permute.xlu0 %3300
      %3302 = vrot.lane.b32.xlu0 %v3243, 96
      %v3303 = vpop.permute.xlu0 %3302
      %3304 = vrot.lane.b32.xlu0 %v3244, 96
      %v3305 = vpop.permute.xlu0 %3304
      %v3306 = vsel %vm404, %v3301, %v3303
      %v3307 = vsel %vm404, %v3303, %v3305
      %3311 = vrot.lane.b32.xlu0 %v3236, 95
      %v3312 = vpop.permute.xlu0 %3311
      %3313 = vrot.lane.b32.xlu0 %v3237, 95
      %v3314 = vpop.permute.xlu0 %3313
      %3315 = vrot.lane.b32.xlu0 %v3238, 95
      %v3316 = vpop.permute.xlu0 %3315
      %v3317 = vsel %vm416, %v3312, %v3314
      %v3318 = vsel %vm416, %v3314, %v3316
      %3322 = vrot.lane.b32.xlu0 %v3245, 94
      %v3323 = vpop.permute.xlu0 %3322
      %3324 = vrot.lane.b32.xlu0 %v3246, 94
      %v3325 = vpop.permute.xlu0 %3324
      %3326 = vrot.lane.b32.xlu0 %v3247, 94
      %v3327 = vpop.permute.xlu0 %3326
      %v3328 = vsel %vm428, %v3323, %v3325
      %v3329 = vsel %vm428, %v3325, %v3327
      %3331 = vset.pattern.permute.xlu0 0
      %3332 = vperm.xlu0 %3331, %v3221
      %v3333 = vpop.permute.xlu0 %3332
      %3338 = vrot.lane.b32.xlu0 %v3227, 17
      %v3339 = vpop.permute.xlu0 %3338
      %3340 = vrot.lane.b32.xlu0 %v3228, 17
      %v3341 = vpop.permute.xlu0 %3340
      %3342 = vrot.lane.b32.xlu0 %v3229, 17
      %v3343 = vpop.permute.xlu0 %3342
      %3344 = vrot.lane.b32.xlu0 %v3257, 17
      %v3345 = vpop.permute.xlu0 %3344
      %3346 = vrot.lane.b32.xlu0 %v3258, 17
      %v3347 = vpop.permute.xlu0 %3346
      %3348 = vrot.lane.b32.xlu0 %v3256, 17
      %v3349 = vpop.permute.xlu0 %3348
      %3350 = vrot.lane.b32.xlu0 %v3268, 17
      %v3351 = vpop.permute.xlu0 %3350
      %3352 = vrot.lane.b32.xlu0 %v3269, 17
      %v3353 = vpop.permute.xlu0 %3352
      %3354 = vrot.lane.b32.xlu0 %v3267, 17
      %v3355 = vpop.permute.xlu0 %3354
      %3356 = vrot.lane.b32.xlu0 %v3279, 17
      %v3357 = vpop.permute.xlu0 %3356
      %3358 = vrot.lane.b32.xlu0 %v3280, 17
      %v3359 = vpop.permute.xlu0 %3358
      %3360 = vrot.lane.b32.xlu0 %v3278, 17
      %v3361 = vpop.permute.xlu0 %3360
      %3362 = vrot.lane.b32.xlu0 %v3282, 17
      %v3363 = vpop.permute.xlu0 %3362
      %3364 = vrot.lane.b32.xlu0 %v3285, 17
      %v3365 = vpop.permute.xlu0 %3364
      %3366 = vrot.lane.b32.xlu0 %v3284, 17
      %v3367 = vpop.permute.xlu0 %3366
      %3368 = vrot.lane.b32.xlu0 %v3290, 17
      %v3369 = vpop.permute.xlu0 %3368
      %3370 = vrot.lane.b32.xlu0 %v3295, 17
      %v3371 = vpop.permute.xlu0 %3370
      %3372 = vrot.lane.b32.xlu0 %v3296, 17
      %v3373 = vpop.permute.xlu0 %3372
      %3374 = vrot.lane.b32.xlu0 %v3301, 17
      %v3375 = vpop.permute.xlu0 %3374
      %3376 = vrot.lane.b32.xlu0 %v3306, 17
      %v3377 = vpop.permute.xlu0 %3376
      %3378 = vrot.lane.b32.xlu0 %v3307, 17
      %v3379 = vpop.permute.xlu0 %3378
      %3380 = vrot.lane.b32.xlu0 %v3312, 17
      %v3381 = vpop.permute.xlu0 %3380
      %3382 = vrot.lane.b32.xlu0 %v3317, 17
      %v3383 = vpop.permute.xlu0 %3382
      %3384 = vrot.lane.b32.xlu0 %v3318, 17
      %v3385 = vpop.permute.xlu0 %3384
      %3386 = vrot.lane.b32.xlu0 %v3323, 17
      %v3387 = vpop.permute.xlu0 %3386
      %3388 = vrot.lane.b32.xlu0 %v3328, 17
      %v3389 = vpop.permute.xlu0 %3388
      %3390 = vrot.lane.b32.xlu0 %v3329, 17
      %v3391 = vpop.permute.xlu0 %3390
      %v3392 = vsel %vm335, %v3339, %v3341
      %v3393 = vsel %vm335, %v3341, %v3343
      %v3394 = vsel %vm335, %v3345, %v3347
      %v3395 = vsel %vm335, %v3347, %v3349
      %v3396 = vsel %vm335, %v3351, %v3353
      %v3397 = vsel %vm335, %v3353, %v3355
      %v3398 = vsel %vm335, %v3357, %v3359
      %v3399 = vsel %vm335, %v3359, %v3361
      %v3400 = vsel %vm335, %v3363, %v3365
      %v3401 = vsel %vm335, %v3365, %v3367
      %v3402 = vsel %vm335, %v3369, %v3371
      %v3403 = vsel %vm335, %v3371, %v3373
      %v3404 = vsel %vm335, %v3375, %v3377
      %v3405 = vsel %vm335, %v3377, %v3379
      %v3406 = vsel %vm335, %v3381, %v3383
      %v3407 = vsel %vm335, %v3383, %v3385
      %v3408 = vsel %vm335, %v3387, %v3389
      %v3409 = vsel %vm335, %v3389, %v3391
      %v3429 = vsel %vm529, %v3219, 0
      %3431 = vmatprep.subr.mxu0 0.0
      %3432 = vmatpush1.msra.mxu0 0.0
      %3433 = vmatprep.subr.mxu0 0.0
      %3434 = vmatpush1.msra.mxu0 0.0
      %3435 = vmatprep.subr.mxu0 0.0
      %3436 = vmatpush1.msra.mxu0 0.0
      %3437 = vmatprep.subr.mxu0 0.0
      %3438 = vmatpush1.msra.mxu0 0.0
      %3439 = vmatprep.subr.mxu0 0.0
      %3440 = vmatpush1.msra.mxu0 0.0
      %3441 = vmatprep.subr.mxu0 0.0
      %3442 = vmatpush1.msra.mxu0 0.0
      %3443 = vmatprep.subr.mxu0 0.0
      %3444 = vmatpush1.msra.mxu0 0.0
      %3445 = vmatprep.subr.mxu0 %v3409
      %3446 = vmatpush1.msra.mxu0 %v3408
      %3447 = vmatprep.subr.mxu0 %v3407
      %3448 = vmatpush1.msra.mxu0 %v3406
      %3449 = vmatprep.subr.mxu0 %v3405
      %3450 = vmatpush1.msra.mxu0 %v3404
      %3451 = vmatprep.subr.mxu0 %v3403
      %3452 = vmatpush1.msra.mxu0 %v3402
      %3453 = vmatprep.subr.mxu0 %v3401
      %3454 = vmatpush1.msra.mxu0 %v3400
      %3455 = vmatprep.subr.mxu0 %v3399
      %3456 = vmatpush1.msra.mxu0 %v3398
      %3457 = vmatprep.subr.mxu0 %v3397
      %3458 = vmatpush1.msra.mxu0 %v3396
      %3459 = vmatprep.subr.mxu0 %v3395
      %3460 = vmatpush1.msra.mxu0 %v3394
      %3461 = vmatprep.subr.mxu0 %v3393
      %3462 = vmatpush1.msra.mxu0 %v3392
      %3463 = vmatprep.subr.mxu0 0.0
      %3464 = vmatpush2.msra.mxu0 0.0
      %3465 = vmatprep.subr.mxu0 0.0
      %3466 = vmatpush2.msra.mxu0 0.0
      %3467 = vmatprep.subr.mxu0 0.0
      %3468 = vmatpush2.msra.mxu0 0.0
      %3469 = vmatprep.subr.mxu0 0.0
      %3470 = vmatpush2.msra.mxu0 0.0
      %3471 = vmatprep.subr.mxu0 0.0
      %3472 = vmatpush2.msra.mxu0 0.0
      %3473 = vmatprep.subr.mxu0 0.0
      %3474 = vmatpush2.msra.mxu0 0.0
      %3475 = vmatprep.subr.mxu0 0.0
      %3476 = vmatpush2.msra.mxu0 0.0
      %3477 = vmatprep.subr.mxu0 0.0
      %3478 = vmatpush2.msra.mxu0 0.0
      %3479 = vmatprep.subr.mxu0 0.0
      %3480 = vmatpush2.msra.mxu0 0.0
      %3481 = vmatprep.subr.mxu0 0.0
      %3482 = vmatpush2.msra.mxu0 0.0
      %3483 = vmatprep.subr.mxu0 0.0
      %3484 = vmatpush2.msra.mxu0 0.0
      %3485 = vmatprep.subr.mxu0 0.0
      %3486 = vmatpush2.msra.mxu0 0.0
      %3487 = vmatprep.subr.mxu0 0.0
      %3488 = vmatpush2.msra.mxu0 0.0
      %3489 = vmatprep.subr.mxu0 0.0
      %3490 = vmatpush2.msra.mxu0 0.0
      %3491 = vmatprep.subr.mxu0 0.0
      %3492 = vmatpush2.msra.mxu0 0.0
      %3493 = vmatprep.subr.mxu0 0.0
      %3494 = vmatpush2.msra.mxu0 0.0
      %3495 = vmatprep.mubr.f32.mxu0 0.0
      %3496 = vmatmul.mubr.f32.gmra.mxu0 %v3429
      %v3497 = vpop.f32.mrf.mxu0
      %v3498 = vadd.f32 %v3333, %v3497
      %v3499 = vpop.f32.mrf.mxu0
      %v3500 = vadd.f32 %v3333, %v3499
      %3501 = vdwg.mxu0
      %v3502 = vmul.f32 %v3498, 0.5
      %v3503 = vmul.f32 %v3500, 0.5
      %v3504 = vmul.f32 %v3498, 0.70710677
      %v3505 = vmul.f32 %v3500, 0.70710677
      %v3506 = verf.f32.pop %v3504
      %v3507 = verf.f32.pop %v3505
      %v3508 = vadd.f32 %v3506, 1.0
      %v3509 = vadd.f32 %v3507, 1.0
      %v3510 = vmul.f32 %v3502, %v3508
      %v3511 = vmul.f32 %v3503, %v3509
      %s3512 = scalar_lea.vmem %s3, 40
      %v3513 = vld [vmem:[%s3512] sm:$0xff]
      %s3514 = scalar_lea.vmem %s4, 40
      %v3515 = vld [vmem:[%s3514] sm:$0xff]
      %3516 = vst [vmem:[#allocation2 + $0x8] sm:$0xff] %v3510
      %3517 = vst [vmem:[#allocation2 + $0x10] sm:$0xff] %v3511
      %v3518 = vld [vmem:[#allocation2] sm:$0xff]
      %v3519 = vld [vmem:[#allocation2 + $0x8] sm:$0xff]
      %v3520 = vld [vmem:[#allocation2 + $0x10] sm:$0xff]
      %v3521 = vmul.f32 %v3518, %v267
      %v3522 = vmul.f32 %v3519, %v271
      %v3523 = vmul.f32 %v3520, %v269
      %v3524 = vmul.f32 %v3518, %v281
      %v3525 = vmul.f32 %v3519, %v285
      %v3526 = vmul.f32 %v3520, %v283
      %v3527 = vmul.f32 %v3518, %v293
      %v3528 = vmul.f32 %v3519, %v297
      %v3529 = vmul.f32 %v3520, %v295
      %v3530 = vld [vmem:[#allocation2 + $0x8] sm:$0xff]
      %v3531 = vld [vmem:[#allocation2 + $0x10] sm:$0xff]
      %v3532 = vld [vmem:[#allocation2 + $0x18] sm:$0xff]
      %v3533 = vmul.f32 %v3530, %v308
      %v3534 = vmul.f32 %v3531, %v312
      %v3535 = vmul.f32 %v3532, %v310
      %v3536 = vmul.f32 %v3530, %v320
      %v3537 = vmul.f32 %v3531, %v324
      %v3538 = vmul.f32 %v3532, %v322
      %v3539 = vmul.f32 %v3530, %v332
      %v3540 = vmul.f32 %v3531, %v336
      %v3541 = vmul.f32 %v3532, %v334
      %3545 = vrot.lane.b32.xlu0 %v3518, 127
      %v3546 = vpop.permute.xlu0 %3545
      %3547 = vrot.lane.b32.xlu0 %v3519, 127
      %v3548 = vpop.permute.xlu0 %3547
      %3549 = vrot.lane.b32.xlu0 %v3520, 127
      %v3550 = vpop.permute.xlu0 %3549
      %v3551 = vsel %vm296, %v3546, %v3548
      %v3552 = vsel %vm296, %v3548, %v3550
      %3556 = vrot.lane.b32.xlu0 %v3524, 126
      %v3557 = vpop.permute.xlu0 %3556
      %3558 = vrot.lane.b32.xlu0 %v3525, 126
      %v3559 = vpop.permute.xlu0 %3558
      %3560 = vrot.lane.b32.xlu0 %v3526, 126
      %v3561 = vpop.permute.xlu0 %3560
      %v3562 = vsel %vm363, %v3557, %v3559
      %v3563 = vsel %vm363, %v3559, %v3561
      %3567 = vrot.lane.b32.xlu0 %v3527, 112
      %v3568 = vpop.permute.xlu0 %3567
      %3569 = vrot.lane.b32.xlu0 %v3528, 112
      %v3570 = vpop.permute.xlu0 %3569
      %3571 = vrot.lane.b32.xlu0 %v3529, 112
      %v3572 = vpop.permute.xlu0 %3571
      %v3573 = vsel %vm375, %v3568, %v3570
      %v3574 = vsel %vm375, %v3570, %v3572
      %3575 = vrot.lane.b32.xlu0 %v3519, 111
      %v3576 = vpop.permute.xlu0 %3575
      %3577 = vrot.lane.b32.xlu0 %v3520, 111
      %v3578 = vpop.permute.xlu0 %3577
      %v3579 = vsel %vm270, %v3576, %v3578
      %3583 = vrot.lane.b32.xlu0 %v3533, 110
      %v3584 = vpop.permute.xlu0 %3583
      %3585 = vrot.lane.b32.xlu0 %v3534, 110
      %v3586 = vpop.permute.xlu0 %3585
      %3587 = vrot.lane.b32.xlu0 %v3535, 110
      %v3588 = vpop.permute.xlu0 %3587
      %v3589 = vsel %vm392, %v3584, %v3586
      %v3590 = vsel %vm392, %v3586, %v3588
      %3594 = vrot.lane.b32.xlu0 %v3536, 96
      %v3595 = vpop.permute.xlu0 %3594
      %3596 = vrot.lane.b32.xlu0 %v3537, 96
      %v3597 = vpop.permute.xlu0 %3596
      %3598 = vrot.lane.b32.xlu0 %v3538, 96
      %v3599 = vpop.permute.xlu0 %3598
      %v3600 = vsel %vm404, %v3595, %v3597
      %v3601 = vsel %vm404, %v3597, %v3599
      %3605 = vrot.lane.b32.xlu0 %v3530, 95
      %v3606 = vpop.permute.xlu0 %3605
      %3607 = vrot.lane.b32.xlu0 %v3531, 95
      %v3608 = vpop.permute.xlu0 %3607
      %3609 = vrot.lane.b32.xlu0 %v3532, 95
      %v3610 = vpop.permute.xlu0 %3609
      %v3611 = vsel %vm416, %v3606, %v3608
      %v3612 = vsel %vm416, %v3608, %v3610
      %3616 = vrot.lane.b32.xlu0 %v3539, 94
      %v3617 = vpop.permute.xlu0 %3616
      %3618 = vrot.lane.b32.xlu0 %v3540, 94
      %v3619 = vpop.permute.xlu0 %3618
      %3620 = vrot.lane.b32.xlu0 %v3541, 94
      %v3621 = vpop.permute.xlu0 %3620
      %v3622 = vsel %vm428, %v3617, %v3619
      %v3623 = vsel %vm428, %v3619, %v3621
      %3625 = vset.pattern.permute.xlu0 0
      %3626 = vperm.xlu0 %3625, %v3515
      %v3627 = vpop.permute.xlu0 %3626
      %3632 = vrot.lane.b32.xlu0 %v3521, 17
      %v3633 = vpop.permute.xlu0 %3632
      %3634 = vrot.lane.b32.xlu0 %v3522, 17
      %v3635 = vpop.permute.xlu0 %3634
      %3636 = vrot.lane.b32.xlu0 %v3523, 17
      %v3637 = vpop.permute.xlu0 %3636
      %3638 = vrot.lane.b32.xlu0 %v3551, 17
      %v3639 = vpop.permute.xlu0 %3638
      %3640 = vrot.lane.b32.xlu0 %v3552, 17
      %v3641 = vpop.permute.xlu0 %3640
      %3642 = vrot.lane.b32.xlu0 %v3550, 17
      %v3643 = vpop.permute.xlu0 %3642
      %3644 = vrot.lane.b32.xlu0 %v3562, 17
      %v3645 = vpop.permute.xlu0 %3644
      %3646 = vrot.lane.b32.xlu0 %v3563, 17
      %v3647 = vpop.permute.xlu0 %3646
      %3648 = vrot.lane.b32.xlu0 %v3561, 17
      %v3649 = vpop.permute.xlu0 %3648
      %3650 = vrot.lane.b32.xlu0 %v3573, 17
      %v3651 = vpop.permute.xlu0 %3650
      %3652 = vrot.lane.b32.xlu0 %v3574, 17
      %v3653 = vpop.permute.xlu0 %3652
      %3654 = vrot.lane.b32.xlu0 %v3572, 17
      %v3655 = vpop.permute.xlu0 %3654
      %3656 = vrot.lane.b32.xlu0 %v3576, 17
      %v3657 = vpop.permute.xlu0 %3656
      %3658 = vrot.lane.b32.xlu0 %v3579, 17
      %v3659 = vpop.permute.xlu0 %3658
      %3660 = vrot.lane.b32.xlu0 %v3578, 17
      %v3661 = vpop.permute.xlu0 %3660
      %3662 = vrot.lane.b32.xlu0 %v3584, 17
      %v3663 = vpop.permute.xlu0 %3662
      %3664 = vrot.lane.b32.xlu0 %v3589, 17
      %v3665 = vpop.permute.xlu0 %3664
      %3666 = vrot.lane.b32.xlu0 %v3590, 17
      %v3667 = vpop.permute.xlu0 %3666
      %3668 = vrot.lane.b32.xlu0 %v3595, 17
      %v3669 = vpop.permute.xlu0 %3668
      %3670 = vrot.lane.b32.xlu0 %v3600, 17
      %v3671 = vpop.permute.xlu0 %3670
      %3672 = vrot.lane.b32.xlu0 %v3601, 17
      %v3673 = vpop.permute.xlu0 %3672
      %3674 = vrot.lane.b32.xlu0 %v3606, 17
      %v3675 = vpop.permute.xlu0 %3674
      %3676 = vrot.lane.b32.xlu0 %v3611, 17
      %v3677 = vpop.permute.xlu0 %3676
      %3678 = vrot.lane.b32.xlu0 %v3612, 17
      %v3679 = vpop.permute.xlu0 %3678
      %3680 = vrot.lane.b32.xlu0 %v3617, 17
      %v3681 = vpop.permute.xlu0 %3680
      %3682 = vrot.lane.b32.xlu0 %v3622, 17
      %v3683 = vpop.permute.xlu0 %3682
      %3684 = vrot.lane.b32.xlu0 %v3623, 17
      %v3685 = vpop.permute.xlu0 %3684
      %v3686 = vsel %vm335, %v3633, %v3635
      %v3687 = vsel %vm335, %v3635, %v3637
      %v3688 = vsel %vm335, %v3639, %v3641
      %v3689 = vsel %vm335, %v3641, %v3643
      %v3690 = vsel %vm335, %v3645, %v3647
      %v3691 = vsel %vm335, %v3647, %v3649
      %v3692 = vsel %vm335, %v3651, %v3653
      %v3693 = vsel %vm335, %v3653, %v3655
      %v3694 = vsel %vm335, %v3657, %v3659
      %v3695 = vsel %vm335, %v3659, %v3661
      %v3696 = vsel %vm335, %v3663, %v3665
      %v3697 = vsel %vm335, %v3665, %v3667
      %v3698 = vsel %vm335, %v3669, %v3671
      %v3699 = vsel %vm335, %v3671, %v3673
      %v3700 = vsel %vm335, %v3675, %v3677
      %v3701 = vsel %vm335, %v3677, %v3679
      %v3702 = vsel %vm335, %v3681, %v3683
      %v3703 = vsel %vm335, %v3683, %v3685
      %v3723 = vsel %vm529, %v3513, 0
      %3725 = vmatprep.subr.mxu0 0.0
      %3726 = vmatpush1.msra.mxu0 0.0
      %3727 = vmatprep.subr.mxu0 0.0
      %3728 = vmatpush1.msra.mxu0 0.0
      %3729 = vmatprep.subr.mxu0 0.0
      %3730 = vmatpush1.msra.mxu0 0.0
      %3731 = vmatprep.subr.mxu0 0.0
      %3732 = vmatpush1.msra.mxu0 0.0
      %3733 = vmatprep.subr.mxu0 0.0
      %3734 = vmatpush1.msra.mxu0 0.0
      %3735 = vmatprep.subr.mxu0 0.0
      %3736 = vmatpush1.msra.mxu0 0.0
      %3737 = vmatprep.subr.mxu0 0.0
      %3738 = vmatpush1.msra.mxu0 0.0
      %3739 = vmatprep.subr.mxu0 %v3703
      %3740 = vmatpush1.msra.mxu0 %v3702
      %3741 = vmatprep.subr.mxu0 %v3701
      %3742 = vmatpush1.msra.mxu0 %v3700
      %3743 = vmatprep.subr.mxu0 %v3699
      %3744 = vmatpush1.msra.mxu0 %v3698
      %3745 = vmatprep.subr.mxu0 %v3697
      %3746 = vmatpush1.msra.mxu0 %v3696
      %3747 = vmatprep.subr.mxu0 %v3695
      %3748 = vmatpush1.msra.mxu0 %v3694
      %3749 = vmatprep.subr.mxu0 %v3693
      %3750 = vmatpush1.msra.mxu0 %v3692
      %3751 = vmatprep.subr.mxu0 %v3691
      %3752 = vmatpush1.msra.mxu0 %v3690
      %3753 = vmatprep.subr.mxu0 %v3689
      %3754 = vmatpush1.msra.mxu0 %v3688
      %3755 = vmatprep.subr.mxu0 %v3687
      %3756 = vmatpush1.msra.mxu0 %v3686
      %3757 = vmatprep.subr.mxu0 0.0
      %3758 = vmatpush2.msra.mxu0 0.0
      %3759 = vmatprep.subr.mxu0 0.0
      %3760 = vmatpush2.msra.mxu0 0.0
      %3761 = vmatprep.subr.mxu0 0.0
      %3762 = vmatpush2.msra.mxu0 0.0
      %3763 = vmatprep.subr.mxu0 0.0
      %3764 = vmatpush2.msra.mxu0 0.0
      %3765 = vmatprep.subr.mxu0 0.0
      %3766 = vmatpush2.msra.mxu0 0.0
      %3767 = vmatprep.subr.mxu0 0.0
      %3768 = vmatpush2.msra.mxu0 0.0
      %3769 = vmatprep.subr.mxu0 0.0
      %3770 = vmatpush2.msra.mxu0 0.0
      %3771 = vmatprep.subr.mxu0 0.0
      %3772 = vmatpush2.msra.mxu0 0.0
      %3773 = vmatprep.subr.mxu0 0.0
      %3774 = vmatpush2.msra.mxu0 0.0
      %3775 = vmatprep.subr.mxu0 0.0
      %3776 = vmatpush2.msra.mxu0 0.0
      %3777 = vmatprep.subr.mxu0 0.0
      %3778 = vmatpush2.msra.mxu0 0.0
      %3779 = vmatprep.subr.mxu0 0.0
      %3780 = vmatpush2.msra.mxu0 0.0
      %3781 = vmatprep.subr.mxu0 0.0
      %3782 = vmatpush2.msra.mxu0 0.0
      %3783 = vmatprep.subr.mxu0 0.0
      %3784 = vmatpush2.msra.mxu0 0.0
      %3785 = vmatprep.subr.mxu0 0.0
      %3786 = vmatpush2.msra.mxu0 0.0
      %3787 = vmatprep.subr.mxu0 0.0
      %3788 = vmatpush2.msra.mxu0 0.0
      %3789 = vmatprep.mubr.f32.mxu0 0.0
      %3790 = vmatmul.mubr.f32.gmra.mxu0 %v3723
      %v3791 = vpop.f32.mrf.mxu0
      %v3792 = vadd.f32 %v3627, %v3791
      %v3793 = vpop.f32.mrf.mxu0
      %v3794 = vadd.f32 %v3627, %v3793
      %3795 = vdwg.mxu0
      %v3796 = vadd.f32 %v3792, %v3216
      %v3797 = vadd.f32 %v3794, %v3217
      %s3798 = scalar_lea.vmem %s1, 48
      %v3799 = vld [vmem:[%s3798] sm:$0xff]
      %s3800 = scalar_lea.vmem %s2, 48
      %v3801 = vld [vmem:[%s3800] sm:$0xff]
      %3802 = vst [vmem:[#allocation2 + $0x8] sm:$0xff] %v3796
      %3803 = vst [vmem:[#allocation2 + $0x10] sm:$0xff] %v3797
      %v3804 = vld [vmem:[#allocation2] sm:$0xff]
      %v3805 = vld [vmem:[#allocation2 + $0x8] sm:$0xff]
      %v3806 = vld [vmem:[#allocation2 + $0x10] sm:$0xff]
      %v3807 = vmul.f32 %v3804, %v267
      %v3808 = vmul.f32 %v3805, %v271
      %v3809 = vmul.f32 %v3806, %v269
      %v3810 = vmul.f32 %v3804, %v281
      %v3811 = vmul.f32 %v3805, %v285
      %v3812 = vmul.f32 %v3806, %v283
      %v3813 = vmul.f32 %v3804, %v293
      %v3814 = vmul.f32 %v3805, %v297
      %v3815 = vmul.f32 %v3806, %v295
      %v3816 = vld [vmem:[#allocation2 + $0x8] sm:$0xff]
      %v3817 = vld [vmem:[#allocation2 + $0x10] sm:$0xff]
      %v3818 = vld [vmem:[#allocation2 + $0x18] sm:$0xff]
      %v3819 = vmul.f32 %v3816, %v308
      %v3820 = vmul.f32 %v3817, %v312
      %v3821 = vmul.f32 %v3818, %v310
      %v3822 = vmul.f32 %v3816, %v320
      %v3823 = vmul.f32 %v3817, %v324
      %v3824 = vmul.f32 %v3818, %v322
      %v3825 = vmul.f32 %v3816, %v332
      %v3826 = vmul.f32 %v3817, %v336
      %v3827 = vmul.f32 %v3818, %v334
      %3831 = vrot.lane.b32.xlu0 %v3804, 127
      %v3832 = vpop.permute.xlu0 %3831
      %3833 = vrot.lane.b32.xlu0 %v3805, 127
      %v3834 = vpop.permute.xlu0 %3833
      %3835 = vrot.lane.b32.xlu0 %v3806, 127
      %v3836 = vpop.permute.xlu0 %3835
      %v3837 = vsel %vm296, %v3832, %v3834
      %v3838 = vsel %vm296, %v3834, %v3836
      %3842 = vrot.lane.b32.xlu0 %v3810, 126
      %v3843 = vpop.permute.xlu0 %3842
      %3844 = vrot.lane.b32.xlu0 %v3811, 126
      %v3845 = vpop.permute.xlu0 %3844
      %3846 = vrot.lane.b32.xlu0 %v3812, 126
      %v3847 = vpop.permute.xlu0 %3846
      %v3848 = vsel %vm363, %v3843, %v3845
      %v3849 = vsel %vm363, %v3845, %v3847
      %3853 = vrot.lane.b32.xlu0 %v3813, 112
      %v3854 = vpop.permute.xlu0 %3853
      %3855 = vrot.lane.b32.xlu0 %v3814, 112
      %v3856 = vpop.permute.xlu0 %3855
      %3857 = vrot.lane.b32.xlu0 %v3815, 112
      %v3858 = vpop.permute.xlu0 %3857
      %v3859 = vsel %vm375, %v3854, %v3856
      %v3860 = vsel %vm375, %v3856, %v3858
      %3861 = vrot.lane.b32.xlu0 %v3805, 111
      %v3862 = vpop.permute.xlu0 %3861
      %3863 = vrot.lane.b32.xlu0 %v3806, 111
      %v3864 = vpop.permute.xlu0 %3863
      %v3865 = vsel %vm270, %v3862, %v3864
      %3869 = vrot.lane.b32.xlu0 %v3819, 110
      %v3870 = vpop.permute.xlu0 %3869
      %3871 = vrot.lane.b32.xlu0 %v3820, 110
      %v3872 = vpop.permute.xlu0 %3871
      %3873 = vrot.lane.b32.xlu0 %v3821, 110
      %v3874 = vpop.permute.xlu0 %3873
      %v3875 = vsel %vm392, %v3870, %v3872
      %v3876 = vsel %vm392, %v3872, %v3874
      %3880 = vrot.lane.b32.xlu0 %v3822, 96
      %v3881 = vpop.permute.xlu0 %3880
      %3882 = vrot.lane.b32.xlu0 %v3823, 96
      %v3883 = vpop.permute.xlu0 %3882
      %3884 = vrot.lane.b32.xlu0 %v3824, 96
      %v3885 = vpop.permute.xlu0 %3884
      %v3886 = vsel %vm404, %v3881, %v3883
      %v3887 = vsel %vm404, %v3883, %v3885
      %3891 = vrot.lane.b32.xlu0 %v3816, 95
      %v3892 = vpop.permute.xlu0 %3891
      %3893 = vrot.lane.b32.xlu0 %v3817, 95
      %v3894 = vpop.permute.xlu0 %3893
      %3895 = vrot.lane.b32.xlu0 %v3818, 95
      %v3896 = vpop.permute.xlu0 %3895
      %v3897 = vsel %vm416, %v3892, %v3894
      %v3898 = vsel %vm416, %v3894, %v3896
      %3902 = vrot.lane.b32.xlu0 %v3825, 94
      %v3903 = vpop.permute.xlu0 %3902
      %3904 = vrot.lane.b32.xlu0 %v3826, 94
      %v3905 = vpop.permute.xlu0 %3904
      %3906 = vrot.lane.b32.xlu0 %v3827, 94
      %v3907 = vpop.permute.xlu0 %3906
      %v3908 = vsel %vm428, %v3903, %v3905
      %v3909 = vsel %vm428, %v3905, %v3907
      %3911 = vset.pattern.permute.xlu0 0
      %3912 = vperm.xlu0 %3911, %v3801
      %v3913 = vpop.permute.xlu0 %3912
      %3918 = vrot.lane.b32.xlu0 %v3807, 17
      %v3919 = vpop.permute.xlu0 %3918
      %3920 = vrot.lane.b32.xlu0 %v3808, 17
      %v3921 = vpop.permute.xlu0 %3920
      %3922 = vrot.lane.b32.xlu0 %v3809, 17
      %v3923 = vpop.permute.xlu0 %3922
      %3924 = vrot.lane.b32.xlu0 %v3837, 17
      %v3925 = vpop.permute.xlu0 %3924
      %3926 = vrot.lane.b32.xlu0 %v3838, 17
      %v3927 = vpop.permute.xlu0 %3926
      %3928 = vrot.lane.b32.xlu0 %v3836, 17
      %v3929 = vpop.permute.xlu0 %3928
      %3930 = vrot.lane.b32.xlu0 %v3848, 17
      %v3931 = vpop.permute.xlu0 %3930
      %3932 = vrot.lane.b32.xlu0 %v3849, 17
      %v3933 = vpop.permute.xlu0 %3932
      %3934 = vrot.lane.b32.xlu0 %v3847, 17
      %v3935 = vpop.permute.xlu0 %3934
      %3936 = vrot.lane.b32.xlu0 %v3859, 17
      %v3937 = vpop.permute.xlu0 %3936
      %3938 = vrot.lane.b32.xlu0 %v3860, 17
      %v3939 = vpop.permute.xlu0 %3938
      %3940 = vrot.lane.b32.xlu0 %v3858, 17
      %v3941 = vpop.permute.xlu0 %3940
      %3942 = vrot.lane.b32.xlu0 %v3862, 17
      %v3943 = vpop.permute.xlu0 %3942
      %3944 = vrot.lane.b32.xlu0 %v3865, 17
      %v3945 = vpop.permute.xlu0 %3944
      %3946 = vrot.lane.b32.xlu0 %v3864, 17
      %v3947 = vpop.permute.xlu0 %3946
      %3948 = vrot.lane.b32.xlu0 %v3870, 17
      %v3949 = vpop.permute.xlu0 %3948
      %3950 = vrot.lane.b32.xlu0 %v3875, 17
      %v3951 = vpop.permute.xlu0 %3950
      %3952 = vrot.lane.b32.xlu0 %v3876, 17
      %v3953 = vpop.permute.xlu0 %3952
      %3954 = vrot.lane.b32.xlu0 %v3881, 17
      %v3955 = vpop.permute.xlu0 %3954
      %3956 = vrot.lane.b32.xlu0 %v3886, 17
      %v3957 = vpop.permute.xlu0 %3956
      %3958 = vrot.lane.b32.xlu0 %v3887, 17
      %v3959 = vpop.permute.xlu0 %3958
      %3960 = vrot.lane.b32.xlu0 %v3892, 17
      %v3961 = vpop.permute.xlu0 %3960
      %3962 = vrot.lane.b32.xlu0 %v3897, 17
      %v3963 = vpop.permute.xlu0 %3962
      %3964 = vrot.lane.b32.xlu0 %v3898, 17
      %v3965 = vpop.permute.xlu0 %3964
      %3966 = vrot.lane.b32.xlu0 %v3903, 17
      %v3967 = vpop.permute.xlu0 %3966
      %3968 = vrot.lane.b32.xlu0 %v3908, 17
      %v3969 = vpop.permute.xlu0 %3968
      %3970 = vrot.lane.b32.xlu0 %v3909, 17
      %v3971 = vpop.permute.xlu0 %3970
      %v3972 = vsel %vm335, %v3919, %v3921
      %v3973 = vsel %vm335, %v3921, %v3923
      %v3974 = vsel %vm335, %v3925, %v3927
      %v3975 = vsel %vm335, %v3927, %v3929
      %v3976 = vsel %vm335, %v3931, %v3933
      %v3977 = vsel %vm335, %v3933, %v3935
      %v3978 = vsel %vm335, %v3937, %v3939
      %v3979 = vsel %vm335, %v3939, %v3941
      %v3980 = vsel %vm335, %v3943, %v3945
      %v3981 = vsel %vm335, %v3945, %v3947
      %v3982 = vsel %vm335, %v3949, %v3951
      %v3983 = vsel %vm335, %v3951, %v3953
      %v3984 = vsel %vm335, %v3955, %v3957
      %v3985 = vsel %vm335, %v3957, %v3959
      %v3986 = vsel %vm335, %v3961, %v3963
      %v3987 = vsel %vm335, %v3963, %v3965
      %v3988 = vsel %vm335, %v3967, %v3969
      %v3989 = vsel %vm335, %v3969, %v3971
      %v4009 = vsel %vm529, %v3799, 0
      %4011 = vmatprep.subr.mxu0 0.0
      %4012 = vmatpush1.msra.mxu0 0.0
      %4013 = vmatprep.subr.mxu0 0.0
      %4014 = vmatpush1.msra.mxu0 0.0
      %4015 = vmatprep.subr.mxu0 0.0
      %4016 = vmatpush1.msra.mxu0 0.0
      %4017 = vmatprep.subr.mxu0 0.0
      %4018 = vmatpush1.msra.mxu0 0.0
      %4019 = vmatprep.subr.mxu0 0.0
      %4020 = vmatpush1.msra.mxu0 0.0
      %4021 = vmatprep.subr.mxu0 0.0
      %4022 = vmatpush1.msra.mxu0 0.0
      %4023 = vmatprep.subr.mxu0 0.0
      %4024 = vmatpush1.msra.mxu0 0.0
      %4025 = vmatprep.subr.mxu0 %v3989
      %4026 = vmatpush1.msra.mxu0 %v3988
      %4027 = vmatprep.subr.mxu0 %v3987
      %4028 = vmatpush1.msra.mxu0 %v3986
      %4029 = vmatprep.subr.mxu0 %v3985
      %4030 = vmatpush1.msra.mxu0 %v3984
      %4031 = vmatprep.subr.mxu0 %v3983
      %4032 = vmatpush1.msra.mxu0 %v3982
      %4033 = vmatprep.subr.mxu0 %v3981
      %4034 = vmatpush1.msra.mxu0 %v3980
      %4035 = vmatprep.subr.mxu0 %v3979
      %4036 = vmatpush1.msra.mxu0 %v3978
      %4037 = vmatprep.subr.mxu0 %v3977
      %4038 = vmatpush1.msra.mxu0 %v3976
      %4039 = vmatprep.subr.mxu0 %v3975
      %4040 = vmatpush1.msra.mxu0 %v3974
      %4041 = vmatprep.subr.mxu0 %v3973
      %4042 = vmatpush1.msra.mxu0 %v3972
      %4043 = vmatprep.subr.mxu0 0.0
      %4044 = vmatpush2.msra.mxu0 0.0
      %4045 = vmatprep.subr.mxu0 0.0
      %4046 = vmatpush2.msra.mxu0 0.0
      %4047 = vmatprep.subr.mxu0 0.0
      %4048 = vmatpush2.msra.mxu0 0.0
      %4049 = vmatprep.subr.mxu0 0.0
      %4050 = vmatpush2.msra.mxu0 0.0
      %4051 = vmatprep.subr.mxu0 0.0
      %4052 = vmatpush2.msra.mxu0 0.0
      %4053 = vmatprep.subr.mxu0 0.0
      %4054 = vmatpush2.msra.mxu0 0.0
      %4055 = vmatprep.subr.mxu0 0.0
      %4056 = vmatpush2.msra.mxu0 0.0
      %4057 = vmatprep.subr.mxu0 0.0
      %4058 = vmatpush2.msra.mxu0 0.0
      %4059 = vmatprep.subr.mxu0 0.0
      %4060 = vmatpush2.msra.mxu0 0.0
      %4061 = vmatprep.subr.mxu0 0.0
      %4062 = vmatpush2.msra.mxu0 0.0
      %4063 = vmatprep.subr.mxu0 0.0
      %4064 = vmatpush2.msra.mxu0 0.0
      %4065 = vmatprep.subr.mxu0 0.0
      %4066 = vmatpush2.msra.mxu0 0.0
      %4067 = vmatprep.subr.mxu0 0.0
      %4068 = vmatpush2.msra.mxu0 0.0
      %4069 = vmatprep.subr.mxu0 0.0
      %4070 = vmatpush2.msra.mxu0 0.0
      %4071 = vmatprep.subr.mxu0 0.0
      %4072 = vmatpush2.msra.mxu0 0.0
      %4073 = vmatprep.subr.mxu0 0.0
      %4074 = vmatpush2.msra.mxu0 0.0
      %4075 = vmatprep.mubr.f32.mxu0 0.0
      %4076 = vmatmul.mubr.f32.gmra.mxu0 %v4009
      %v4077 = vpop.f32.mrf.mxu0
      %v4078 = vadd.f32 %v3913, %v4077
      %v4079 = vpop.f32.mrf.mxu0
      %v4080 = vadd.f32 %v3913, %v4079
      %4081 = vdwg.mxu0
      %v4082 = vmul.f32 %v4078, 0.5
      %v4083 = vmul.f32 %v4080, 0.5
      %v4084 = vmul.f32 %v4078, 0.70710677
      %v4085 = vmul.f32 %v4080, 0.70710677
      %v4086 = verf.f32.pop %v4084
      %v4087 = verf.f32.pop %v4085
      %v4088 = vadd.f32 %v4086, 1.0
      %v4089 = vadd.f32 %v4087, 1.0
      %v4090 = vmul.f32 %v4082, %v4088
      %v4091 = vmul.f32 %v4083, %v4089
      %s4092 = scalar_lea.vmem %s3, 48
      %v4093 = vld [vmem:[%s4092] sm:$0xff]
      %s4094 = scalar_lea.vmem %s4, 48
      %v4095 = vld [vmem:[%s4094] sm:$0xff]
      %4096 = vst [vmem:[#allocation2 + $0x8] sm:$0xff] %v4090
      %4097 = vst [vmem:[#allocation2 + $0x10] sm:$0xff] %v4091
      %v4098 = vld [vmem:[#allocation2] sm:$0xff]
      %v4099 = vld [vmem:[#allocation2 + $0x8] sm:$0xff]
      %v4100 = vld [vmem:[#allocation2 + $0x10] sm:$0xff]
      %v4101 = vmul.f32 %v4098, %v267
      %v4102 = vmul.f32 %v4099, %v271
      %v4103 = vmul.f32 %v4100, %v269
      %v4104 = vmul.f32 %v4098, %v281
      %v4105 = vmul.f32 %v4099, %v285
      %v4106 = vmul.f32 %v4100, %v283
      %v4107 = vmul.f32 %v4098, %v293
      %v4108 = vmul.f32 %v4099, %v297
      %v4109 = vmul.f32 %v4100, %v295
      %v4110 = vld [vmem:[#allocation2 + $0x8] sm:$0xff]
      %v4111 = vld [vmem:[#allocation2 + $0x10] sm:$0xff]
      %v4112 = vld [vmem:[#allocation2 + $0x18] sm:$0xff]
      %v4113 = vmul.f32 %v4110, %v308
      %v4114 = vmul.f32 %v4111, %v312
      %v4115 = vmul.f32 %v4112, %v310
      %v4116 = vmul.f32 %v4110, %v320
      %v4117 = vmul.f32 %v4111, %v324
      %v4118 = vmul.f32 %v4112, %v322
      %v4119 = vmul.f32 %v4110, %v332
      %v4120 = vmul.f32 %v4111, %v336
      %v4121 = vmul.f32 %v4112, %v334
      %4125 = vrot.lane.b32.xlu0 %v4098, 127
      %v4126 = vpop.permute.xlu0 %4125
      %4127 = vrot.lane.b32.xlu0 %v4099, 127
      %v4128 = vpop.permute.xlu0 %4127
      %4129 = vrot.lane.b32.xlu0 %v4100, 127
      %v4130 = vpop.permute.xlu0 %4129
      %v4131 = vsel %vm296, %v4126, %v4128
      %v4132 = vsel %vm296, %v4128, %v4130
      %4136 = vrot.lane.b32.xlu0 %v4104, 126
      %v4137 = vpop.permute.xlu0 %4136
      %4138 = vrot.lane.b32.xlu0 %v4105, 126
      %v4139 = vpop.permute.xlu0 %4138
      %4140 = vrot.lane.b32.xlu0 %v4106, 126
      %v4141 = vpop.permute.xlu0 %4140
      %v4142 = vsel %vm363, %v4137, %v4139
      %v4143 = vsel %vm363, %v4139, %v4141
      %4147 = vrot.lane.b32.xlu0 %v4107, 112
      %v4148 = vpop.permute.xlu0 %4147
      %4149 = vrot.lane.b32.xlu0 %v4108, 112
      %v4150 = vpop.permute.xlu0 %4149
      %4151 = vrot.lane.b32.xlu0 %v4109, 112
      %v4152 = vpop.permute.xlu0 %4151
      %v4153 = vsel %vm375, %v4148, %v4150
      %v4154 = vsel %vm375, %v4150, %v4152
      %4155 = vrot.lane.b32.xlu0 %v4099, 111
      %v4156 = vpop.permute.xlu0 %4155
      %4157 = vrot.lane.b32.xlu0 %v4100, 111
      %v4158 = vpop.permute.xlu0 %4157
      %v4159 = vsel %vm270, %v4156, %v4158
      %4163 = vrot.lane.b32.xlu0 %v4113, 110
      %v4164 = vpop.permute.xlu0 %4163
      %4165 = vrot.lane.b32.xlu0 %v4114, 110
      %v4166 = vpop.permute.xlu0 %4165
      %4167 = vrot.lane.b32.xlu0 %v4115, 110
      %v4168 = vpop.permute.xlu0 %4167
      %v4169 = vsel %vm392, %v4164, %v4166
      %v4170 = vsel %vm392, %v4166, %v4168
      %4174 = vrot.lane.b32.xlu0 %v4116, 96
      %v4175 = vpop.permute.xlu0 %4174
      %4176 = vrot.lane.b32.xlu0 %v4117, 96
      %v4177 = vpop.permute.xlu0 %4176
      %4178 = vrot.lane.b32.xlu0 %v4118, 96
      %v4179 = vpop.permute.xlu0 %4178
      %v4180 = vsel %vm404, %v4175, %v4177
      %v4181 = vsel %vm404, %v4177, %v4179
      %4185 = vrot.lane.b32.xlu0 %v4110, 95
      %v4186 = vpop.permute.xlu0 %4185
      %4187 = vrot.lane.b32.xlu0 %v4111, 95
      %v4188 = vpop.permute.xlu0 %4187
      %4189 = vrot.lane.b32.xlu0 %v4112, 95
      %v4190 = vpop.permute.xlu0 %4189
      %v4191 = vsel %vm416, %v4186, %v4188
      %v4192 = vsel %vm416, %v4188, %v4190
      %4196 = vrot.lane.b32.xlu0 %v4119, 94
      %v4197 = vpop.permute.xlu0 %4196
      %4198 = vrot.lane.b32.xlu0 %v4120, 94
      %v4199 = vpop.permute.xlu0 %4198
      %4200 = vrot.lane.b32.xlu0 %v4121, 94
      %v4201 = vpop.permute.xlu0 %4200
      %v4202 = vsel %vm428, %v4197, %v4199
      %v4203 = vsel %vm428, %v4199, %v4201
      %4205 = vset.pattern.permute.xlu0 0
      %4206 = vperm.xlu0 %4205, %v4095
      %v4207 = vpop.permute.xlu0 %4206
      %4212 = vrot.lane.b32.xlu0 %v4101, 17
      %v4213 = vpop.permute.xlu0 %4212
      %4214 = vrot.lane.b32.xlu0 %v4102, 17
      %v4215 = vpop.permute.xlu0 %4214
      %4216 = vrot.lane.b32.xlu0 %v4103, 17
      %v4217 = vpop.permute.xlu0 %4216
      %4218 = vrot.lane.b32.xlu0 %v4131, 17
      %v4219 = vpop.permute.xlu0 %4218
      %4220 = vrot.lane.b32.xlu0 %v4132, 17
      %v4221 = vpop.permute.xlu0 %4220
      %4222 = vrot.lane.b32.xlu0 %v4130, 17
      %v4223 = vpop.permute.xlu0 %4222
      %4224 = vrot.lane.b32.xlu0 %v4142, 17
      %v4225 = vpop.permute.xlu0 %4224
      %4226 = vrot.lane.b32.xlu0 %v4143, 17
      %v4227 = vpop.permute.xlu0 %4226
      %4228 = vrot.lane.b32.xlu0 %v4141, 17
      %v4229 = vpop.permute.xlu0 %4228
      %4230 = vrot.lane.b32.xlu0 %v4153, 17
      %v4231 = vpop.permute.xlu0 %4230
      %4232 = vrot.lane.b32.xlu0 %v4154, 17
      %v4233 = vpop.permute.xlu0 %4232
      %4234 = vrot.lane.b32.xlu0 %v4152, 17
      %v4235 = vpop.permute.xlu0 %4234
      %4236 = vrot.lane.b32.xlu0 %v4156, 17
      %v4237 = vpop.permute.xlu0 %4236
      %4238 = vrot.lane.b32.xlu0 %v4159, 17
      %v4239 = vpop.permute.xlu0 %4238
      %4240 = vrot.lane.b32.xlu0 %v4158, 17
      %v4241 = vpop.permute.xlu0 %4240
      %4242 = vrot.lane.b32.xlu0 %v4164, 17
      %v4243 = vpop.permute.xlu0 %4242
      %4244 = vrot.lane.b32.xlu0 %v4169, 17
      %v4245 = vpop.permute.xlu0 %4244
      %4246 = vrot.lane.b32.xlu0 %v4170, 17
      %v4247 = vpop.permute.xlu0 %4246
      %4248 = vrot.lane.b32.xlu0 %v4175, 17
      %v4249 = vpop.permute.xlu0 %4248
      %4250 = vrot.lane.b32.xlu0 %v4180, 17
      %v4251 = vpop.permute.xlu0 %4250
      %4252 = vrot.lane.b32.xlu0 %v4181, 17
      %v4253 = vpop.permute.xlu0 %4252
      %4254 = vrot.lane.b32.xlu0 %v4186, 17
      %v4255 = vpop.permute.xlu0 %4254
      %4256 = vrot.lane.b32.xlu0 %v4191, 17
      %v4257 = vpop.permute.xlu0 %4256
      %4258 = vrot.lane.b32.xlu0 %v4192, 17
      %v4259 = vpop.permute.xlu0 %4258
      %4260 = vrot.lane.b32.xlu0 %v4197, 17
      %v4261 = vpop.permute.xlu0 %4260
      %4262 = vrot.lane.b32.xlu0 %v4202, 17
      %v4263 = vpop.permute.xlu0 %4262
      %4264 = vrot.lane.b32.xlu0 %v4203, 17
      %v4265 = vpop.permute.xlu0 %4264
      %v4266 = vsel %vm335, %v4213, %v4215
      %v4267 = vsel %vm335, %v4215, %v4217
      %v4268 = vsel %vm335, %v4219, %v4221
      %v4269 = vsel %vm335, %v4221, %v4223
      %v4270 = vsel %vm335, %v4225, %v4227
      %v4271 = vsel %vm335, %v4227, %v4229
      %v4272 = vsel %vm335, %v4231, %v4233
      %v4273 = vsel %vm335, %v4233, %v4235
      %v4274 = vsel %vm335, %v4237, %v4239
      %v4275 = vsel %vm335, %v4239, %v4241
      %v4276 = vsel %vm335, %v4243, %v4245
      %v4277 = vsel %vm335, %v4245, %v4247
      %v4278 = vsel %vm335, %v4249, %v4251
      %v4279 = vsel %vm335, %v4251, %v4253
      %v4280 = vsel %vm335, %v4255, %v4257
      %v4281 = vsel %vm335, %v4257, %v4259
      %v4282 = vsel %vm335, %v4261, %v4263
      %v4283 = vsel %vm335, %v4263, %v4265
      %v4303 = vsel %vm529, %v4093, 0
      %4305 = vmatprep.subr.mxu0 0.0
      %4306 = vmatpush1.msra.mxu0 0.0
      %4307 = vmatprep.subr.mxu0 0.0
      %4308 = vmatpush1.msra.mxu0 0.0
      %4309 = vmatprep.subr.mxu0 0.0
      %4310 = vmatpush1.msra.mxu0 0.0
      %4311 = vmatprep.subr.mxu0 0.0
      %4312 = vmatpush1.msra.mxu0 0.0
      %4313 = vmatprep.subr.mxu0 0.0
      %4314 = vmatpush1.msra.mxu0 0.0
      %4315 = vmatprep.subr.mxu0 0.0
      %4316 = vmatpush1.msra.mxu0 0.0
      %4317 = vmatprep.subr.mxu0 0.0
      %4318 = vmatpush1.msra.mxu0 0.0
      %4319 = vmatprep.subr.mxu0 %v4283
      %4320 = vmatpush1.msra.mxu0 %v4282
      %4321 = vmatprep.subr.mxu0 %v4281
      %4322 = vmatpush1.msra.mxu0 %v4280
      %4323 = vmatprep.subr.mxu0 %v4279
      %4324 = vmatpush1.msra.mxu0 %v4278
      %4325 = vmatprep.subr.mxu0 %v4277
      %4326 = vmatpush1.msra.mxu0 %v4276
      %4327 = vmatprep.subr.mxu0 %v4275
      %4328 = vmatpush1.msra.mxu0 %v4274
      %4329 = vmatprep.subr.mxu0 %v4273
      %4330 = vmatpush1.msra.mxu0 %v4272
      %4331 = vmatprep.subr.mxu0 %v4271
      %4332 = vmatpush1.msra.mxu0 %v4270
      %4333 = vmatprep.subr.mxu0 %v4269
      %4334 = vmatpush1.msra.mxu0 %v4268
      %4335 = vmatprep.subr.mxu0 %v4267
      %4336 = vmatpush1.msra.mxu0 %v4266
      %4337 = vmatprep.subr.mxu0 0.0
      %4338 = vmatpush2.msra.mxu0 0.0
      %4339 = vmatprep.subr.mxu0 0.0
      %4340 = vmatpush2.msra.mxu0 0.0
      %4341 = vmatprep.subr.mxu0 0.0
      %4342 = vmatpush2.msra.mxu0 0.0
      %4343 = vmatprep.subr.mxu0 0.0
      %4344 = vmatpush2.msra.mxu0 0.0
      %4345 = vmatprep.subr.mxu0 0.0
      %4346 = vmatpush2.msra.mxu0 0.0
      %4347 = vmatprep.subr.mxu0 0.0
      %4348 = vmatpush2.msra.mxu0 0.0
      %4349 = vmatprep.subr.mxu0 0.0
      %4350 = vmatpush2.msra.mxu0 0.0
      %4351 = vmatprep.subr.mxu0 0.0
      %4352 = vmatpush2.msra.mxu0 0.0
      %4353 = vmatprep.subr.mxu0 0.0
      %4354 = vmatpush2.msra.mxu0 0.0
      %4355 = vmatprep.subr.mxu0 0.0
      %4356 = vmatpush2.msra.mxu0 0.0
      %4357 = vmatprep.subr.mxu0 0.0
      %4358 = vmatpush2.msra.mxu0 0.0
      %4359 = vmatprep.subr.mxu0 0.0
      %4360 = vmatpush2.msra.mxu0 0.0
      %4361 = vmatprep.subr.mxu0 0.0
      %4362 = vmatpush2.msra.mxu0 0.0
      %4363 = vmatprep.subr.mxu0 0.0
      %4364 = vmatpush2.msra.mxu0 0.0
      %4365 = vmatprep.subr.mxu0 0.0
      %4366 = vmatpush2.msra.mxu0 0.0
      %4367 = vmatprep.subr.mxu0 0.0
      %4368 = vmatpush2.msra.mxu0 0.0
      %4369 = vmatprep.mubr.f32.mxu0 0.0
      %4370 = vmatmul.mubr.f32.gmra.mxu0 %v4303
      %v4371 = vpop.f32.mrf.mxu0
      %v4372 = vadd.f32 %v4207, %v4371
      %v4373 = vpop.f32.mrf.mxu0
      %v4374 = vadd.f32 %v4207, %v4373
      %4375 = vdwg.mxu0
      %v4376 = vadd.f32 %v4372, %v3796
      %v4377 = vadd.f32 %v4374, %v3797
      %s4378 = scalar_lea.vmem %s1, 56
      %v4379 = vld [vmem:[%s4378] sm:$0xff]
      %s4380 = scalar_lea.vmem %s2, 56
      %v4381 = vld [vmem:[%s4380] sm:$0xff]
      %4382 = vst [vmem:[#allocation2 + $0x8] sm:$0xff] %v4376
      %4383 = vst [vmem:[#allocation2 + $0x10] sm:$0xff] %v4377
      %v4384 = vld [vmem:[#allocation2] sm:$0xff]
      %v4385 = vld [vmem:[#allocation2 + $0x8] sm:$0xff]
      %v4386 = vld [vmem:[#allocation2 + $0x10] sm:$0xff]
      %v4387 = vmul.f32 %v4384, %v267
      %v4388 = vmul.f32 %v4385, %v271
      %v4389 = vmul.f32 %v4386, %v269
      %v4390 = vmul.f32 %v4384, %v281
      %v4391 = vmul.f32 %v4385, %v285
      %v4392 = vmul.f32 %v4386, %v283
      %v4393 = vmul.f32 %v4384, %v293
      %v4394 = vmul.f32 %v4385, %v297
      %v4395 = vmul.f32 %v4386, %v295
      %v4396 = vld [vmem:[#allocation2 + $0x8] sm:$0xff]
      %v4397 = vld [vmem:[#allocation2 + $0x10] sm:$0xff]
      %v4398 = vld [vmem:[#allocation2 + $0x18] sm:$0xff]
      %v4399 = vmul.f32 %v4396, %v308
      %v4400 = vmul.f32 %v4397, %v312
      %v4401 = vmul.f32 %v4398, %v310
      %v4402 = vmul.f32 %v4396, %v320
      %v4403 = vmul.f32 %v4397, %v324
      %v4404 = vmul.f32 %v4398, %v322
      %v4405 = vmul.f32 %v4396, %v332
      %v4406 = vmul.f32 %v4397, %v336
      %v4407 = vmul.f32 %v4398, %v334
      %4411 = vrot.lane.b32.xlu0 %v4384, 127
      %v4412 = vpop.permute.xlu0 %4411
      %4413 = vrot.lane.b32.xlu0 %v4385, 127
      %v4414 = vpop.permute.xlu0 %4413
      %4415 = vrot.lane.b32.xlu0 %v4386, 127
      %v4416 = vpop.permute.xlu0 %4415
      %v4417 = vsel %vm296, %v4412, %v4414
      %v4418 = vsel %vm296, %v4414, %v4416
      %4422 = vrot.lane.b32.xlu0 %v4390, 126
      %v4423 = vpop.permute.xlu0 %4422
      %4424 = vrot.lane.b32.xlu0 %v4391, 126
      %v4425 = vpop.permute.xlu0 %4424
      %4426 = vrot.lane.b32.xlu0 %v4392, 126
      %v4427 = vpop.permute.xlu0 %4426
      %v4428 = vsel %vm363, %v4423, %v4425
      %v4429 = vsel %vm363, %v4425, %v4427
      %4433 = vrot.lane.b32.xlu0 %v4393, 112
      %v4434 = vpop.permute.xlu0 %4433
      %4435 = vrot.lane.b32.xlu0 %v4394, 112
      %v4436 = vpop.permute.xlu0 %4435
      %4437 = vrot.lane.b32.xlu0 %v4395, 112
      %v4438 = vpop.permute.xlu0 %4437
      %v4439 = vsel %vm375, %v4434, %v4436
      %v4440 = vsel %vm375, %v4436, %v4438
      %4441 = vrot.lane.b32.xlu0 %v4385, 111
      %v4442 = vpop.permute.xlu0 %4441
      %4443 = vrot.lane.b32.xlu0 %v4386, 111
      %v4444 = vpop.permute.xlu0 %4443
      %v4445 = vsel %vm270, %v4442, %v4444
      %4449 = vrot.lane.b32.xlu0 %v4399, 110
      %v4450 = vpop.permute.xlu0 %4449
      %4451 = vrot.lane.b32.xlu0 %v4400, 110
      %v4452 = vpop.permute.xlu0 %4451
      %4453 = vrot.lane.b32.xlu0 %v4401, 110
      %v4454 = vpop.permute.xlu0 %4453
      %v4455 = vsel %vm392, %v4450, %v4452
      %v4456 = vsel %vm392, %v4452, %v4454
      %4460 = vrot.lane.b32.xlu0 %v4402, 96
      %v4461 = vpop.permute.xlu0 %4460
      %4462 = vrot.lane.b32.xlu0 %v4403, 96
      %v4463 = vpop.permute.xlu0 %4462
      %4464 = vrot.lane.b32.xlu0 %v4404, 96
      %v4465 = vpop.permute.xlu0 %4464
      %v4466 = vsel %vm404, %v4461, %v4463
      %v4467 = vsel %vm404, %v4463, %v4465
      %4471 = vrot.lane.b32.xlu0 %v4396, 95
      %v4472 = vpop.permute.xlu0 %4471
      %4473 = vrot.lane.b32.xlu0 %v4397, 95
      %v4474 = vpop.permute.xlu0 %4473
      %4475 = vrot.lane.b32.xlu0 %v4398, 95
      %v4476 = vpop.permute.xlu0 %4475
      %v4477 = vsel %vm416, %v4472, %v4474
      %v4478 = vsel %vm416, %v4474, %v4476
      %4482 = vrot.lane.b32.xlu0 %v4405, 94
      %v4483 = vpop.permute.xlu0 %4482
      %4484 = vrot.lane.b32.xlu0 %v4406, 94
      %v4485 = vpop.permute.xlu0 %4484
      %4486 = vrot.lane.b32.xlu0 %v4407, 94
      %v4487 = vpop.permute.xlu0 %4486
      %v4488 = vsel %vm428, %v4483, %v4485
      %v4489 = vsel %vm428, %v4485, %v4487
      %4491 = vset.pattern.permute.xlu0 0
      %4492 = vperm.xlu0 %4491, %v4381
      %v4493 = vpop.permute.xlu0 %4492
      %4498 = vrot.lane.b32.xlu0 %v4387, 17
      %v4499 = vpop.permute.xlu0 %4498
      %4500 = vrot.lane.b32.xlu0 %v4388, 17
      %v4501 = vpop.permute.xlu0 %4500
      %4502 = vrot.lane.b32.xlu0 %v4389, 17
      %v4503 = vpop.permute.xlu0 %4502
      %4504 = vrot.lane.b32.xlu0 %v4417, 17
      %v4505 = vpop.permute.xlu0 %4504
      %4506 = vrot.lane.b32.xlu0 %v4418, 17
      %v4507 = vpop.permute.xlu0 %4506
      %4508 = vrot.lane.b32.xlu0 %v4416, 17
      %v4509 = vpop.permute.xlu0 %4508
      %4510 = vrot.lane.b32.xlu0 %v4428, 17
      %v4511 = vpop.permute.xlu0 %4510
      %4512 = vrot.lane.b32.xlu0 %v4429, 17
      %v4513 = vpop.permute.xlu0 %4512
      %4514 = vrot.lane.b32.xlu0 %v4427, 17
      %v4515 = vpop.permute.xlu0 %4514
      %4516 = vrot.lane.b32.xlu0 %v4439, 17
      %v4517 = vpop.permute.xlu0 %4516
      %4518 = vrot.lane.b32.xlu0 %v4440, 17
      %v4519 = vpop.permute.xlu0 %4518
      %4520 = vrot.lane.b32.xlu0 %v4438, 17
      %v4521 = vpop.permute.xlu0 %4520
      %4522 = vrot.lane.b32.xlu0 %v4442, 17
      %v4523 = vpop.permute.xlu0 %4522
      %4524 = vrot.lane.b32.xlu0 %v4445, 17
      %v4525 = vpop.permute.xlu0 %4524
      %4526 = vrot.lane.b32.xlu0 %v4444, 17
      %v4527 = vpop.permute.xlu0 %4526
      %4528 = vrot.lane.b32.xlu0 %v4450, 17
      %v4529 = vpop.permute.xlu0 %4528
      %4530 = vrot.lane.b32.xlu0 %v4455, 17
      %v4531 = vpop.permute.xlu0 %4530
      %4532 = vrot.lane.b32.xlu0 %v4456, 17
      %v4533 = vpop.permute.xlu0 %4532
      %4534 = vrot.lane.b32.xlu0 %v4461, 17
      %v4535 = vpop.permute.xlu0 %4534
      %4536 = vrot.lane.b32.xlu0 %v4466, 17
      %v4537 = vpop.permute.xlu0 %4536
      %4538 = vrot.lane.b32.xlu0 %v4467, 17
      %v4539 = vpop.permute.xlu0 %4538
      %4540 = vrot.lane.b32.xlu0 %v4472, 17
      %v4541 = vpop.permute.xlu0 %4540
      %4542 = vrot.lane.b32.xlu0 %v4477, 17
      %v4543 = vpop.permute.xlu0 %4542
      %4544 = vrot.lane.b32.xlu0 %v4478, 17
      %v4545 = vpop.permute.xlu0 %4544
      %4546 = vrot.lane.b32.xlu0 %v4483, 17
      %v4547 = vpop.permute.xlu0 %4546
      %4548 = vrot.lane.b32.xlu0 %v4488, 17
      %v4549 = vpop.permute.xlu0 %4548
      %4550 = vrot.lane.b32.xlu0 %v4489, 17
      %v4551 = vpop.permute.xlu0 %4550
      %v4552 = vsel %vm335, %v4499, %v4501
      %v4553 = vsel %vm335, %v4501, %v4503
      %v4554 = vsel %vm335, %v4505, %v4507
      %v4555 = vsel %vm335, %v4507, %v4509
      %v4556 = vsel %vm335, %v4511, %v4513
      %v4557 = vsel %vm335, %v4513, %v4515
      %v4558 = vsel %vm335, %v4517, %v4519
      %v4559 = vsel %vm335, %v4519, %v4521
      %v4560 = vsel %vm335, %v4523, %v4525
      %v4561 = vsel %vm335, %v4525, %v4527
      %v4562 = vsel %vm335, %v4529, %v4531
      %v4563 = vsel %vm335, %v4531, %v4533
      %v4564 = vsel %vm335, %v4535, %v4537
      %v4565 = vsel %vm335, %v4537, %v4539
      %v4566 = vsel %vm335, %v4541, %v4543
      %v4567 = vsel %vm335, %v4543, %v4545
      %v4568 = vsel %vm335, %v4547, %v4549
      %v4569 = vsel %vm335, %v4549, %v4551
      %v4589 = vsel %vm529, %v4379, 0
      %4591 = vmatprep.subr.mxu0 0.0
      %4592 = vmatpush1.msra.mxu0 0.0
      %4593 = vmatprep.subr.mxu0 0.0
      %4594 = vmatpush1.msra.mxu0 0.0
      %4595 = vmatprep.subr.mxu0 0.0
      %4596 = vmatpush1.msra.mxu0 0.0
      %4597 = vmatprep.subr.mxu0 0.0
      %4598 = vmatpush1.msra.mxu0 0.0
      %4599 = vmatprep.subr.mxu0 0.0
      %4600 = vmatpush1.msra.mxu0 0.0
      %4601 = vmatprep.subr.mxu0 0.0
      %4602 = vmatpush1.msra.mxu0 0.0
      %4603 = vmatprep.subr.mxu0 0.0
      %4604 = vmatpush1.msra.mxu0 0.0
      %4605 = vmatprep.subr.mxu0 %v4569
      %4606 = vmatpush1.msra.mxu0 %v4568
      %4607 = vmatprep.subr.mxu0 %v4567
      %4608 = vmatpush1.msra.mxu0 %v4566
      %4609 = vmatprep.subr.mxu0 %v4565
      %4610 = vmatpush1.msra.mxu0 %v4564
      %4611 = vmatprep.subr.mxu0 %v4563
      %4612 = vmatpush1.msra.mxu0 %v4562
      %4613 = vmatprep.subr.mxu0 %v4561
      %4614 = vmatpush1.msra.mxu0 %v4560
      %4615 = vmatprep.subr.mxu0 %v4559
      %4616 = vmatpush1.msra.mxu0 %v4558
      %4617 = vmatprep.subr.mxu0 %v4557
      %4618 = vmatpush1.msra.mxu0 %v4556
      %4619 = vmatprep.subr.mxu0 %v4555
      %4620 = vmatpush1.msra.mxu0 %v4554
      %4621 = vmatprep.subr.mxu0 %v4553
      %4622 = vmatpush1.msra.mxu0 %v4552
      %4623 = vmatprep.subr.mxu0 0.0
      %4624 = vmatpush2.msra.mxu0 0.0
      %4625 = vmatprep.subr.mxu0 0.0
      %4626 = vmatpush2.msra.mxu0 0.0
      %4627 = vmatprep.subr.mxu0 0.0
      %4628 = vmatpush2.msra.mxu0 0.0
      %4629 = vmatprep.subr.mxu0 0.0
      %4630 = vmatpush2.msra.mxu0 0.0
      %4631 = vmatprep.subr.mxu0 0.0
      %4632 = vmatpush2.msra.mxu0 0.0
      %4633 = vmatprep.subr.mxu0 0.0
      %4634 = vmatpush2.msra.mxu0 0.0
      %4635 = vmatprep.subr.mxu0 0.0
      %4636 = vmatpush2.msra.mxu0 0.0
      %4637 = vmatprep.subr.mxu0 0.0
      %4638 = vmatpush2.msra.mxu0 0.0
      %4639 = vmatprep.subr.mxu0 0.0
      %4640 = vmatpush2.msra.mxu0 0.0
      %4641 = vmatprep.subr.mxu0 0.0
      %4642 = vmatpush2.msra.mxu0 0.0
      %4643 = vmatprep.subr.mxu0 0.0
      %4644 = vmatpush2.msra.mxu0 0.0
      %4645 = vmatprep.subr.mxu0 0.0
      %4646 = vmatpush2.msra.mxu0 0.0
      %4647 = vmatprep.subr.mxu0 0.0
      %4648 = vmatpush2.msra.mxu0 0.0
      %4649 = vmatprep.subr.mxu0 0.0
      %4650 = vmatpush2.msra.mxu0 0.0
      %4651 = vmatprep.subr.mxu0 0.0
      %4652 = vmatpush2.msra.mxu0 0.0
      %4653 = vmatprep.subr.mxu0 0.0
      %4654 = vmatpush2.msra.mxu0 0.0
      %4655 = vmatprep.mubr.f32.mxu0 0.0
      %4656 = vmatmul.mubr.f32.gmra.mxu0 %v4589
      %v4657 = vpop.f32.mrf.mxu0
      %v4658 = vadd.f32 %v4493, %v4657
      %v4659 = vpop.f32.mrf.mxu0
      %v4660 = vadd.f32 %v4493, %v4659
      %4661 = vdwg.mxu0
      %v4662 = vmul.f32 %v4658, 0.5
      %v4663 = vmul.f32 %v4660, 0.5
      %v4664 = vmul.f32 %v4658, 0.70710677
      %v4665 = vmul.f32 %v4660, 0.70710677
      %v4666 = verf.f32.pop %v4664
      %v4667 = verf.f32.pop %v4665
      %v4668 = vadd.f32 %v4666, 1.0
      %v4669 = vadd.f32 %v4667, 1.0
      %v4670 = vmul.f32 %v4662, %v4668
      %v4671 = vmul.f32 %v4663, %v4669
      %s4672 = scalar_lea.vmem %s3, 56
      %v4673 = vld [vmem:[%s4672] sm:$0xff]
      %s4674 = scalar_lea.vmem %s4, 56
      %v4675 = vld [vmem:[%s4674] sm:$0xff]
      %4676 = vst [vmem:[#allocation2 + $0x8] sm:$0xff] %v4670
      %4677 = vst [vmem:[#allocation2 + $0x10] sm:$0xff] %v4671
      %v4678 = vld [vmem:[#allocation2] sm:$0xff]
      %v4679 = vld [vmem:[#allocation2 + $0x8] sm:$0xff]
      %v4680 = vld [vmem:[#allocation2 + $0x10] sm:$0xff]
      %v4681 = vmul.f32 %v4678, %v267
      %v4682 = vmul.f32 %v4679, %v271
      %v4683 = vmul.f32 %v4680, %v269
      %v4684 = vmul.f32 %v4678, %v281
      %v4685 = vmul.f32 %v4679, %v285
      %v4686 = vmul.f32 %v4680, %v283
      %v4687 = vmul.f32 %v4678, %v293
      %v4688 = vmul.f32 %v4679, %v297
      %v4689 = vmul.f32 %v4680, %v295
      %v4690 = vld [vmem:[#allocation2 + $0x8] sm:$0xff]
      %v4691 = vld [vmem:[#allocation2 + $0x10] sm:$0xff]
      %v4692 = vld [vmem:[#allocation2 + $0x18] sm:$0xff]
      %v4693 = vmul.f32 %v4690, %v308
      %v4694 = vmul.f32 %v4691, %v312
      %v4695 = vmul.f32 %v4692, %v310
      %v4696 = vmul.f32 %v4690, %v320
      %v4697 = vmul.f32 %v4691, %v324
      %v4698 = vmul.f32 %v4692, %v322
      %v4699 = vmul.f32 %v4690, %v332
      %v4700 = vmul.f32 %v4691, %v336
      %v4701 = vmul.f32 %v4692, %v334
      %4705 = vrot.lane.b32.xlu0 %v4678, 127
      %v4706 = vpop.permute.xlu0 %4705
      %4707 = vrot.lane.b32.xlu0 %v4679, 127
      %v4708 = vpop.permute.xlu0 %4707
      %4709 = vrot.lane.b32.xlu0 %v4680, 127
      %v4710 = vpop.permute.xlu0 %4709
      %v4711 = vsel %vm296, %v4706, %v4708
      %v4712 = vsel %vm296, %v4708, %v4710
      %4716 = vrot.lane.b32.xlu0 %v4684, 126
      %v4717 = vpop.permute.xlu0 %4716
      %4718 = vrot.lane.b32.xlu0 %v4685, 126
      %v4719 = vpop.permute.xlu0 %4718
      %4720 = vrot.lane.b32.xlu0 %v4686, 126
      %v4721 = vpop.permute.xlu0 %4720
      %v4722 = vsel %vm363, %v4717, %v4719
      %v4723 = vsel %vm363, %v4719, %v4721
      %4727 = vrot.lane.b32.xlu0 %v4687, 112
      %v4728 = vpop.permute.xlu0 %4727
      %4729 = vrot.lane.b32.xlu0 %v4688, 112
      %v4730 = vpop.permute.xlu0 %4729
      %4731 = vrot.lane.b32.xlu0 %v4689, 112
      %v4732 = vpop.permute.xlu0 %4731
      %v4733 = vsel %vm375, %v4728, %v4730
      %v4734 = vsel %vm375, %v4730, %v4732
      %4735 = vrot.lane.b32.xlu0 %v4679, 111
      %v4736 = vpop.permute.xlu0 %4735
      %4737 = vrot.lane.b32.xlu0 %v4680, 111
      %v4738 = vpop.permute.xlu0 %4737
      %v4739 = vsel %vm270, %v4736, %v4738
      %4743 = vrot.lane.b32.xlu0 %v4693, 110
      %v4744 = vpop.permute.xlu0 %4743
      %4745 = vrot.lane.b32.xlu0 %v4694, 110
      %v4746 = vpop.permute.xlu0 %4745
      %4747 = vrot.lane.b32.xlu0 %v4695, 110
      %v4748 = vpop.permute.xlu0 %4747
      %v4749 = vsel %vm392, %v4744, %v4746
      %v4750 = vsel %vm392, %v4746, %v4748
      %4754 = vrot.lane.b32.xlu0 %v4696, 96
      %v4755 = vpop.permute.xlu0 %4754
      %4756 = vrot.lane.b32.xlu0 %v4697, 96
      %v4757 = vpop.permute.xlu0 %4756
      %4758 = vrot.lane.b32.xlu0 %v4698, 96
      %v4759 = vpop.permute.xlu0 %4758
      %v4760 = vsel %vm404, %v4755, %v4757
      %v4761 = vsel %vm404, %v4757, %v4759
      %4765 = vrot.lane.b32.xlu0 %v4690, 95
      %v4766 = vpop.permute.xlu0 %4765
      %4767 = vrot.lane.b32.xlu0 %v4691, 95
      %v4768 = vpop.permute.xlu0 %4767
      %4769 = vrot.lane.b32.xlu0 %v4692, 95
      %v4770 = vpop.permute.xlu0 %4769
      %v4771 = vsel %vm416, %v4766, %v4768
      %v4772 = vsel %vm416, %v4768, %v4770
      %4776 = vrot.lane.b32.xlu0 %v4699, 94
      %v4777 = vpop.permute.xlu0 %4776
      %4778 = vrot.lane.b32.xlu0 %v4700, 94
      %v4779 = vpop.permute.xlu0 %4778
      %4780 = vrot.lane.b32.xlu0 %v4701, 94
      %v4781 = vpop.permute.xlu0 %4780
      %v4782 = vsel %vm428, %v4777, %v4779
      %v4783 = vsel %vm428, %v4779, %v4781
      %4785 = vset.pattern.permute.xlu0 0
      %4786 = vperm.xlu0 %4785, %v4675
      %v4787 = vpop.permute.xlu0 %4786
      %4792 = vrot.lane.b32.xlu0 %v4681, 17
      %v4793 = vpop.permute.xlu0 %4792
      %4794 = vrot.lane.b32.xlu0 %v4682, 17
      %v4795 = vpop.permute.xlu0 %4794
      %4796 = vrot.lane.b32.xlu0 %v4683, 17
      %v4797 = vpop.permute.xlu0 %4796
      %4798 = vrot.lane.b32.xlu0 %v4711, 17
      %v4799 = vpop.permute.xlu0 %4798
      %4800 = vrot.lane.b32.xlu0 %v4712, 17
      %v4801 = vpop.permute.xlu0 %4800
      %4802 = vrot.lane.b32.xlu0 %v4710, 17
      %v4803 = vpop.permute.xlu0 %4802
      %4804 = vrot.lane.b32.xlu0 %v4722, 17
      %v4805 = vpop.permute.xlu0 %4804
      %4806 = vrot.lane.b32.xlu0 %v4723, 17
      %v4807 = vpop.permute.xlu0 %4806
      %4808 = vrot.lane.b32.xlu0 %v4721, 17
      %v4809 = vpop.permute.xlu0 %4808
      %4810 = vrot.lane.b32.xlu0 %v4733, 17
      %v4811 = vpop.permute.xlu0 %4810
      %4812 = vrot.lane.b32.xlu0 %v4734, 17
      %v4813 = vpop.permute.xlu0 %4812
      %4814 = vrot.lane.b32.xlu0 %v4732, 17
      %v4815 = vpop.permute.xlu0 %4814
      %4816 = vrot.lane.b32.xlu0 %v4736, 17
      %v4817 = vpop.permute.xlu0 %4816
      %4818 = vrot.lane.b32.xlu0 %v4739, 17
      %v4819 = vpop.permute.xlu0 %4818
      %4820 = vrot.lane.b32.xlu0 %v4738, 17
      %v4821 = vpop.permute.xlu0 %4820
      %4822 = vrot.lane.b32.xlu0 %v4744, 17
      %v4823 = vpop.permute.xlu0 %4822
      %4824 = vrot.lane.b32.xlu0 %v4749, 17
      %v4825 = vpop.permute.xlu0 %4824
      %4826 = vrot.lane.b32.xlu0 %v4750, 17
      %v4827 = vpop.permute.xlu0 %4826
      %4828 = vrot.lane.b32.xlu0 %v4755, 17
      %v4829 = vpop.permute.xlu0 %4828
      %4830 = vrot.lane.b32.xlu0 %v4760, 17
      %v4831 = vpop.permute.xlu0 %4830
      %4832 = vrot.lane.b32.xlu0 %v4761, 17
      %v4833 = vpop.permute.xlu0 %4832
      %4834 = vrot.lane.b32.xlu0 %v4766, 17
      %v4835 = vpop.permute.xlu0 %4834
      %4836 = vrot.lane.b32.xlu0 %v4771, 17
      %v4837 = vpop.permute.xlu0 %4836
      %4838 = vrot.lane.b32.xlu0 %v4772, 17
      %v4839 = vpop.permute.xlu0 %4838
      %4840 = vrot.lane.b32.xlu0 %v4777, 17
      %v4841 = vpop.permute.xlu0 %4840
      %4842 = vrot.lane.b32.xlu0 %v4782, 17
      %v4843 = vpop.permute.xlu0 %4842
      %4844 = vrot.lane.b32.xlu0 %v4783, 17
      %v4845 = vpop.permute.xlu0 %4844
      %v4846 = vsel %vm335, %v4793, %v4795
      %v4847 = vsel %vm335, %v4795, %v4797
      %v4848 = vsel %vm335, %v4799, %v4801
      %v4849 = vsel %vm335, %v4801, %v4803
      %v4850 = vsel %vm335, %v4805, %v4807
      %v4851 = vsel %vm335, %v4807, %v4809
      %v4852 = vsel %vm335, %v4811, %v4813
      %v4853 = vsel %vm335, %v4813, %v4815
      %v4854 = vsel %vm335, %v4817, %v4819
      %v4855 = vsel %vm335, %v4819, %v4821
      %v4856 = vsel %vm335, %v4823, %v4825
      %v4857 = vsel %vm335, %v4825, %v4827
      %v4858 = vsel %vm335, %v4829, %v4831
      %v4859 = vsel %vm335, %v4831, %v4833
      %v4860 = vsel %vm335, %v4835, %v4837
      %v4861 = vsel %vm335, %v4837, %v4839
      %v4862 = vsel %vm335, %v4841, %v4843
      %v4863 = vsel %vm335, %v4843, %v4845
      %v4883 = vsel %vm529, %v4673, 0
      %4885 = vmatprep.subr.mxu0 0.0
      %4886 = vmatpush1.msra.mxu0 0.0
      %4887 = vmatprep.subr.mxu0 0.0
      %4888 = vmatpush1.msra.mxu0 0.0
      %4889 = vmatprep.subr.mxu0 0.0
      %4890 = vmatpush1.msra.mxu0 0.0
      %4891 = vmatprep.subr.mxu0 0.0
      %4892 = vmatpush1.msra.mxu0 0.0
      %4893 = vmatprep.subr.mxu0 0.0
      %4894 = vmatpush1.msra.mxu0 0.0
      %4895 = vmatprep.subr.mxu0 0.0
      %4896 = vmatpush1.msra.mxu0 0.0
      %4897 = vmatprep.subr.mxu0 0.0
      %4898 = vmatpush1.msra.mxu0 0.0
      %4899 = vmatprep.subr.mxu0 %v4863
      %4900 = vmatpush1.msra.mxu0 %v4862
      %4901 = vmatprep.subr.mxu0 %v4861
      %4902 = vmatpush1.msra.mxu0 %v4860
      %4903 = vmatprep.subr.mxu0 %v4859
      %4904 = vmatpush1.msra.mxu0 %v4858
      %4905 = vmatprep.subr.mxu0 %v4857
      %4906 = vmatpush1.msra.mxu0 %v4856
      %4907 = vmatprep.subr.mxu0 %v4855
      %4908 = vmatpush1.msra.mxu0 %v4854
      %4909 = vmatprep.subr.mxu0 %v4853
      %4910 = vmatpush1.msra.mxu0 %v4852
      %4911 = vmatprep.subr.mxu0 %v4851
      %4912 = vmatpush1.msra.mxu0 %v4850
      %4913 = vmatprep.subr.mxu0 %v4849
      %4914 = vmatpush1.msra.mxu0 %v4848
      %4915 = vmatprep.subr.mxu0 %v4847
      %4916 = vmatpush1.msra.mxu0 %v4846
      %4917 = vmatprep.subr.mxu0 0.0
      %4918 = vmatpush2.msra.mxu0 0.0
      %4919 = vmatprep.subr.mxu0 0.0
      %4920 = vmatpush2.msra.mxu0 0.0
      %4921 = vmatprep.subr.mxu0 0.0
      %4922 = vmatpush2.msra.mxu0 0.0
      %4923 = vmatprep.subr.mxu0 0.0
      %4924 = vmatpush2.msra.mxu0 0.0
      %4925 = vmatprep.subr.mxu0 0.0
      %4926 = vmatpush2.msra.mxu0 0.0
      %4927 = vmatprep.subr.mxu0 0.0
      %4928 = vmatpush2.msra.mxu0 0.0
      %4929 = vmatprep.subr.mxu0 0.0
      %4930 = vmatpush2.msra.mxu0 0.0
      %4931 = vmatprep.subr.mxu0 0.0
      %4932 = vmatpush2.msra.mxu0 0.0
      %4933 = vmatprep.subr.mxu0 0.0
      %4934 = vmatpush2.msra.mxu0 0.0
      %4935 = vmatprep.subr.mxu0 0.0
      %4936 = vmatpush2.msra.mxu0 0.0
      %4937 = vmatprep.subr.mxu0 0.0
      %4938 = vmatpush2.msra.mxu0 0.0
      %4939 = vmatprep.subr.mxu0 0.0
      %4940 = vmatpush2.msra.mxu0 0.0
      %4941 = vmatprep.subr.mxu0 0.0
      %4942 = vmatpush2.msra.mxu0 0.0
      %4943 = vmatprep.subr.mxu0 0.0
      %4944 = vmatpush2.msra.mxu0 0.0
      %4945 = vmatprep.subr.mxu0 0.0
      %4946 = vmatpush2.msra.mxu0 0.0
      %4947 = vmatprep.subr.mxu0 0.0
      %4948 = vmatpush2.msra.mxu0 0.0
      %4949 = vmatprep.mubr.f32.mxu0 0.0
      %4950 = vmatmul.mubr.f32.gmra.mxu0 %v4883
      %v4951 = vpop.f32.mrf.mxu0
      %v4952 = vadd.f32 %v4787, %v4951
      %v4953 = vpop.f32.mrf.mxu0
      %v4954 = vadd.f32 %v4787, %v4953
      %4955 = vdwg.mxu0
      %v4956 = vadd.f32 %v4952, %v4376
      %v4957 = vadd.f32 %v4954, %v4377
      %4958 = vst [vmem:[%s224] sm:$0xff] %v4956
      %4959 = vst [vmem:[%s224 + $0x8] sm:$0xff] %v4957
      %p4960 = scmp.lt.s32.totalorder %s16, 1
      %s4961 = scalar_select %p4960, %s16, 1
      %s4962 = smul.addr %s4961, 2
      %s4963 = smul.addr %s4962, 8
      %s4964 = scalar_lea.vmem %s5, %s4963
      // Predicated region
      $region41: #{dblock_forward.1} parent=39 // pred_check
        %p4965 = pneg %p144
      $region42: #{dblock_forward.1} parent=39 // pred_check_branch
        %4967 = sbr.rel (%p4965) target = $region44
      $region43: #{dblock_forward.1} parent=39 // pred_region
        _
      $region44: #{dblock_forward.1} parent=39 // pred_fallthru
        _
    $region40: #{dblock_forward.1} parent=5 // pred_fallthru
      _
    %p4968 = scmp.le.s32.totalorder 2, %s11
    // Predicated region
    $region45: #{dblock_forward.1} parent=5 // pred_check
      %p4969 = pneg %p4968
    $region46: #{dblock_forward.1} parent=5 // pred_check_branch
      %4971 = sbr.rel (%p4969) target = $region48
    $region47: #{dblock_forward.1} parent=5 // pred_region
      %s4972 = ssub.s32 %s11, 2
      // Predicated region
      $region49: #{dblock_forward.1} parent=47 // pred_check
        %p4973 = pneg %p150
      $region50: #{dblock_forward.1} parent=47 // pred_check_branch
        %4975 = sbr.rel (%p4973) target = $region52
      $region51: #{dblock_forward.1} parent=47 // pred_region
        %p4976 = scmp.lt.s32.totalorder %s17, 1
        %s4977 = scalar_select %p4976, %s17, 1
        %s4978 = smul.addr %s4977, 2
        %s4979 = smul.addr %s4978, 8
        %s4980 = scalar_lea.vmem %s5, %s4979
      $region52: #{dblock_forward.1} parent=47 // pred_fallthru
        _
    $region48: #{dblock_forward.1} parent=5 // pred_fallthru
      _
  $region6: #{dblock_forward.1} parent=0 // loop_footer
    %s15 = sadd.s32 1, %s11
  $region7: #{dblock_forward.1} parent=0 // loop_footer_branch
    %10 = sbr.rel target = $region3
  $region8: #{dblock_forward.1} parent=0 // loop_exit
    _

</llo_original>
